<compile_context>
chip_gen: v5e
topology: v5e:2x2
jax: 0.10.0
libtpu: 0.0.40
codegen_flags: <defaults>
</compile_context>

<pallas_src>
import functools
from math import exp

import jax
import jax.numpy as jnp
import numpy as np
from jax.experimental import pallas as pl
from jax.experimental.pallas import tpu as pltpu


# ----------------------------- host helpers ------------------------------- #

def _gaussian_1d(window_size: int, sigma: float = 1.5) -> np.ndarray:
    """Matches gaussian() in the PyTorch code: normalized 1D Gaussian taps."""
    g = np.array(
        [exp(-(x - window_size // 2) ** 2 / float(2 * sigma ** 2))
         for x in range(window_size)],
        dtype=np.float64,
    )
    return (g / g.sum()).astype(np.float32)


def _gaussian_window_flat(window_size: int, sigma: float = 1.5) -> np.ndarray:
    """create_window(): flattened (k*k,) 2D Gaussian window (sums to 1)."""
    g = _gaussian_1d(window_size, sigma).astype(np.float64)
    return np.outer(g, g).reshape(-1).astype(np.float32)


def _extract_patch_rows(x: jnp.ndarray, ksize: int, stride: int) -> jnp.ndarray:
    """(b, c, h, w) -> (b, L*c, k*k) patch/channel rows.  Used only by the
    pure-JAX reference and the rare stride > ksize dynamic-range fallback."""
    b, c, h, w = x.shape
    oh = (h - ksize) // stride + 1
    ow = (w - ksize) // stride + 1
    idx_h = (jnp.arange(oh) * stride)[:, None] + jnp.arange(ksize)[None, :]
    idx_w = (jnp.arange(ow) * stride)[:, None] + jnp.arange(ksize)[None, :]
    p = x[:, :, idx_h, :]                      # (b, c, oh, k, w)
    p = p[:, :, :, :, idx_w]                   # (b, c, oh, k, ow, k)
    p = jnp.transpose(p, (0, 2, 4, 1, 3, 5))   # (b, oh, ow, c, k, k)
    return p.reshape(b, oh * ow * c, ksize * ksize)


def _vmem_limit_bytes() -> int:
    """Per-generation scoped-VMEM budget (v6e ~96 MiB, v7x ~48 MiB)."""
    cap = 64 * 1024 * 1024                     # conservative fallback (v7x)
    try:
        info = pltpu.get_tpu_info()
        cap = int(getattr(info, "vmem_capacity_bytes", cap))
    except Exception:
        pass
    return max(32 * 1024 * 1024, min((cap * 3) // 4, 110 * 1024 * 1024))


# ------------------------------ Pallas kernel ------------------------------ #

def _ssim_kernel(gtaps, ksize, strip, ch_blk, use_mask,
                 c_ref, x1_ref, x2_ref, *rest):
    """One grid step == one (batch, channel-group).

    c_ref  : SMEM (b, 2)            per-batch [C1, C2]
    x1/x2  : VMEM (ch_blk, h, w)    res / tar planes for this group
    mask   : VMEM (ohs, ows) f32    stride keep-mask (only when use_mask)
    out    : VMEM (1, 1)            per-batch SSIM sum, accumulated over groups
    """
    if use_mask:
        mask_ref, out_ref = rest
    else:
        (out_ref,) = rest
        mask_ref = None

    bi = pl.program_id(0)
    gi = pl.program_id(1)

    c1 = c_ref[bi, 0]
    c2 = c_ref[bi, 1]

    _, h, w = x1_ref.shape
    ohs = h - ksize + 1               # stride-1 valid-conv extents
    ows = w - ksize + 1
    half = ksize // 2
    sym = (ksize % 2 == 1)            # Gaussian taps mirror-symmetric

    def hpass(a, b):
        # Horizontal (lane-axis) 7-tap pass with product reuse: g*a and g*b
        # feed both the means and the three second-moment accumulators, so
        # only a/b need the ksize shifted views (5 muls per tap).
        mu1h = mu2h = e11h = e22h = e12h = None
        for t in range(ksize):
            at = a[:, t:t + ows]
            bt = b[:, t:t + ows]
            wa = gtaps[t] * at
            wb = gtaps[t] * bt
            if t == 0:
                mu1h, mu2h = wa, wb
                e11h, e22h, e12h = wa * at, wb * bt, wa * bt
            else:
                mu1h = mu1h + wa
                mu2h = mu2h + wb
                e11h = e11h + wa * at
                e22h = e22h + wb * bt
                e12h = e12h + wa * bt
        return mu1h, mu2h, e11h, e22h, e12h

    def vpass(f, s):
        # Vertical (sublane-axis) pass.  Mirrored taps are pre-added so each
        # symmetric pair costs a single multiply (4 muls instead of 7).
        if sym:
            acc = gtaps[half] * f[half:half + s, :]
            for t in range(half):
                acc = acc + gtaps[t] * (f[t:t + s, :]
                                        + f[ksize - 1 - t:ksize - 1 - t + s, :])
        else:
            acc = gtaps[0] * f[0:s, :]
            for t in range(1, ksize):
                acc = acc + gtaps[t] * f[t:t + s, :]
        return acc

    total = jnp.float32(0.0)
    for ci in range(ch_blk):                       # static channel loop
        for r0 in range(0, ohs, strip):            # static fused row strips
            s = min(strip, ohs - r0)               # output rows this strip
            hs = s + ksize - 1                     # input rows incl. halo
            x1 = x1_ref[ci, r0:r0 + hs, :].astype(jnp.float32)
            x2 = x2_ref[ci, r0:r0 + hs, :].astype(jnp.float32)

            mu1h, mu2h, e11h, e22h, e12h = hpass(x1, x2)
            mu1 = vpass(mu1h, s)
            mu2 = vpass(mu2h, s)
            e11 = vpass(e11h, s)
            e22 = vpass(e22h, s)
            e12 = vpass(e12h, s)

            mu1_sq = mu1 * mu1
            mu2_sq = mu2 * mu2
            mu1_mu2 = mu1 * mu2
            sigma1_sq = e11 - mu1_sq
            sigma2_sq = e22 - mu2_sq
            sigma12 = e12 - mu1_mu2

            v1 = 2.0 * sigma12 + c2
            v2 = sigma1_sq + sigma2_sq + c2
            num = (2.0 * mu1_mu2 + c1) * v1
            den = (mu1_sq + mu2_sq + c1) * v2      # > 0 since C1, C2 > 0
            # EUP approx reciprocal + one Newton-Raphson step (~1e-7 rel err).
            r = pl.reciprocal(den, approx=True)
            r = r * (2.0 - den * r)
            ssim_map = num * r

            if mask_ref is not None:               # stride > 1: hoisted mask
                ssim_map = ssim_map * mask_ref[r0:r0 + s, :]
            total = total + jnp.sum(ssim_map)

    @pl.when(gi == 0)
    def _():
        out_ref[...] = jnp.zeros_like(out_ref)

    out_ref[...] += total


# -------------------------------- wrapper ---------------------------------- #

def patched_ssim(res: jnp.ndarray, tar: jnp.ndarray, ksize: int = 7,
                 stride: int = 1) -> jnp.ndarray:
    """Pallas implementation of Patched_ssim.forward(res, tar)."""
    b, ch, h, w = res.shape
    assert h >= ksize and w >= ksize, "image smaller than the SSIM window"
    oh = (h - ksize) // stride + 1
    ow = (w - ksize) // stride + 1
    ohs = h - ksize + 1
    ows = w - ksize + 1

    # TODO(synk): only ksize == 7 exactly reproduces the PyTorch module (its
    # SSIM_loss window is fixed at 7x7); other ksize values use a ksize-sized
    # Gaussian window here (the torch code errors for ksize < 7).
    gtaps = tuple(float(v) for v in _gaussian_1d(ksize))

    # Dynamic-range branch of ssim() (val_range=None), per batch element,
    # computed from the raw `res` (== img1's patches).  For stride <= ksize the
    # unfold windows cover exactly rows/cols [0, (o-1)*stride + ksize), so the
    # raw-image reduction equals the 49x-amplified patch reduction.  No f32
    # copy of res/tar is made on the host; casting happens in-kernel.
    if stride <= ksize:
        cov_h = (oh - 1) * stride + ksize
        cov_w = (ow - 1) * stride + ksize
        region = res if (cov_h == h and cov_w == w) else res[:, :, :cov_h, :cov_w]
        mx = jnp.max(region, axis=(1, 2, 3)).astype(jnp.float32)
        mn = jnp.min(region, axis=(1, 2, 3)).astype(jnp.float32)
    else:  # coverage gaps: match torch exactly by reducing over the patches
        p1 = _extract_patch_rows(res.astype(jnp.float32), ksize, stride)
        mx = jnp.max(p1, axis=(1, 2))
        mn = jnp.min(p1, axis=(1, 2))
    max_val = jnp.where(mx > 128.0, 255.0, 1.0)
    min_val = jnp.where(mn < -0.5, -1.0, 0.0)
    rng = max_val - min_val
    c1c2 = jnp.stack([(0.01 * rng) ** 2, (0.03 * rng) ** 2],
                     axis=1).astype(jnp.float32)                 # (b, 2)

    vmem_limit = _vmem_limit_bytes()

    # Channel blocking: fit (res + tar) double-buffered blocks in ~half the
    # VMEM budget, leaving the rest for strip intermediates + compiler scratch.
    itemsize = jnp.dtype(res.dtype).itemsize
    per_ch_in = 4 * h * w * itemsize          # 2 tensors x 2 pipeline buffers
    ch_blk = int(max(1, min(ch, (vmem_limit // 2) // max(per_ch_in, 1))))
    while ch % ch_blk:                        # keep the grid exact
        ch_blk -= 1

    # Fused conv row-strip size (O(strip*w) live intermediates per strip).
    strip = min(64, ohs)
    if strip < ohs:
        strip = max(8, (strip // 8) * 8)      # sublane-aligned strip starts

    use_mask = stride > 1
    inputs = [c1c2, res, tar]
    in_specs = [
        pl.BlockSpec(memory_space=pltpu.MemorySpace.SMEM),                # C1/C2
        pl.BlockSpec((None, ch_blk, h, w), lambda i, g: (i, g, 0, 0)),    # res
        pl.BlockSpec((None, ch_blk, h, w), lambda i, g: (i, g, 0, 0)),    # tar
    ]
    if use_mask:
        ii = np.arange(ohs)
        jj = np.arange(ows)
        keep = (((ii % stride == 0) & (ii // stride < oh))[:, None]
                & ((jj % stride == 0) & (jj // stride < ow))[None, :])
        inputs.append(jnp.asarray(keep.astype(np.float32)))
        in_specs.append(pl.BlockSpec((ohs, ows), lambda i, g: (0, 0)))    # mask

    grid_spec = pltpu.PrefetchScalarGridSpec(
        num_scalar_prefetch=0,
        grid=(b, ch // ch_blk),                        # reduction axis last
        in_specs=in_specs,
        out_specs=pl.BlockSpec((None, 1, 1), lambda i, g: (i, 0, 0)),
    )

    sums = pl.pallas_call(
        functools.partial(_ssim_kernel, gtaps, ksize, strip, ch_blk, use_mask),
        out_shape=jax.ShapeDtypeStruct((b, 1, 1), jnp.float32),
        grid_spec=grid_spec,
        compiler_params=pltpu.CompilerParams(
            dimension_semantics=("parallel", "arbitrary"),  # batch // on v7x
            vmem_limit_bytes=vmem_limit),
    )(*inputs)

    # mean SSIM per batch element, then loss = mean_b(1 - ssim_b)
    ssim_b = sums[:, 0, 0] / jnp.float32(oh * ow * ch)
    return jnp.mean(1.0 - ssim_b)


# ------------------------------ reference ---------------------------------- #

def _reference_loss(res, tar, ksize=7, stride=1):
    """Pure-JAX mirror of the PyTorch Patched_ssim forward (unfold-based path,
    independent of the kernel's separable-conv formulation)."""
    p1 = _extract_patch_rows(res.astype(jnp.float32), ksize, stride)
    p2 = _extract_patch_rows(tar.astype(jnp.float32), ksize, stride)
    wflat = jnp.asarray(_gaussian_window_flat(ksize))[None, :]   # (1, k*k)
    losses = []
    for bi in range(res.shape[0]):
        x1, x2 = p1[bi], p2[bi]
        max_val = jnp.where(jnp.max(x1) > 128.0, 255.0, 1.0)
        min_val = jnp.where(jnp.min(x1) < -0.5, -1.0, 0.0)
        rng = max_val - min_val
        c1 = (0.01 * rng) ** 2
        c2 = (0.03 * rng) ** 2
        mu1 = jnp.sum(x1 * wflat, axis=1)
        mu2 = jnp.sum(x2 * wflat, axis=1)
        e11 = jnp.sum(x1 * x1 * wflat, axis=1)
        e22 = jnp.sum(x2 * x2 * wflat, axis=1)
        e12 = jnp.sum(x1 * x2 * wflat, axis=1)
        mu1_sq, mu2_sq, mu1_mu2 = mu1 * mu1, mu2 * mu2, mu1 * mu2
        s1, s2, s12 = e11 - mu1_sq, e22 - mu2_sq, e12 - mu1_mu2
        v1 = 2.0 * s12 + c2
        v2 = s1 + s2 + c2
        ssim_map = (2.0 * mu1_mu2 + c1) * v1 / ((mu1_sq + mu2_sq + c1) * v2)
        losses.append(1.0 - jnp.mean(ssim_map))
    return jnp.mean(jnp.stack(losses))


if __name__ == "__main__":
    key = jax.random.PRNGKey(0)
    k1, k2 = jax.random.split(key)
    # small NCHW inputs: batch=2, channels=4, spatial=16x16
    res = jax.random.uniform(k1, (2, 4, 16, 16), dtype=jnp.float32)
    tar = jax.random.uniform(k2, (2, 4, 16, 16), dtype=jnp.float32)

    loss = patched_ssim(res, tar, ksize=7, stride=1)
    loss = jax.block_until_ready(loss)

    ref = _reference_loss(res, tar, ksize=7, stride=1)
    np.testing.assert_allclose(np.asarray(loss), np.asarray(ref),
                               rtol=1e-4, atol=1e-5)
    print("KERNEL_OK")
</pallas_src>

<mosaic_0001>
module attributes {stable_mosaic.version = 11 : i64} {
  func.func @_ssim_kernel(%arg0: i32, %arg1: i32, %arg2: memref<2x2xf32, #tpu.memory_space<smem>>, %arg3: memref<1x4x16x16xf32, #tpu.memory_space<vmem>>, %arg4: memref<1x4x16x16xf32, #tpu.memory_space<vmem>>, %arg5: memref<1x1x1xf32, #tpu.memory_space<vmem>>) attributes {dimension_semantics = [#tpu.dimension_semantics<parallel>, #tpu.dimension_semantics<arbitrary>], iteration_bounds = array<i64: 2, 1>, scalar_prefetch = 0 : i64, scratch_operands = 0 : i64, tpu.core_type = #tpu.core_type<tc>, window_params = [{transform_indices = @transform_0, window_bounds = array<i64: 2, 2>}, {transform_indices = @transform_1, window_bounds = array<i64: 1, 4, 16, 16>}, {transform_indices = @transform_2, window_bounds = array<i64: 1, 4, 16, 16>}, {transform_indices = @transform_3, window_bounds = array<i64: 1, 1, 1>}]} {
    %0 = arith.index_cast %arg0 : i32 to index
    %c0 = arith.constant 0 : index
    %1 = memref.load %arg2[%0, %c0] : memref<2x2xf32, #tpu.memory_space<smem>>
    %2 = arith.index_cast %arg0 : i32 to index
    %c1 = arith.constant 1 : index
    %3 = memref.load %arg2[%2, %c1] : memref<2x2xf32, #tpu.memory_space<smem>>
    %c0_0 = arith.constant 0 : index
    %c0_1 = arith.constant 0 : index
    %c0_2 = arith.constant 0 : index
    %c0_3 = arith.constant 0 : index
    %4 = vector.load %arg3[%c0_0, %c0_1, %c0_2, %c0_3] : memref<1x4x16x16xf32, #tpu.memory_space<vmem>>, vector<1x1x16x16xf32>
    %5 = vector.shape_cast %4 : vector<1x1x16x16xf32> to vector<16x16xf32>
    %c0_4 = arith.constant 0 : index
    %c0_5 = arith.constant 0 : index
    %c0_6 = arith.constant 0 : index
    %c0_7 = arith.constant 0 : index
    %6 = vector.load %arg4[%c0_4, %c0_5, %c0_6, %c0_7] : memref<1x4x16x16xf32, #tpu.memory_space<vmem>>, vector<1x1x16x16xf32>
    %7 = vector.shape_cast %6 : vector<1x1x16x16xf32> to vector<16x16xf32>
    %8 = vector.extract_strided_slice %5 {offsets = [0, 0], sizes = [16, 10], strides = [1, 1]} : vector<16x16xf32> to vector<16x10xf32>
    %9 = vector.extract_strided_slice %7 {offsets = [0, 0], sizes = [16, 10], strides = [1, 1]} : vector<16x16xf32> to vector<16x10xf32>
    %cst = arith.constant 0.036632847 : f32
    %10 = vector.broadcast %cst : f32 to vector<16x10xf32>
    %11 = arith.mulf %10, %8 : vector<16x10xf32>
    %cst_8 = arith.constant 0.036632847 : f32
    %12 = vector.broadcast %cst_8 : f32 to vector<16x10xf32>
    %13 = arith.mulf %12, %9 : vector<16x10xf32>
    %14 = arith.mulf %11, %8 : vector<16x10xf32>
    %15 = arith.mulf %13, %9 : vector<16x10xf32>
    %16 = arith.mulf %11, %9 : vector<16x10xf32>
    %17 = vector.extract_strided_slice %5 {offsets = [0, 1], sizes = [16, 10], strides = [1, 1]} : vector<16x16xf32> to vector<16x10xf32>
    %18 = vector.extract_strided_slice %7 {offsets = [0, 1], sizes = [16, 10], strides = [1, 1]} : vector<16x16xf32> to vector<16x10xf32>
    %cst_9 = arith.constant 0.111280762 : f32
    %19 = vector.broadcast %cst_9 : f32 to vector<16x10xf32>
    %20 = arith.mulf %19, %17 : vector<16x10xf32>
    %cst_10 = arith.constant 0.111280762 : f32
    %21 = vector.broadcast %cst_10 : f32 to vector<16x10xf32>
    %22 = arith.mulf %21, %18 : vector<16x10xf32>
    %23 = arith.addf %11, %20 : vector<16x10xf32>
    %24 = arith.addf %13, %22 : vector<16x10xf32>
    %25 = arith.mulf %20, %17 : vector<16x10xf32>
    %26 = arith.addf %14, %25 : vector<16x10xf32>
    %27 = arith.mulf %22, %18 : vector<16x10xf32>
    %28 = arith.addf %15, %27 : vector<16x10xf32>
    %29 = arith.mulf %20, %18 : vector<16x10xf32>
    %30 = arith.addf %16, %29 : vector<16x10xf32>
    %31 = vector.extract_strided_slice %5 {offsets = [0, 2], sizes = [16, 10], strides = [1, 1]} : vector<16x16xf32> to vector<16x10xf32>
    %32 = vector.extract_strided_slice %7 {offsets = [0, 2], sizes = [16, 10], strides = [1, 1]} : vector<16x16xf32> to vector<16x10xf32>
    %cst_11 = arith.constant 0.216745317 : f32
    %33 = vector.broadcast %cst_11 : f32 to vector<16x10xf32>
    %34 = arith.mulf %33, %31 : vector<16x10xf32>
    %cst_12 = arith.constant 0.216745317 : f32
    %35 = vector.broadcast %cst_12 : f32 to vector<16x10xf32>
    %36 = arith.mulf %35, %32 : vector<16x10xf32>
    %37 = arith.addf %23, %34 : vector<16x10xf32>
    %38 = arith.addf %24, %36 : vector<16x10xf32>
    %39 = arith.mulf %34, %31 : vector<16x10xf32>
    %40 = arith.addf %26, %39 : vector<16x10xf32>
    %41 = arith.mulf %36, %32 : vector<16x10xf32>
    %42 = arith.addf %28, %41 : vector<16x10xf32>
    %43 = arith.mulf %34, %32 : vector<16x10xf32>
    %44 = arith.addf %30, %43 : vector<16x10xf32>
    %45 = vector.extract_strided_slice %5 {offsets = [0, 3], sizes = [16, 10], strides = [1, 1]} : vector<16x16xf32> to vector<16x10xf32>
    %46 = vector.extract_strided_slice %7 {offsets = [0, 3], sizes = [16, 10], strides = [1, 1]} : vector<16x16xf32> to vector<16x10xf32>
    %cst_13 = arith.constant 0.270682156 : f32
    %47 = vector.broadcast %cst_13 : f32 to vector<16x10xf32>
    %48 = arith.mulf %47, %45 : vector<16x10xf32>
    %cst_14 = arith.constant 0.270682156 : f32
    %49 = vector.broadcast %cst_14 : f32 to vector<16x10xf32>
    %50 = arith.mulf %49, %46 : vector<16x10xf32>
    %51 = arith.addf %37, %48 : vector<16x10xf32>
    %52 = arith.addf %38, %50 : vector<16x10xf32>
    %53 = arith.mulf %48, %45 : vector<16x10xf32>
    %54 = arith.addf %40, %53 : vector<16x10xf32>
    %55 = arith.mulf %50, %46 : vector<16x10xf32>
    %56 = arith.addf %42, %55 : vector<16x10xf32>
    %57 = arith.mulf %48, %46 : vector<16x10xf32>
    %58 = arith.addf %44, %57 : vector<16x10xf32>
    %59 = vector.extract_strided_slice %5 {offsets = [0, 4], sizes = [16, 10], strides = [1, 1]} : vector<16x16xf32> to vector<16x10xf32>
    %60 = vector.extract_strided_slice %7 {offsets = [0, 4], sizes = [16, 10], strides = [1, 1]} : vector<16x16xf32> to vector<16x10xf32>
    %cst_15 = arith.constant 0.216745317 : f32
    %61 = vector.broadcast %cst_15 : f32 to vector<16x10xf32>
    %62 = arith.mulf %61, %59 : vector<16x10xf32>
    %cst_16 = arith.constant 0.216745317 : f32
    %63 = vector.broadcast %cst_16 : f32 to vector<16x10xf32>
    %64 = arith.mulf %63, %60 : vector<16x10xf32>
    %65 = arith.addf %51, %62 : vector<16x10xf32>
    %66 = arith.addf %52, %64 : vector<16x10xf32>
    %67 = arith.mulf %62, %59 : vector<16x10xf32>
    %68 = arith.addf %54, %67 : vector<16x10xf32>
    %69 = arith.mulf %64, %60 : vector<16x10xf32>
    %70 = arith.addf %56, %69 : vector<16x10xf32>
    %71 = arith.mulf %62, %60 : vector<16x10xf32>
    %72 = arith.addf %58, %71 : vector<16x10xf32>
    %73 = vector.extract_strided_slice %5 {offsets = [0, 5], sizes = [16, 10], strides = [1, 1]} : vector<16x16xf32> to vector<16x10xf32>
    %74 = vector.extract_strided_slice %7 {offsets = [0, 5], sizes = [16, 10], strides = [1, 1]} : vector<16x16xf32> to vector<16x10xf32>
    %cst_17 = arith.constant 0.111280762 : f32
    %75 = vector.broadcast %cst_17 : f32 to vector<16x10xf32>
    %76 = arith.mulf %75, %73 : vector<16x10xf32>
    %cst_18 = arith.constant 0.111280762 : f32
    %77 = vector.broadcast %cst_18 : f32 to vector<16x10xf32>
    %78 = arith.mulf %77, %74 : vector<16x10xf32>
    %79 = arith.addf %65, %76 : vector<16x10xf32>
    %80 = arith.addf %66, %78 : vector<16x10xf32>
    %81 = arith.mulf %76, %73 : vector<16x10xf32>
    %82 = arith.addf %68, %81 : vector<16x10xf32>
    %83 = arith.mulf %78, %74 : vector<16x10xf32>
    %84 = arith.addf %70, %83 : vector<16x10xf32>
    %85 = arith.mulf %76, %74 : vector<16x10xf32>
    %86 = arith.addf %72, %85 : vector<16x10xf32>
    %87 = vector.extract_strided_slice %5 {offsets = [0, 6], sizes = [16, 10], strides = [1, 1]} : vector<16x16xf32> to vector<16x10xf32>
    %88 = vector.extract_strided_slice %7 {offsets = [0, 6], sizes = [16, 10], strides = [1, 1]} : vector<16x16xf32> to vector<16x10xf32>
    %cst_19 = arith.constant 0.036632847 : f32
    %89 = vector.broadcast %cst_19 : f32 to vector<16x10xf32>
    %90 = arith.mulf %89, %87 : vector<16x10xf32>
    %cst_20 = arith.constant 0.036632847 : f32
    %91 = vector.broadcast %cst_20 : f32 to vector<16x10xf32>
    %92 = arith.mulf %91, %88 : vector<16x10xf32>
    %93 = arith.addf %79, %90 : vector<16x10xf32>
    %94 = arith.addf %80, %92 : vector<16x10xf32>
    %95 = arith.mulf %90, %87 : vector<16x10xf32>
    %96 = arith.addf %82, %95 : vector<16x10xf32>
    %97 = arith.mulf %92, %88 : vector<16x10xf32>
    %98 = arith.addf %84, %97 : vector<16x10xf32>
    %99 = arith.mulf %90, %88 : vector<16x10xf32>
    %100 = arith.addf %86, %99 : vector<16x10xf32>
    %101 = vector.extract_strided_slice %93 {offsets = [3, 0], sizes = [10, 10], strides = [1, 1]} : vector<16x10xf32> to vector<10x10xf32>
    %cst_21 = arith.constant 0.270682156 : f32
    %102 = vector.broadcast %cst_21 : f32 to vector<10x10xf32>
    %103 = arith.mulf %102, %101 : vector<10x10xf32>
    %104 = vector.extract_strided_slice %93 {offsets = [0, 0], sizes = [10, 10], strides = [1, 1]} : vector<16x10xf32> to vector<10x10xf32>
    %105 = vector.extract_strided_slice %93 {offsets = [6, 0], sizes = [10, 10], strides = [1, 1]} : vector<16x10xf32> to vector<10x10xf32>
    %106 = arith.addf %104, %105 : vector<10x10xf32>
    %cst_22 = arith.constant 0.036632847 : f32
    %107 = vector.broadcast %cst_22 : f32 to vector<10x10xf32>
    %108 = arith.mulf %107, %106 : vector<10x10xf32>
    %109 = arith.addf %103, %108 : vector<10x10xf32>
    %110 = vector.extract_strided_slice %93 {offsets = [1, 0], sizes = [10, 10], strides = [1, 1]} : vector<16x10xf32> to vector<10x10xf32>
    %111 = vector.extract_strided_slice %93 {offsets = [5, 0], sizes = [10, 10], strides = [1, 1]} : vector<16x10xf32> to vector<10x10xf32>
    %112 = arith.addf %110, %111 : vector<10x10xf32>
    %cst_23 = arith.constant 0.111280762 : f32
    %113 = vector.broadcast %cst_23 : f32 to vector<10x10xf32>
    %114 = arith.mulf %113, %112 : vector<10x10xf32>
    %115 = arith.addf %109, %114 : vector<10x10xf32>
    %116 = vector.extract_strided_slice %93 {offsets = [2, 0], sizes = [10, 10], strides = [1, 1]} : vector<16x10xf32> to vector<10x10xf32>
    %117 = vector.extract_strided_slice %93 {offsets = [4, 0], sizes = [10, 10], strides = [1, 1]} : vector<16x10xf32> to vector<10x10xf32>
    %118 = arith.addf %116, %117 : vector<10x10xf32>
    %cst_24 = arith.constant 0.216745317 : f32
    %119 = vector.broadcast %cst_24 : f32 to vector<10x10xf32>
    %120 = arith.mulf %119, %118 : vector<10x10xf32>
    %121 = arith.addf %115, %120 : vector<10x10xf32>
    %122 = vector.extract_strided_slice %94 {offsets = [3, 0], sizes = [10, 10], strides = [1, 1]} : vector<16x10xf32> to vector<10x10xf32>
    %cst_25 = arith.constant 0.270682156 : f32
    %123 = vector.broadcast %cst_25 : f32 to vector<10x10xf32>
    %124 = arith.mulf %123, %122 : vector<10x10xf32>
    %125 = vector.extract_strided_slice %94 {offsets = [0, 0], sizes = [10, 10], strides = [1, 1]} : vector<16x10xf32> to vector<10x10xf32>
    %126 = vector.extract_strided_slice %94 {offsets = [6, 0], sizes = [10, 10], strides = [1, 1]} : vector<16x10xf32> to vector<10x10xf32>
    %127 = arith.addf %125, %126 : vector<10x10xf32>
    %cst_26 = arith.constant 0.036632847 : f32
    %128 = vector.broadcast %cst_26 : f32 to vector<10x10xf32>
    %129 = arith.mulf %128, %127 : vector<10x10xf32>
    %130 = arith.addf %124, %129 : vector<10x10xf32>
    %131 = vector.extract_strided_slice %94 {offsets = [1, 0], sizes = [10, 10], strides = [1, 1]} : vector<16x10xf32> to vector<10x10xf32>
    %132 = vector.extract_strided_slice %94 {offsets = [5, 0], sizes = [10, 10], strides = [1, 1]} : vector<16x10xf32> to vector<10x10xf32>
    %133 = arith.addf %131, %132 : vector<10x10xf32>
    %cst_27 = arith.constant 0.111280762 : f32
    %134 = vector.broadcast %cst_27 : f32 to vector<10x10xf32>
    %135 = arith.mulf %134, %133 : vector<10x10xf32>
    %136 = arith.addf %130, %135 : vector<10x10xf32>
    %137 = vector.extract_strided_slice %94 {offsets = [2, 0], sizes = [10, 10], strides = [1, 1]} : vector<16x10xf32> to vector<10x10xf32>
    %138 = vector.extract_strided_slice %94 {offsets = [4, 0], sizes = [10, 10], strides = [1, 1]} : vector<16x10xf32> to vector<10x10xf32>
    %139 = arith.addf %137, %138 : vector<10x10xf32>
    %cst_28 = arith.constant 0.216745317 : f32
    %140 = vector.broadcast %cst_28 : f32 to vector<10x10xf32>
    %141 = arith.mulf %140, %139 : vector<10x10xf32>
    %142 = arith.addf %136, %141 : vector<10x10xf32>
    %143 = vector.extract_strided_slice %96 {offsets = [3, 0], sizes = [10, 10], strides = [1, 1]} : vector<16x10xf32> to vector<10x10xf32>
    %cst_29 = arith.constant 0.270682156 : f32
    %144 = vector.broadcast %cst_29 : f32 to vector<10x10xf32>
    %145 = arith.mulf %144, %143 : vector<10x10xf32>
    %146 = vector.extract_strided_slice %96 {offsets = [0, 0], sizes = [10, 10], strides = [1, 1]} : vector<16x10xf32> to vector<10x10xf32>
    %147 = vector.extract_strided_slice %96 {offsets = [6, 0], sizes = [10, 10], strides = [1, 1]} : vector<16x10xf32> to vector<10x10xf32>
    %148 = arith.addf %146, %147 : vector<10x10xf32>
    %cst_30 = arith.constant 0.036632847 : f32
    %149 = vector.broadcast %cst_30 : f32 to vector<10x10xf32>
    %150 = arith.mulf %149, %148 : vector<10x10xf32>
    %151 = arith.addf %145, %150 : vector<10x10xf32>
    %152 = vector.extract_strided_slice %96 {offsets = [1, 0], sizes = [10, 10], strides = [1, 1]} : vector<16x10xf32> to vector<10x10xf32>
    %153 = vector.extract_strided_slice %96 {offsets = [5, 0], sizes = [10, 10], strides = [1, 1]} : vector<16x10xf32> to vector<10x10xf32>
    %154 = arith.addf %152, %153 : vector<10x10xf32>
    %cst_31 = arith.constant 0.111280762 : f32
    %155 = vector.broadcast %cst_31 : f32 to vector<10x10xf32>
    %156 = arith.mulf %155, %154 : vector<10x10xf32>
    %157 = arith.addf %151, %156 : vector<10x10xf32>
    %158 = vector.extract_strided_slice %96 {offsets = [2, 0], sizes = [10, 10], strides = [1, 1]} : vector<16x10xf32> to vector<10x10xf32>
    %159 = vector.extract_strided_slice %96 {offsets = [4, 0], sizes = [10, 10], strides = [1, 1]} : vector<16x10xf32> to vector<10x10xf32>
    %160 = arith.addf %158, %159 : vector<10x10xf32>
    %cst_32 = arith.constant 0.216745317 : f32
    %161 = vector.broadcast %cst_32 : f32 to vector<10x10xf32>
    %162 = arith.mulf %161, %160 : vector<10x10xf32>
    %163 = arith.addf %157, %162 : vector<10x10xf32>
    %164 = vector.extract_strided_slice %98 {offsets = [3, 0], sizes = [10, 10], strides = [1, 1]} : vector<16x10xf32> to vector<10x10xf32>
    %cst_33 = arith.constant 0.270682156 : f32
    %165 = vector.broadcast %cst_33 : f32 to vector<10x10xf32>
    %166 = arith.mulf %165, %164 : vector<10x10xf32>
    %167 = vector.extract_strided_slice %98 {offsets = [0, 0], sizes = [10, 10], strides = [1, 1]} : vector<16x10xf32> to vector<10x10xf32>
    %168 = vector.extract_strided_slice %98 {offsets = [6, 0], sizes = [10, 10], strides = [1, 1]} : vector<16x10xf32> to vector<10x10xf32>
    %169 = arith.addf %167, %168 : vector<10x10xf32>
    %cst_34 = arith.constant 0.036632847 : f32
    %170 = vector.broadcast %cst_34 : f32 to vector<10x10xf32>
    %171 = arith.mulf %170, %169 : vector<10x10xf32>
    %172 = arith.addf %166, %171 : vector<10x10xf32>
    %173 = vector.extract_strided_slice %98 {offsets = [1, 0], sizes = [10, 10], strides = [1, 1]} : vector<16x10xf32> to vector<10x10xf32>
    %174 = vector.extract_strided_slice %98 {offsets = [5, 0], sizes = [10, 10], strides = [1, 1]} : vector<16x10xf32> to vector<10x10xf32>
    %175 = arith.addf %173, %174 : vector<10x10xf32>
    %cst_35 = arith.constant 0.111280762 : f32
    %176 = vector.broadcast %cst_35 : f32 to vector<10x10xf32>
    %177 = arith.mulf %176, %175 : vector<10x10xf32>
    %178 = arith.addf %172, %177 : vector<10x10xf32>
    %179 = vector.extract_strided_slice %98 {offsets = [2, 0], sizes = [10, 10], strides = [1, 1]} : vector<16x10xf32> to vector<10x10xf32>
    %180 = vector.extract_strided_slice %98 {offsets = [4, 0], sizes = [10, 10], strides = [1, 1]} : vector<16x10xf32> to vector<10x10xf32>
    %181 = arith.addf %179, %180 : vector<10x10xf32>
    %cst_36 = arith.constant 0.216745317 : f32
    %182 = vector.broadcast %cst_36 : f32 to vector<10x10xf32>
    %183 = arith.mulf %182, %181 : vector<10x10xf32>
    %184 = arith.addf %178, %183 : vector<10x10xf32>
    %185 = vector.extract_strided_slice %100 {offsets = [3, 0], sizes = [10, 10], strides = [1, 1]} : vector<16x10xf32> to vector<10x10xf32>
    %cst_37 = arith.constant 0.270682156 : f32
    %186 = vector.broadcast %cst_37 : f32 to vector<10x10xf32>
    %187 = arith.mulf %186, %185 : vector<10x10xf32>
    %188 = vector.extract_strided_slice %100 {offsets = [0, 0], sizes = [10, 10], strides = [1, 1]} : vector<16x10xf32> to vector<10x10xf32>
    %189 = vector.extract_strided_slice %100 {offsets = [6, 0], sizes = [10, 10], strides = [1, 1]} : vector<16x10xf32> to vector<10x10xf32>
    %190 = arith.addf %188, %189 : vector<10x10xf32>
    %cst_38 = arith.constant 0.036632847 : f32
    %191 = vector.broadcast %cst_38 : f32 to vector<10x10xf32>
    %192 = arith.mulf %191, %190 : vector<10x10xf32>
    %193 = arith.addf %187, %192 : vector<10x10xf32>
    %194 = vector.extract_strided_slice %100 {offsets = [1, 0], sizes = [10, 10], strides = [1, 1]} : vector<16x10xf32> to vector<10x10xf32>
    %195 = vector.extract_strided_slice %100 {offsets = [5, 0], sizes = [10, 10], strides = [1, 1]} : vector<16x10xf32> to vector<10x10xf32>
    %196 = arith.addf %194, %195 : vector<10x10xf32>
    %cst_39 = arith.constant 0.111280762 : f32
    %197 = vector.broadcast %cst_39 : f32 to vector<10x10xf32>
    %198 = arith.mulf %197, %196 : vector<10x10xf32>
    %199 = arith.addf %193, %198 : vector<10x10xf32>
    %200 = vector.extract_strided_slice %100 {offsets = [2, 0], sizes = [10, 10], strides = [1, 1]} : vector<16x10xf32> to vector<10x10xf32>
    %201 = vector.extract_strided_slice %100 {offsets = [4, 0], sizes = [10, 10], strides = [1, 1]} : vector<16x10xf32> to vector<10x10xf32>
    %202 = arith.addf %200, %201 : vector<10x10xf32>
    %cst_40 = arith.constant 0.216745317 : f32
    %203 = vector.broadcast %cst_40 : f32 to vector<10x10xf32>
    %204 = arith.mulf %203, %202 : vector<10x10xf32>
    %205 = arith.addf %199, %204 : vector<10x10xf32>
    %206 = arith.mulf %121, %121 : vector<10x10xf32>
    %207 = arith.mulf %142, %142 : vector<10x10xf32>
    %208 = arith.mulf %121, %142 : vector<10x10xf32>
    %209 = arith.subf %163, %206 : vector<10x10xf32>
    %210 = arith.subf %184, %207 : vector<10x10xf32>
    %211 = arith.subf %205, %208 : vector<10x10xf32>
    %cst_41 = arith.constant 2.000000e+00 : f32
    %212 = vector.broadcast %cst_41 : f32 to vector<10x10xf32>
    %213 = arith.mulf %212, %211 : vector<10x10xf32>
    %214 = vector.broadcast %3 : f32 to vector<10x10xf32>
    %215 = arith.addf %213, %214 : vector<10x10xf32>
    %216 = arith.addf %209, %210 : vector<10x10xf32>
    %217 = vector.broadcast %3 : f32 to vector<10x10xf32>
    %218 = arith.addf %216, %217 : vector<10x10xf32>
    %cst_42 = arith.constant 2.000000e+00 : f32
    %219 = vector.broadcast %cst_42 : f32 to vector<10x10xf32>
    %220 = arith.mulf %219, %208 : vector<10x10xf32>
    %221 = vector.broadcast %1 : f32 to vector<10x10xf32>
    %222 = arith.addf %220, %221 : vector<10x10xf32>
    %223 = arith.mulf %222, %215 : vector<10x10xf32>
    %224 = arith.addf %206, %207 : vector<10x10xf32>
    %225 = vector.broadcast %1 : f32 to vector<10x10xf32>
    %226 = arith.addf %224, %225 : vector<10x10xf32>
    %227 = arith.mulf %226, %218 : vector<10x10xf32>
    %228 = tpu.reciprocal %227 {approx = true} : vector<10x10xf32> -> vector<10x10xf32>
    %229 = arith.mulf %227, %228 : vector<10x10xf32>
    %cst_43 = arith.constant 2.000000e+00 : f32
    %230 = vector.broadcast %cst_43 : f32 to vector<10x10xf32>
    %231 = arith.subf %230, %229 : vector<10x10xf32>
    %232 = arith.mulf %228, %231 : vector<10x10xf32>
    %233 = arith.mulf %223, %232 : vector<10x10xf32>
    %234 = vector.shape_cast %233 : vector<10x10xf32> to vector<1x10x10xf32>
    %cst_44 = arith.constant dense<0.000000e+00> : vector<1xf32>
    %235 = vector.multi_reduction <add>, %234, %cst_44 [1, 2] : vector<1x10x10xf32> to vector<1xf32>
    %236 = vector.shape_cast %235 : vector<1xf32> to vector<1x1x1xf32>
    %237 = vector.extract %236[0, 0, 0] : f32 from vector<1x1x1xf32>
    %cst_45 = arith.constant 0.000000e+00 : f32
    %238 = arith.addf %cst_45, %237 : f32
    %c0_46 = arith.constant 0 : index
    %c1_47 = arith.constant 1 : index
    %c0_48 = arith.constant 0 : index
    %c0_49 = arith.constant 0 : index
    %239 = vector.load %arg3[%c0_46, %c1_47, %c0_48, %c0_49] : memref<1x4x16x16xf32, #tpu.memory_space<vmem>>, vector<1x1x16x16xf32>
    %240 = vector.shape_cast %239 : vector<1x1x16x16xf32> to vector<16x16xf32>
    %c0_50 = arith.constant 0 : index
    %c1_51 = arith.constant 1 : index
    %c0_52 = arith.constant 0 : index
    %c0_53 = arith.constant 0 : index
    %241 = vector.load %arg4[%c0_50, %c1_51, %c0_52, %c0_53] : memref<1x4x16x16xf32, #tpu.memory_space<vmem>>, vector<1x1x16x16xf32>
    %242 = vector.shape_cast %241 : vector<1x1x16x16xf32> to vector<16x16xf32>
    %243 = vector.extract_strided_slice %240 {offsets = [0, 0], sizes = [16, 10], strides = [1, 1]} : vector<16x16xf32> to vector<16x10xf32>
    %244 = vector.extract_strided_slice %242 {offsets = [0, 0], sizes = [16, 10], strides = [1, 1]} : vector<16x16xf32> to vector<16x10xf32>
    %cst_54 = arith.constant 0.036632847 : f32
    %245 = vector.broadcast %cst_54 : f32 to vector<16x10xf32>
    %246 = arith.mulf %245, %243 : vector<16x10xf32>
    %cst_55 = arith.constant 0.036632847 : f32
    %247 = vector.broadcast %cst_55 : f32 to vector<16x10xf32>
    %248 = arith.mulf %247, %244 : vector<16x10xf32>
    %249 = arith.mulf %246, %243 : vector<16x10xf32>
    %250 = arith.mulf %248, %244 : vector<16x10xf32>
    %251 = arith.mulf %246, %244 : vector<16x10xf32>
    %252 = vector.extract_strided_slice %240 {offsets = [0, 1], sizes = [16, 10], strides = [1, 1]} : vector<16x16xf32> to vector<16x10xf32>
    %253 = vector.extract_strided_slice %242 {offsets = [0, 1], sizes = [16, 10], strides = [1, 1]} : vector<16x16xf32> to vector<16x10xf32>
    %cst_56 = arith.constant 0.111280762 : f32
    %254 = vector.broadcast %cst_56 : f32 to vector<16x10xf32>
    %255 = arith.mulf %254, %252 : vector<16x10xf32>
    %cst_57 = arith.constant 0.111280762 : f32
    %256 = vector.broadcast %cst_57 : f32 to vector<16x10xf32>
    %257 = arith.mulf %256, %253 : vector<16x10xf32>
    %258 = arith.addf %246, %255 : vector<16x10xf32>
    %259 = arith.addf %248, %257 : vector<16x10xf32>
    %260 = arith.mulf %255, %252 : vector<16x10xf32>
    %261 = arith.addf %249, %260 : vector<16x10xf32>
    %262 = arith.mulf %257, %253 : vector<16x10xf32>
    %263 = arith.addf %250, %262 : vector<16x10xf32>
    %264 = arith.mulf %255, %253 : vector<16x10xf32>
    %265 = arith.addf %251, %264 : vector<16x10xf32>
    %266 = vector.extract_strided_slice %240 {offsets = [0, 2], sizes = [16, 10], strides = [1, 1]} : vector<16x16xf32> to vector<16x10xf32>
    %267 = vector.extract_strided_slice %242 {offsets = [0, 2], sizes = [16, 10], strides = [1, 1]} : vector<16x16xf32> to vector<16x10xf32>
    %cst_58 = arith.constant 0.216745317 : f32
    %268 = vector.broadcast %cst_58 : f32 to vector<16x10xf32>
    %269 = arith.mulf %268, %266 : vector<16x10xf32>
    %cst_59 = arith.constant 0.216745317 : f32
    %270 = vector.broadcast %cst_59 : f32 to vector<16x10xf32>
    %271 = arith.mulf %270, %267 : vector<16x10xf32>
    %272 = arith.addf %258, %269 : vector<16x10xf32>
    %273 = arith.addf %259, %271 : vector<16x10xf32>
    %274 = arith.mulf %269, %266 : vector<16x10xf32>
    %275 = arith.addf %261, %274 : vector<16x10xf32>
    %276 = arith.mulf %271, %267 : vector<16x10xf32>
    %277 = arith.addf %263, %276 : vector<16x10xf32>
    %278 = arith.mulf %269, %267 : vector<16x10xf32>
    %279 = arith.addf %265, %278 : vector<16x10xf32>
    %280 = vector.extract_strided_slice %240 {offsets = [0, 3], sizes = [16, 10], strides = [1, 1]} : vector<16x16xf32> to vector<16x10xf32>
    %281 = vector.extract_strided_slice %242 {offsets = [0, 3], sizes = [16, 10], strides = [1, 1]} : vector<16x16xf32> to vector<16x10xf32>
    %cst_60 = arith.constant 0.270682156 : f32
    %282 = vector.broadcast %cst_60 : f32 to vector<16x10xf32>
    %283 = arith.mulf %282, %280 : vector<16x10xf32>
    %cst_61 = arith.constant 0.270682156 : f32
    %284 = vector.broadcast %cst_61 : f32 to vector<16x10xf32>
    %285 = arith.mulf %284, %281 : vector<16x10xf32>
    %286 = arith.addf %272, %283 : vector<16x10xf32>
    %287 = arith.addf %273, %285 : vector<16x10xf32>
    %288 = arith.mulf %283, %280 : vector<16x10xf32>
    %289 = arith.addf %275, %288 : vector<16x10xf32>
    %290 = arith.mulf %285, %281 : vector<16x10xf32>
    %291 = arith.addf %277, %290 : vector<16x10xf32>
    %292 = arith.mulf %283, %281 : vector<16x10xf32>
    %293 = arith.addf %279, %292 : vector<16x10xf32>
    %294 = vector.extract_strided_slice %240 {offsets = [0, 4], sizes = [16, 10], strides = [1, 1]} : vector<16x16xf32> to vector<16x10xf32>
    %295 = vector.extract_strided_slice %242 {offsets = [0, 4], sizes = [16, 10], strides = [1, 1]} : vector<16x16xf32> to vector<16x10xf32>
    %cst_62 = arith.constant 0.216745317 : f32
    %296 = vector.broadcast %cst_62 : f32 to vector<16x10xf32>
    %297 = arith.mulf %296, %294 : vector<16x10xf32>
    %cst_63 = arith.constant 0.216745317 : f32
    %298 = vector.broadcast %cst_63 : f32 to vector<16x10xf32>
    %299 = arith.mulf %298, %295 : vector<16x10xf32>
    %300 = arith.addf %286, %297 : vector<16x10xf32>
    %301 = arith.addf %287, %299 : vector<16x10xf32>
    %302 = arith.mulf %297, %294 : vector<16x10xf32>
    %303 = arith.addf %289, %302 : vector<16x10xf32>
    %304 = arith.mulf %299, %295 : vector<16x10xf32>
    %305 = arith.addf %291, %304 : vector<16x10xf32>
    %306 = arith.mulf %297, %295 : vector<16x10xf32>
    %307 = arith.addf %293, %306 : vector<16x10xf32>
    %308 = vector.extract_strided_slice %240 {offsets = [0, 5], sizes = [16, 10], strides = [1, 1]} : vector<16x16xf32> to vector<16x10xf32>
    %309 = vector.extract_strided_slice %242 {offsets = [0, 5], sizes = [16, 10], strides = [1, 1]} : vector<16x16xf32> to vector<16x10xf32>
    %cst_64 = arith.constant 0.111280762 : f32
    %310 = vector.broadcast %cst_64 : f32 to vector<16x10xf32>
    %311 = arith.mulf %310, %308 : vector<16x10xf32>
    %cst_65 = arith.constant 0.111280762 : f32
    %312 = vector.broadcast %cst_65 : f32 to vector<16x10xf32>
    %313 = arith.mulf %312, %309 : vector<16x10xf32>
    %314 = arith.addf %300, %311 : vector<16x10xf32>
    %315 = arith.addf %301, %313 : vector<16x10xf32>
    %316 = arith.mulf %311, %308 : vector<16x10xf32>
    %317 = arith.addf %303, %316 : vector<16x10xf32>
    %318 = arith.mulf %313, %309 : vector<16x10xf32>
    %319 = arith.addf %305, %318 : vector<16x10xf32>
    %320 = arith.mulf %311, %309 : vector<16x10xf32>
    %321 = arith.addf %307, %320 : vector<16x10xf32>
    %322 = vector.extract_strided_slice %240 {offsets = [0, 6], sizes = [16, 10], strides = [1, 1]} : vector<16x16xf32> to vector<16x10xf32>
    %323 = vector.extract_strided_slice %242 {offsets = [0, 6], sizes = [16, 10], strides = [1, 1]} : vector<16x16xf32> to vector<16x10xf32>
    %cst_66 = arith.constant 0.036632847 : f32
    %324 = vector.broadcast %cst_66 : f32 to vector<16x10xf32>
    %325 = arith.mulf %324, %322 : vector<16x10xf32>
    %cst_67 = arith.constant 0.036632847 : f32
    %326 = vector.broadcast %cst_67 : f32 to vector<16x10xf32>
    %327 = arith.mulf %326, %323 : vector<16x10xf32>
    %328 = arith.addf %314, %325 : vector<16x10xf32>
    %329 = arith.addf %315, %327 : vector<16x10xf32>
    %330 = arith.mulf %325, %322 : vector<16x10xf32>
    %331 = arith.addf %317, %330 : vector<16x10xf32>
    %332 = arith.mulf %327, %323 : vector<16x10xf32>
    %333 = arith.addf %319, %332 : vector<16x10xf32>
    %334 = arith.mulf %325, %323 : vector<16x10xf32>
    %335 = arith.addf %321, %334 : vector<16x10xf32>
    %336 = vector.extract_strided_slice %328 {offsets = [3, 0], sizes = [10, 10], strides = [1, 1]} : vector<16x10xf32> to vector<10x10xf32>
    %cst_68 = arith.constant 0.270682156 : f32
    %337 = vector.broadcast %cst_68 : f32 to vector<10x10xf32>
    %338 = arith.mulf %337, %336 : vector<10x10xf32>
    %339 = vector.extract_strided_slice %328 {offsets = [0, 0], sizes = [10, 10], strides = [1, 1]} : vector<16x10xf32> to vector<10x10xf32>
    %340 = vector.extract_strided_slice %328 {offsets = [6, 0], sizes = [10, 10], strides = [1, 1]} : vector<16x10xf32> to vector<10x10xf32>
    %341 = arith.addf %339, %340 : vector<10x10xf32>
    %cst_69 = arith.constant 0.036632847 : f32
    %342 = vector.broadcast %cst_69 : f32 to vector<10x10xf32>
    %343 = arith.mulf %342, %341 : vector<10x10xf32>
    %344 = arith.addf %338, %343 : vector<10x10xf32>
    %345 = vector.extract_strided_slice %328 {offsets = [1, 0], sizes = [10, 10], strides = [1, 1]} : vector<16x10xf32> to vector<10x10xf32>
    %346 = vector.extract_strided_slice %328 {offsets = [5, 0], sizes = [10, 10], strides = [1, 1]} : vector<16x10xf32> to vector<10x10xf32>
    %347 = arith.addf %345, %346 : vector<10x10xf32>
    %cst_70 = arith.constant 0.111280762 : f32
    %348 = vector.broadcast %cst_70 : f32 to vector<10x10xf32>
    %349 = arith.mulf %348, %347 : vector<10x10xf32>
    %350 = arith.addf %344, %349 : vector<10x10xf32>
    %351 = vector.extract_strided_slice %328 {offsets = [2, 0], sizes = [10, 10], strides = [1, 1]} : vector<16x10xf32> to vector<10x10xf32>
    %352 = vector.extract_strided_slice %328 {offsets = [4, 0], sizes = [10, 10], strides = [1, 1]} : vector<16x10xf32> to vector<10x10xf32>
    %353 = arith.addf %351, %352 : vector<10x10xf32>
    %cst_71 = arith.constant 0.216745317 : f32
    %354 = vector.broadcast %cst_71 : f32 to vector<10x10xf32>
    %355 = arith.mulf %354, %353 : vector<10x10xf32>
    %356 = arith.addf %350, %355 : vector<10x10xf32>
    %357 = vector.extract_strided_slice %329 {offsets = [3, 0], sizes = [10, 10], strides = [1, 1]} : vector<16x10xf32> to vector<10x10xf32>
    %cst_72 = arith.constant 0.270682156 : f32
    %358 = vector.broadcast %cst_72 : f32 to vector<10x10xf32>
    %359 = arith.mulf %358, %357 : vector<10x10xf32>
    %360 = vector.extract_strided_slice %329 {offsets = [0, 0], sizes = [10, 10], strides = [1, 1]} : vector<16x10xf32> to vector<10x10xf32>
    %361 = vector.extract_strided_slice %329 {offsets = [6, 0], sizes = [10, 10], strides = [1, 1]} : vector<16x10xf32> to vector<10x10xf32>
    %362 = arith.addf %360, %361 : vector<10x10xf32>
    %cst_73 = arith.constant 0.036632847 : f32
    %363 = vector.broadcast %cst_73 : f32 to vector<10x10xf32>
    %364 = arith.mulf %363, %362 : vector<10x10xf32>
    %365 = arith.addf %359, %364 : vector<10x10xf32>
    %366 = vector.extract_strided_slice %329 {offsets = [1, 0], sizes = [10, 10], strides = [1, 1]} : vector<16x10xf32> to vector<10x10xf32>
    %367 = vector.extract_strided_slice %329 {offsets = [5, 0], sizes = [10, 10], strides = [1, 1]} : vector<16x10xf32> to vector<10x10xf32>
    %368 = arith.addf %366, %367 : vector<10x10xf32>
    %cst_74 = arith.constant 0.111280762 : f32
    %369 = vector.broadcast %cst_74 : f32 to vector<10x10xf32>
    %370 = arith.mulf %369, %368 : vector<10x10xf32>
    %371 = arith.addf %365, %370 : vector<10x10xf32>
    %372 = vector.extract_strided_slice %329 {offsets = [2, 0], sizes = [10, 10], strides = [1, 1]} : vector<16x10xf32> to vector<10x10xf32>
    %373 = vector.extract_strided_slice %329 {offsets = [4, 0], sizes = [10, 10], strides = [1, 1]} : vector<16x10xf32> to vector<10x10xf32>
    %374 = arith.addf %372, %373 : vector<10x10xf32>
    %cst_75 = arith.constant 0.216745317 : f32
    %375 = vector.broadcast %cst_75 : f32 to vector<10x10xf32>
    %376 = arith.mulf %375, %374 : vector<10x10xf32>
    %377 = arith.addf %371, %376 : vector<10x10xf32>
    %378 = vector.extract_strided_slice %331 {offsets = [3, 0], sizes = [10, 10], strides = [1, 1]} : vector<16x10xf32> to vector<10x10xf32>
    %cst_76 = arith.constant 0.270682156 : f32
    %379 = vector.broadcast %cst_76 : f32 to vector<10x10xf32>
    %380 = arith.mulf %379, %378 : vector<10x10xf32>
    %381 = vector.extract_strided_slice %331 {offsets = [0, 0], sizes = [10, 10], strides = [1, 1]} : vector<16x10xf32> to vector<10x10xf32>
    %382 = vector.extract_strided_slice %331 {offsets = [6, 0], sizes = [10, 10], strides = [1, 1]} : vector<16x10xf32> to vector<10x10xf32>
    %383 = arith.addf %381, %382 : vector<10x10xf32>
    %cst_77 = arith.constant 0.036632847 : f32
    %384 = vector.broadcast %cst_77 : f32 to vector<10x10xf32>
    %385 = arith.mulf %384, %383 : vector<10x10xf32>
    %386 = arith.addf %380, %385 : vector<10x10xf32>
    %387 = vector.extract_strided_slice %331 {offsets = [1, 0], sizes = [10, 10], strides = [1, 1]} : vector<16x10xf32> to vector<10x10xf32>
    %388 = vector.extract_strided_slice %331 {offsets = [5, 0], sizes = [10, 10], strides = [1, 1]} : vector<16x10xf32> to vector<10x10xf32>
    %389 = arith.addf %387, %388 : vector<10x10xf32>
    %cst_78 = arith.constant 0.111280762 : f32
    %390 = vector.broadcast %cst_78 : f32 to vector<10x10xf32>
    %391 = arith.mulf %390, %389 : vector<10x10xf32>
    %392 = arith.addf %386, %391 : vector<10x10xf32>
    %393 = vector.extract_strided_slice %331 {offsets = [2, 0], sizes = [10, 10], strides = [1, 1]} : vector<16x10xf32> to vector<10x10xf32>
    %394 = vector.extract_strided_slice %331 {offsets = [4, 0], sizes = [10, 10], strides = [1, 1]} : vector<16x10xf32> to vector<10x10xf32>
    %395 = arith.addf %393, %394 : vector<10x10xf32>
    %cst_79 = arith.constant 0.216745317 : f32
    %396 = vector.broadcast %cst_79 : f32 to vector<10x10xf32>
    %397 = arith.mulf %396, %395 : vector<10x10xf32>
    %398 = arith.addf %392, %397 : vector<10x10xf32>
    %399 = vector.extract_strided_slice %333 {offsets = [3, 0], sizes = [10, 10], strides = [1, 1]} : vector<16x10xf32> to vector<10x10xf32>
    %cst_80 = arith.constant 0.270682156 : f32
    %400 = vector.broadcast %cst_80 : f32 to vector<10x10xf32>
    %401 = arith.mulf %400, %399 : vector<10x10xf32>
    %402 = vector.extract_strided_slice %333 {offsets = [0, 0], sizes = [10, 10], strides = [1, 1]} : vector<16x10xf32> to vector<10x10xf32>
    %403 = vector.extract_strided_slice %333 {offsets = [6, 0], sizes = [10, 10], strides = [1, 1]} : vector<16x10xf32> to vector<10x10xf32>
    %404 = arith.addf %402, %403 : vector<10x10xf32>
    %cst_81 = arith.constant 0.036632847 : f32
    %405 = vector.broadcast %cst_81 : f32 to vector<10x10xf32>
    %406 = arith.mulf %405, %404 : vector<10x10xf32>
    %407 = arith.addf %401, %406 : vector<10x10xf32>
    %408 = vector.extract_strided_slice %333 {offsets = [1, 0], sizes = [10, 10], strides = [1, 1]} : vector<16x10xf32> to vector<10x10xf32>
    %409 = vector.extract_strided_slice %333 {offsets = [5, 0], sizes = [10, 10], strides = [1, 1]} : vector<16x10xf32> to vector<10x10xf32>
    %410 = arith.addf %408, %409 : vector<10x10xf32>
    %cst_82 = arith.constant 0.111280762 : f32
    %411 = vector.broadcast %cst_82 : f32 to vector<10x10xf32>
    %412 = arith.mulf %411, %410 : vector<10x10xf32>
    %413 = arith.addf %407, %412 : vector<10x10xf32>
    %414 = vector.extract_strided_slice %333 {offsets = [2, 0], sizes = [10, 10], strides = [1, 1]} : vector<16x10xf32> to vector<10x10xf32>
    %415 = vector.extract_strided_slice %333 {offsets = [4, 0], sizes = [10, 10], strides = [1, 1]} : vector<16x10xf32> to vector<10x10xf32>
    %416 = arith.addf %414, %415 : vector<10x10xf32>
    %cst_83 = arith.constant 0.216745317 : f32
    %417 = vector.broadcast %cst_83 : f32 to vector<10x10xf32>
    %418 = arith.mulf %417, %416 : vector<10x10xf32>
    %419 = arith.addf %413, %418 : vector<10x10xf32>
    %420 = vector.extract_strided_slice %335 {offsets = [3, 0], sizes = [10, 10], strides = [1, 1]} : vector<16x10xf32> to vector<10x10xf32>
    %cst_84 = arith.constant 0.270682156 : f32
    %421 = vector.broadcast %cst_84 : f32 to vector<10x10xf32>
    %422 = arith.mulf %421, %420 : vector<10x10xf32>
    %423 = vector.extract_strided_slice %335 {offsets = [0, 0], sizes = [10, 10], strides = [1, 1]} : vector<16x10xf32> to vector<10x10xf32>
    %424 = vector.extract_strided_slice %335 {offsets = [6, 0], sizes = [10, 10], strides = [1, 1]} : vector<16x10xf32> to vector<10x10xf32>
    %425 = arith.addf %423, %424 : vector<10x10xf32>
    %cst_85 = arith.constant 0.036632847 : f32
    %426 = vector.broadcast %cst_85 : f32 to vector<10x10xf32>
    %427 = arith.mulf %426, %425 : vector<10x10xf32>
    %428 = arith.addf %422, %427 : vector<10x10xf32>
    %429 = vector.extract_strided_slice %335 {offsets = [1, 0], sizes = [10, 10], strides = [1, 1]} : vector<16x10xf32> to vector<10x10xf32>
    %430 = vector.extract_strided_slice %335 {offsets = [5, 0], sizes = [10, 10], strides = [1, 1]} : vector<16x10xf32> to vector<10x10xf32>
    %431 = arith.addf %429, %430 : vector<10x10xf32>
    %cst_86 = arith.constant 0.111280762 : f32
    %432 = vector.broadcast %cst_86 : f32 to vector<10x10xf32>
    %433 = arith.mulf %432, %431 : vector<10x10xf32>
    %434 = arith.addf %428, %433 : vector<10x10xf32>
    %435 = vector.extract_strided_slice %335 {offsets = [2, 0], sizes = [10, 10], strides = [1, 1]} : vector<16x10xf32> to vector<10x10xf32>
    %436 = vector.extract_strided_slice %335 {offsets = [4, 0], sizes = [10, 10], strides = [1, 1]} : vector<16x10xf32> to vector<10x10xf32>
    %437 = arith.addf %435, %436 : vector<10x10xf32>
    %cst_87 = arith.constant 0.216745317 : f32
    %438 = vector.broadcast %cst_87 : f32 to vector<10x10xf32>
    %439 = arith.mulf %438, %437 : vector<10x10xf32>
    %440 = arith.addf %434, %439 : vector<10x10xf32>
    %441 = arith.mulf %356, %356 : vector<10x10xf32>
    %442 = arith.mulf %377, %377 : vector<10x10xf32>
    %443 = arith.mulf %356, %377 : vector<10x10xf32>
    %444 = arith.subf %398, %441 : vector<10x10xf32>
    %445 = arith.subf %419, %442 : vector<10x10xf32>
    %446 = arith.subf %440, %443 : vector<10x10xf32>
    %cst_88 = arith.constant 2.000000e+00 : f32
    %447 = vector.broadcast %cst_88 : f32 to vector<10x10xf32>
    %448 = arith.mulf %447, %446 : vector<10x10xf32>
    %449 = vector.broadcast %3 : f32 to vector<10x10xf32>
    %450 = arith.addf %448, %449 : vector<10x10xf32>
    %451 = arith.addf %444, %445 : vector<10x10xf32>
    %452 = vector.broadcast %3 : f32 to vector<10x10xf32>
    %453 = arith.addf %451, %452 : vector<10x10xf32>
    %cst_89 = arith.constant 2.000000e+00 : f32
    %454 = vector.broadcast %cst_89 : f32 to vector<10x10xf32>
    %455 = arith.mulf %454, %443 : vector<10x10xf32>
    %456 = vector.broadcast %1 : f32 to vector<10x10xf32>
    %457 = arith.addf %455, %456 : vector<10x10xf32>
    %458 = arith.mulf %457, %450 : vector<10x10xf32>
    %459 = arith.addf %441, %442 : vector<10x10xf32>
    %460 = vector.broadcast %1 : f32 to vector<10x10xf32>
    %461 = arith.addf %459, %460 : vector<10x10xf32>
    %462 = arith.mulf %461, %453 : vector<10x10xf32>
    %463 = tpu.reciprocal %462 {approx = true} : vector<10x10xf32> -> vector<10x10xf32>
    %464 = arith.mulf %462, %463 : vector<10x10xf32>
    %cst_90 = arith.constant 2.000000e+00 : f32
    %465 = vector.broadcast %cst_90 : f32 to vector<10x10xf32>
    %466 = arith.subf %465, %464 : vector<10x10xf32>
    %467 = arith.mulf %463, %466 : vector<10x10xf32>
    %468 = arith.mulf %458, %467 : vector<10x10xf32>
    %469 = vector.shape_cast %468 : vector<10x10xf32> to vector<1x10x10xf32>
    %cst_91 = arith.constant dense<0.000000e+00> : vector<1xf32>
    %470 = vector.multi_reduction <add>, %469, %cst_91 [1, 2] : vector<1x10x10xf32> to vector<1xf32>
    %471 = vector.shape_cast %470 : vector<1xf32> to vector<1x1x1xf32>
    %472 = vector.extract %471[0, 0, 0] : f32 from vector<1x1x1xf32>
    %473 = arith.addf %238, %472 : f32
    %c0_92 = arith.constant 0 : index
    %c2 = arith.constant 2 : index
    %c0_93 = arith.constant 0 : index
    %c0_94 = arith.constant 0 : index
    %474 = vector.load %arg3[%c0_92, %c2, %c0_93, %c0_94] : memref<1x4x16x16xf32, #tpu.memory_space<vmem>>, vector<1x1x16x16xf32>
    %475 = vector.shape_cast %474 : vector<1x1x16x16xf32> to vector<16x16xf32>
    %c0_95 = arith.constant 0 : index
    %c2_96 = arith.constant 2 : index
    %c0_97 = arith.constant 0 : index
    %c0_98 = arith.constant 0 : index
    %476 = vector.load %arg4[%c0_95, %c2_96, %c0_97, %c0_98] : memref<1x4x16x16xf32, #tpu.memory_space<vmem>>, vector<1x1x16x16xf32>
    %477 = vector.shape_cast %476 : vector<1x1x16x16xf32> to vector<16x16xf32>
    %478 = vector.extract_strided_slice %475 {offsets = [0, 0], sizes = [16, 10], strides = [1, 1]} : vector<16x16xf32> to vector<16x10xf32>
    %479 = vector.extract_strided_slice %477 {offsets = [0, 0], sizes = [16, 10], strides = [1, 1]} : vector<16x16xf32> to vector<16x10xf32>
    %cst_99 = arith.constant 0.036632847 : f32
    %480 = vector.broadcast %cst_99 : f32 to vector<16x10xf32>
    %481 = arith.mulf %480, %478 : vector<16x10xf32>
    %cst_100 = arith.constant 0.036632847 : f32
    %482 = vector.broadcast %cst_100 : f32 to vector<16x10xf32>
    %483 = arith.mulf %482, %479 : vector<16x10xf32>
    %484 = arith.mulf %481, %478 : vector<16x10xf32>
    %485 = arith.mulf %483, %479 : vector<16x10xf32>
    %486 = arith.mulf %481, %479 : vector<16x10xf32>
    %487 = vector.extract_strided_slice %475 {offsets = [0, 1], sizes = [16, 10], strides = [1, 1]} : vector<16x16xf32> to vector<16x10xf32>
    %488 = vector.extract_strided_slice %477 {offsets = [0, 1], sizes = [16, 10], strides = [1, 1]} : vector<16x16xf32> to vector<16x10xf32>
    %cst_101 = arith.constant 0.111280762 : f32
    %489 = vector.broadcast %cst_101 : f32 to vector<16x10xf32>
    %490 = arith.mulf %489, %487 : vector<16x10xf32>
    %cst_102 = arith.constant 0.111280762 : f32
    %491 = vector.broadcast %cst_102 : f32 to vector<16x10xf32>
    %492 = arith.mulf %491, %488 : vector<16x10xf32>
    %493 = arith.addf %481, %490 : vector<16x10xf32>
    %494 = arith.addf %483, %492 : vector<16x10xf32>
    %495 = arith.mulf %490, %487 : vector<16x10xf32>
    %496 = arith.addf %484, %495 : vector<16x10xf32>
    %497 = arith.mulf %492, %488 : vector<16x10xf32>
    %498 = arith.addf %485, %497 : vector<16x10xf32>
    %499 = arith.mulf %490, %488 : vector<16x10xf32>
    %500 = arith.addf %486, %499 : vector<16x10xf32>
    %501 = vector.extract_strided_slice %475 {offsets = [0, 2], sizes = [16, 10], strides = [1, 1]} : vector<16x16xf32> to vector<16x10xf32>
    %502 = vector.extract_strided_slice %477 {offsets = [0, 2], sizes = [16, 10], strides = [1, 1]} : vector<16x16xf32> to vector<16x10xf32>
    %cst_103 = arith.constant 0.216745317 : f32
    %503 = vector.broadcast %cst_103 : f32 to vector<16x10xf32>
    %504 = arith.mulf %503, %501 : vector<16x10xf32>
    %cst_104 = arith.constant 0.216745317 : f32
    %505 = vector.broadcast %cst_104 : f32 to vector<16x10xf32>
    %506 = arith.mulf %505, %502 : vector<16x10xf32>
    %507 = arith.addf %493, %504 : vector<16x10xf32>
    %508 = arith.addf %494, %506 : vector<16x10xf32>
    %509 = arith.mulf %504, %501 : vector<16x10xf32>
    %510 = arith.addf %496, %509 : vector<16x10xf32>
    %511 = arith.mulf %506, %502 : vector<16x10xf32>
    %512 = arith.addf %498, %511 : vector<16x10xf32>
    %513 = arith.mulf %504, %502 : vector<16x10xf32>
    %514 = arith.addf %500, %513 : vector<16x10xf32>
    %515 = vector.extract_strided_slice %475 {offsets = [0, 3], sizes = [16, 10], strides = [1, 1]} : vector<16x16xf32> to vector<16x10xf32>
    %516 = vector.extract_strided_slice %477 {offsets = [0, 3], sizes = [16, 10], strides = [1, 1]} : vector<16x16xf32> to vector<16x10xf32>
    %cst_105 = arith.constant 0.270682156 : f32
    %517 = vector.broadcast %cst_105 : f32 to vector<16x10xf32>
    %518 = arith.mulf %517, %515 : vector<16x10xf32>
    %cst_106 = arith.constant 0.270682156 : f32
    %519 = vector.broadcast %cst_106 : f32 to vector<16x10xf32>
    %520 = arith.mulf %519, %516 : vector<16x10xf32>
    %521 = arith.addf %507, %518 : vector<16x10xf32>
    %522 = arith.addf %508, %520 : vector<16x10xf32>
    %523 = arith.mulf %518, %515 : vector<16x10xf32>
    %524 = arith.addf %510, %523 : vector<16x10xf32>
    %525 = arith.mulf %520, %516 : vector<16x10xf32>
    %526 = arith.addf %512, %525 : vector<16x10xf32>
    %527 = arith.mulf %518, %516 : vector<16x10xf32>
    %528 = arith.addf %514, %527 : vector<16x10xf32>
    %529 = vector.extract_strided_slice %475 {offsets = [0, 4], sizes = [16, 10], strides = [1, 1]} : vector<16x16xf32> to vector<16x10xf32>
    %530 = vector.extract_strided_slice %477 {offsets = [0, 4], sizes = [16, 10], strides = [1, 1]} : vector<16x16xf32> to vector<16x10xf32>
    %cst_107 = arith.constant 0.216745317 : f32
    %531 = vector.broadcast %cst_107 : f32 to vector<16x10xf32>
    %532 = arith.mulf %531, %529 : vector<16x10xf32>
    %cst_108 = arith.constant 0.216745317 : f32
    %533 = vector.broadcast %cst_108 : f32 to vector<16x10xf32>
    %534 = arith.mulf %533, %530 : vector<16x10xf32>
    %535 = arith.addf %521, %532 : vector<16x10xf32>
    %536 = arith.addf %522, %534 : vector<16x10xf32>
    %537 = arith.mulf %532, %529 : vector<16x10xf32>
    %538 = arith.addf %524, %537 : vector<16x10xf32>
    %539 = arith.mulf %534, %530 : vector<16x10xf32>
    %540 = arith.addf %526, %539 : vector<16x10xf32>
    %541 = arith.mulf %532, %530 : vector<16x10xf32>
    %542 = arith.addf %528, %541 : vector<16x10xf32>
    %543 = vector.extract_strided_slice %475 {offsets = [0, 5], sizes = [16, 10], strides = [1, 1]} : vector<16x16xf32> to vector<16x10xf32>
    %544 = vector.extract_strided_slice %477 {offsets = [0, 5], sizes = [16, 10], strides = [1, 1]} : vector<16x16xf32> to vector<16x10xf32>
    %cst_109 = arith.constant 0.111280762 : f32
    %545 = vector.broadcast %cst_109 : f32 to vector<16x10xf32>
    %546 = arith.mulf %545, %543 : vector<16x10xf32>
    %cst_110 = arith.constant 0.111280762 : f32
    %547 = vector.broadcast %cst_110 : f32 to vector<16x10xf32>
    %548 = arith.mulf %547, %544 : vector<16x10xf32>
    %549 = arith.addf %535, %546 : vector<16x10xf32>
    %550 = arith.addf %536, %548 : vector<16x10xf32>
    %551 = arith.mulf %546, %543 : vector<16x10xf32>
    %552 = arith.addf %538, %551 : vector<16x10xf32>
    %553 = arith.mulf %548, %544 : vector<16x10xf32>
    %554 = arith.addf %540, %553 : vector<16x10xf32>
    %555 = arith.mulf %546, %544 : vector<16x10xf32>
    %556 = arith.addf %542, %555 : vector<16x10xf32>
    %557 = vector.extract_strided_slice %475 {offsets = [0, 6], sizes = [16, 10], strides = [1, 1]} : vector<16x16xf32> to vector<16x10xf32>
    %558 = vector.extract_strided_slice %477 {offsets = [0, 6], sizes = [16, 10], strides = [1, 1]} : vector<16x16xf32> to vector<16x10xf32>
    %cst_111 = arith.constant 0.036632847 : f32
    %559 = vector.broadcast %cst_111 : f32 to vector<16x10xf32>
    %560 = arith.mulf %559, %557 : vector<16x10xf32>
    %cst_112 = arith.constant 0.036632847 : f32
    %561 = vector.broadcast %cst_112 : f32 to vector<16x10xf32>
    %562 = arith.mulf %561, %558 : vector<16x10xf32>
    %563 = arith.addf %549, %560 : vector<16x10xf32>
    %564 = arith.addf %550, %562 : vector<16x10xf32>
    %565 = arith.mulf %560, %557 : vector<16x10xf32>
    %566 = arith.addf %552, %565 : vector<16x10xf32>
    %567 = arith.mulf %562, %558 : vector<16x10xf32>
    %568 = arith.addf %554, %567 : vector<16x10xf32>
    %569 = arith.mulf %560, %558 : vector<16x10xf32>
    %570 = arith.addf %556, %569 : vector<16x10xf32>
    %571 = vector.extract_strided_slice %563 {offsets = [3, 0], sizes = [10, 10], strides = [1, 1]} : vector<16x10xf32> to vector<10x10xf32>
    %cst_113 = arith.constant 0.270682156 : f32
    %572 = vector.broadcast %cst_113 : f32 to vector<10x10xf32>
    %573 = arith.mulf %572, %571 : vector<10x10xf32>
    %574 = vector.extract_strided_slice %563 {offsets = [0, 0], sizes = [10, 10], strides = [1, 1]} : vector<16x10xf32> to vector<10x10xf32>
    %575 = vector.extract_strided_slice %563 {offsets = [6, 0], sizes = [10, 10], strides = [1, 1]} : vector<16x10xf32> to vector<10x10xf32>
    %576 = arith.addf %574, %575 : vector<10x10xf32>
    %cst_114 = arith.constant 0.036632847 : f32
    %577 = vector.broadcast %cst_114 : f32 to vector<10x10xf32>
    %578 = arith.mulf %577, %576 : vector<10x10xf32>
    %579 = arith.addf %573, %578 : vector<10x10xf32>
    %580 = vector.extract_strided_slice %563 {offsets = [1, 0], sizes = [10, 10], strides = [1, 1]} : vector<16x10xf32> to vector<10x10xf32>
    %581 = vector.extract_strided_slice %563 {offsets = [5, 0], sizes = [10, 10], strides = [1, 1]} : vector<16x10xf32> to vector<10x10xf32>
    %582 = arith.addf %580, %581 : vector<10x10xf32>
    %cst_115 = arith.constant 0.111280762 : f32
    %583 = vector.broadcast %cst_115 : f32 to vector<10x10xf32>
    %584 = arith.mulf %583, %582 : vector<10x10xf32>
    %585 = arith.addf %579, %584 : vector<10x10xf32>
    %586 = vector.extract_strided_slice %563 {offsets = [2, 0], sizes = [10, 10], strides = [1, 1]} : vector<16x10xf32> to vector<10x10xf32>
    %587 = vector.extract_strided_slice %563 {offsets = [4, 0], sizes = [10, 10], strides = [1, 1]} : vector<16x10xf32> to vector<10x10xf32>
    %588 = arith.addf %586, %587 : vector<10x10xf32>
    %cst_116 = arith.constant 0.216745317 : f32
    %589 = vector.broadcast %cst_116 : f32 to vector<10x10xf32>
    %590 = arith.mulf %589, %588 : vector<10x10xf32>
    %591 = arith.addf %585, %590 : vector<10x10xf32>
    %592 = vector.extract_strided_slice %564 {offsets = [3, 0], sizes = [10, 10], strides = [1, 1]} : vector<16x10xf32> to vector<10x10xf32>
    %cst_117 = arith.constant 0.270682156 : f32
    %593 = vector.broadcast %cst_117 : f32 to vector<10x10xf32>
    %594 = arith.mulf %593, %592 : vector<10x10xf32>
    %595 = vector.extract_strided_slice %564 {offsets = [0, 0], sizes = [10, 10], strides = [1, 1]} : vector<16x10xf32> to vector<10x10xf32>
    %596 = vector.extract_strided_slice %564 {offsets = [6, 0], sizes = [10, 10], strides = [1, 1]} : vector<16x10xf32> to vector<10x10xf32>
    %597 = arith.addf %595, %596 : vector<10x10xf32>
    %cst_118 = arith.constant 0.036632847 : f32
    %598 = vector.broadcast %cst_118 : f32 to vector<10x10xf32>
    %599 = arith.mulf %598, %597 : vector<10x10xf32>
    %600 = arith.addf %594, %599 : vector<10x10xf32>
    %601 = vector.extract_strided_slice %564 {offsets = [1, 0], sizes = [10, 10], strides = [1, 1]} : vector<16x10xf32> to vector<10x10xf32>
    %602 = vector.extract_strided_slice %564 {offsets = [5, 0], sizes = [10, 10], strides = [1, 1]} : vector<16x10xf32> to vector<10x10xf32>
    %603 = arith.addf %601, %602 : vector<10x10xf32>
    %cst_119 = arith.constant 0.111280762 : f32
    %604 = vector.broadcast %cst_119 : f32 to vector<10x10xf32>
    %605 = arith.mulf %604, %603 : vector<10x10xf32>
    %606 = arith.addf %600, %605 : vector<10x10xf32>
    %607 = vector.extract_strided_slice %564 {offsets = [2, 0], sizes = [10, 10], strides = [1, 1]} : vector<16x10xf32> to vector<10x10xf32>
    %608 = vector.extract_strided_slice %564 {offsets = [4, 0], sizes = [10, 10], strides = [1, 1]} : vector<16x10xf32> to vector<10x10xf32>
    %609 = arith.addf %607, %608 : vector<10x10xf32>
    %cst_120 = arith.constant 0.216745317 : f32
    %610 = vector.broadcast %cst_120 : f32 to vector<10x10xf32>
    %611 = arith.mulf %610, %609 : vector<10x10xf32>
    %612 = arith.addf %606, %611 : vector<10x10xf32>
    %613 = vector.extract_strided_slice %566 {offsets = [3, 0], sizes = [10, 10], strides = [1, 1]} : vector<16x10xf32> to vector<10x10xf32>
    %cst_121 = arith.constant 0.270682156 : f32
    %614 = vector.broadcast %cst_121 : f32 to vector<10x10xf32>
    %615 = arith.mulf %614, %613 : vector<10x10xf32>
    %616 = vector.extract_strided_slice %566 {offsets = [0, 0], sizes = [10, 10], strides = [1, 1]} : vector<16x10xf32> to vector<10x10xf32>
    %617 = vector.extract_strided_slice %566 {offsets = [6, 0], sizes = [10, 10], strides = [1, 1]} : vector<16x10xf32> to vector<10x10xf32>
    %618 = arith.addf %616, %617 : vector<10x10xf32>
    %cst_122 = arith.constant 0.036632847 : f32
    %619 = vector.broadcast %cst_122 : f32 to vector<10x10xf32>
    %620 = arith.mulf %619, %618 : vector<10x10xf32>
    %621 = arith.addf %615, %620 : vector<10x10xf32>
    %622 = vector.extract_strided_slice %566 {offsets = [1, 0], sizes = [10, 10], strides = [1, 1]} : vector<16x10xf32> to vector<10x10xf32>
    %623 = vector.extract_strided_slice %566 {offsets = [5, 0], sizes = [10, 10], strides = [1, 1]} : vector<16x10xf32> to vector<10x10xf32>
    %624 = arith.addf %622, %623 : vector<10x10xf32>
    %cst_123 = arith.constant 0.111280762 : f32
    %625 = vector.broadcast %cst_123 : f32 to vector<10x10xf32>
    %626 = arith.mulf %625, %624 : vector<10x10xf32>
    %627 = arith.addf %621, %626 : vector<10x10xf32>
    %628 = vector.extract_strided_slice %566 {offsets = [2, 0], sizes = [10, 10], strides = [1, 1]} : vector<16x10xf32> to vector<10x10xf32>
    %629 = vector.extract_strided_slice %566 {offsets = [4, 0], sizes = [10, 10], strides = [1, 1]} : vector<16x10xf32> to vector<10x10xf32>
    %630 = arith.addf %628, %629 : vector<10x10xf32>
    %cst_124 = arith.constant 0.216745317 : f32
    %631 = vector.broadcast %cst_124 : f32 to vector<10x10xf32>
    %632 = arith.mulf %631, %630 : vector<10x10xf32>
    %633 = arith.addf %627, %632 : vector<10x10xf32>
    %634 = vector.extract_strided_slice %568 {offsets = [3, 0], sizes = [10, 10], strides = [1, 1]} : vector<16x10xf32> to vector<10x10xf32>
    %cst_125 = arith.constant 0.270682156 : f32
    %635 = vector.broadcast %cst_125 : f32 to vector<10x10xf32>
    %636 = arith.mulf %635, %634 : vector<10x10xf32>
    %637 = vector.extract_strided_slice %568 {offsets = [0, 0], sizes = [10, 10], strides = [1, 1]} : vector<16x10xf32> to vector<10x10xf32>
    %638 = vector.extract_strided_slice %568 {offsets = [6, 0], sizes = [10, 10], strides = [1, 1]} : vector<16x10xf32> to vector<10x10xf32>
    %639 = arith.addf %637, %638 : vector<10x10xf32>
    %cst_126 = arith.constant 0.036632847 : f32
    %640 = vector.broadcast %cst_126 : f32 to vector<10x10xf32>
    %641 = arith.mulf %640, %639 : vector<10x10xf32>
    %642 = arith.addf %636, %641 : vector<10x10xf32>
    %643 = vector.extract_strided_slice %568 {offsets = [1, 0], sizes = [10, 10], strides = [1, 1]} : vector<16x10xf32> to vector<10x10xf32>
    %644 = vector.extract_strided_slice %568 {offsets = [5, 0], sizes = [10, 10], strides = [1, 1]} : vector<16x10xf32> to vector<10x10xf32>
    %645 = arith.addf %643, %644 : vector<10x10xf32>
    %cst_127 = arith.constant 0.111280762 : f32
    %646 = vector.broadcast %cst_127 : f32 to vector<10x10xf32>
    %647 = arith.mulf %646, %645 : vector<10x10xf32>
    %648 = arith.addf %642, %647 : vector<10x10xf32>
    %649 = vector.extract_strided_slice %568 {offsets = [2, 0], sizes = [10, 10], strides = [1, 1]} : vector<16x10xf32> to vector<10x10xf32>
    %650 = vector.extract_strided_slice %568 {offsets = [4, 0], sizes = [10, 10], strides = [1, 1]} : vector<16x10xf32> to vector<10x10xf32>
    %651 = arith.addf %649, %650 : vector<10x10xf32>
    %cst_128 = arith.constant 0.216745317 : f32
    %652 = vector.broadcast %cst_128 : f32 to vector<10x10xf32>
    %653 = arith.mulf %652, %651 : vector<10x10xf32>
    %654 = arith.addf %648, %653 : vector<10x10xf32>
    %655 = vector.extract_strided_slice %570 {offsets = [3, 0], sizes = [10, 10], strides = [1, 1]} : vector<16x10xf32> to vector<10x10xf32>
    %cst_129 = arith.constant 0.270682156 : f32
    %656 = vector.broadcast %cst_129 : f32 to vector<10x10xf32>
    %657 = arith.mulf %656, %655 : vector<10x10xf32>
    %658 = vector.extract_strided_slice %570 {offsets = [0, 0], sizes = [10, 10], strides = [1, 1]} : vector<16x10xf32> to vector<10x10xf32>
    %659 = vector.extract_strided_slice %570 {offsets = [6, 0], sizes = [10, 10], strides = [1, 1]} : vector<16x10xf32> to vector<10x10xf32>
    %660 = arith.addf %658, %659 : vector<10x10xf32>
    %cst_130 = arith.constant 0.036632847 : f32
    %661 = vector.broadcast %cst_130 : f32 to vector<10x10xf32>
    %662 = arith.mulf %661, %660 : vector<10x10xf32>
    %663 = arith.addf %657, %662 : vector<10x10xf32>
    %664 = vector.extract_strided_slice %570 {offsets = [1, 0], sizes = [10, 10], strides = [1, 1]} : vector<16x10xf32> to vector<10x10xf32>
    %665 = vector.extract_strided_slice %570 {offsets = [5, 0], sizes = [10, 10], strides = [1, 1]} : vector<16x10xf32> to vector<10x10xf32>
    %666 = arith.addf %664, %665 : vector<10x10xf32>
    %cst_131 = arith.constant 0.111280762 : f32
    %667 = vector.broadcast %cst_131 : f32 to vector<10x10xf32>
    %668 = arith.mulf %667, %666 : vector<10x10xf32>
    %669 = arith.addf %663, %668 : vector<10x10xf32>
    %670 = vector.extract_strided_slice %570 {offsets = [2, 0], sizes = [10, 10], strides = [1, 1]} : vector<16x10xf32> to vector<10x10xf32>
    %671 = vector.extract_strided_slice %570 {offsets = [4, 0], sizes = [10, 10], strides = [1, 1]} : vector<16x10xf32> to vector<10x10xf32>
    %672 = arith.addf %670, %671 : vector<10x10xf32>
    %cst_132 = arith.constant 0.216745317 : f32
    %673 = vector.broadcast %cst_132 : f32 to vector<10x10xf32>
    %674 = arith.mulf %673, %672 : vector<10x10xf32>
    %675 = arith.addf %669, %674 : vector<10x10xf32>
    %676 = arith.mulf %591, %591 : vector<10x10xf32>
    %677 = arith.mulf %612, %612 : vector<10x10xf32>
    %678 = arith.mulf %591, %612 : vector<10x10xf32>
    %679 = arith.subf %633, %676 : vector<10x10xf32>
    %680 = arith.subf %654, %677 : vector<10x10xf32>
    %681 = arith.subf %675, %678 : vector<10x10xf32>
    %cst_133 = arith.constant 2.000000e+00 : f32
    %682 = vector.broadcast %cst_133 : f32 to vector<10x10xf32>
    %683 = arith.mulf %682, %681 : vector<10x10xf32>
    %684 = vector.broadcast %3 : f32 to vector<10x10xf32>
    %685 = arith.addf %683, %684 : vector<10x10xf32>
    %686 = arith.addf %679, %680 : vector<10x10xf32>
    %687 = vector.broadcast %3 : f32 to vector<10x10xf32>
    %688 = arith.addf %686, %687 : vector<10x10xf32>
    %cst_134 = arith.constant 2.000000e+00 : f32
    %689 = vector.broadcast %cst_134 : f32 to vector<10x10xf32>
    %690 = arith.mulf %689, %678 : vector<10x10xf32>
    %691 = vector.broadcast %1 : f32 to vector<10x10xf32>
    %692 = arith.addf %690, %691 : vector<10x10xf32>
    %693 = arith.mulf %692, %685 : vector<10x10xf32>
    %694 = arith.addf %676, %677 : vector<10x10xf32>
    %695 = vector.broadcast %1 : f32 to vector<10x10xf32>
    %696 = arith.addf %694, %695 : vector<10x10xf32>
    %697 = arith.mulf %696, %688 : vector<10x10xf32>
    %698 = tpu.reciprocal %697 {approx = true} : vector<10x10xf32> -> vector<10x10xf32>
    %699 = arith.mulf %697, %698 : vector<10x10xf32>
    %cst_135 = arith.constant 2.000000e+00 : f32
    %700 = vector.broadcast %cst_135 : f32 to vector<10x10xf32>
    %701 = arith.subf %700, %699 : vector<10x10xf32>
    %702 = arith.mulf %698, %701 : vector<10x10xf32>
    %703 = arith.mulf %693, %702 : vector<10x10xf32>
    %704 = vector.shape_cast %703 : vector<10x10xf32> to vector<1x10x10xf32>
    %cst_136 = arith.constant dense<0.000000e+00> : vector<1xf32>
    %705 = vector.multi_reduction <add>, %704, %cst_136 [1, 2] : vector<1x10x10xf32> to vector<1xf32>
    %706 = vector.shape_cast %705 : vector<1xf32> to vector<1x1x1xf32>
    %707 = vector.extract %706[0, 0, 0] : f32 from vector<1x1x1xf32>
    %708 = arith.addf %473, %707 : f32
    %c0_137 = arith.constant 0 : index
    %c3 = arith.constant 3 : index
    %c0_138 = arith.constant 0 : index
    %c0_139 = arith.constant 0 : index
    %709 = vector.load %arg3[%c0_137, %c3, %c0_138, %c0_139] : memref<1x4x16x16xf32, #tpu.memory_space<vmem>>, vector<1x1x16x16xf32>
    %710 = vector.shape_cast %709 : vector<1x1x16x16xf32> to vector<16x16xf32>
    %c0_140 = arith.constant 0 : index
    %c3_141 = arith.constant 3 : index
    %c0_142 = arith.constant 0 : index
    %c0_143 = arith.constant 0 : index
    %711 = vector.load %arg4[%c0_140, %c3_141, %c0_142, %c0_143] : memref<1x4x16x16xf32, #tpu.memory_space<vmem>>, vector<1x1x16x16xf32>
    %712 = vector.shape_cast %711 : vector<1x1x16x16xf32> to vector<16x16xf32>
    %713 = vector.extract_strided_slice %710 {offsets = [0, 0], sizes = [16, 10], strides = [1, 1]} : vector<16x16xf32> to vector<16x10xf32>
    %714 = vector.extract_strided_slice %712 {offsets = [0, 0], sizes = [16, 10], strides = [1, 1]} : vector<16x16xf32> to vector<16x10xf32>
    %cst_144 = arith.constant 0.036632847 : f32
    %715 = vector.broadcast %cst_144 : f32 to vector<16x10xf32>
    %716 = arith.mulf %715, %713 : vector<16x10xf32>
    %cst_145 = arith.constant 0.036632847 : f32
    %717 = vector.broadcast %cst_145 : f32 to vector<16x10xf32>
    %718 = arith.mulf %717, %714 : vector<16x10xf32>
    %719 = arith.mulf %716, %713 : vector<16x10xf32>
    %720 = arith.mulf %718, %714 : vector<16x10xf32>
    %721 = arith.mulf %716, %714 : vector<16x10xf32>
    %722 = vector.extract_strided_slice %710 {offsets = [0, 1], sizes = [16, 10], strides = [1, 1]} : vector<16x16xf32> to vector<16x10xf32>
    %723 = vector.extract_strided_slice %712 {offsets = [0, 1], sizes = [16, 10], strides = [1, 1]} : vector<16x16xf32> to vector<16x10xf32>
    %cst_146 = arith.constant 0.111280762 : f32
    %724 = vector.broadcast %cst_146 : f32 to vector<16x10xf32>
    %725 = arith.mulf %724, %722 : vector<16x10xf32>
    %cst_147 = arith.constant 0.111280762 : f32
    %726 = vector.broadcast %cst_147 : f32 to vector<16x10xf32>
    %727 = arith.mulf %726, %723 : vector<16x10xf32>
    %728 = arith.addf %716, %725 : vector<16x10xf32>
    %729 = arith.addf %718, %727 : vector<16x10xf32>
    %730 = arith.mulf %725, %722 : vector<16x10xf32>
    %731 = arith.addf %719, %730 : vector<16x10xf32>
    %732 = arith.mulf %727, %723 : vector<16x10xf32>
    %733 = arith.addf %720, %732 : vector<16x10xf32>
    %734 = arith.mulf %725, %723 : vector<16x10xf32>
    %735 = arith.addf %721, %734 : vector<16x10xf32>
    %736 = vector.extract_strided_slice %710 {offsets = [0, 2], sizes = [16, 10], strides = [1, 1]} : vector<16x16xf32> to vector<16x10xf32>
    %737 = vector.extract_strided_slice %712 {offsets = [0, 2], sizes = [16, 10], strides = [1, 1]} : vector<16x16xf32> to vector<16x10xf32>
    %cst_148 = arith.constant 0.216745317 : f32
    %738 = vector.broadcast %cst_148 : f32 to vector<16x10xf32>
    %739 = arith.mulf %738, %736 : vector<16x10xf32>
    %cst_149 = arith.constant 0.216745317 : f32
    %740 = vector.broadcast %cst_149 : f32 to vector<16x10xf32>
    %741 = arith.mulf %740, %737 : vector<16x10xf32>
    %742 = arith.addf %728, %739 : vector<16x10xf32>
    %743 = arith.addf %729, %741 : vector<16x10xf32>
    %744 = arith.mulf %739, %736 : vector<16x10xf32>
    %745 = arith.addf %731, %744 : vector<16x10xf32>
    %746 = arith.mulf %741, %737 : vector<16x10xf32>
    %747 = arith.addf %733, %746 : vector<16x10xf32>
    %748 = arith.mulf %739, %737 : vector<16x10xf32>
    %749 = arith.addf %735, %748 : vector<16x10xf32>
    %750 = vector.extract_strided_slice %710 {offsets = [0, 3], sizes = [16, 10], strides = [1, 1]} : vector<16x16xf32> to vector<16x10xf32>
    %751 = vector.extract_strided_slice %712 {offsets = [0, 3], sizes = [16, 10], strides = [1, 1]} : vector<16x16xf32> to vector<16x10xf32>
    %cst_150 = arith.constant 0.270682156 : f32
    %752 = vector.broadcast %cst_150 : f32 to vector<16x10xf32>
    %753 = arith.mulf %752, %750 : vector<16x10xf32>
    %cst_151 = arith.constant 0.270682156 : f32
    %754 = vector.broadcast %cst_151 : f32 to vector<16x10xf32>
    %755 = arith.mulf %754, %751 : vector<16x10xf32>
    %756 = arith.addf %742, %753 : vector<16x10xf32>
    %757 = arith.addf %743, %755 : vector<16x10xf32>
    %758 = arith.mulf %753, %750 : vector<16x10xf32>
    %759 = arith.addf %745, %758 : vector<16x10xf32>
    %760 = arith.mulf %755, %751 : vector<16x10xf32>
    %761 = arith.addf %747, %760 : vector<16x10xf32>
    %762 = arith.mulf %753, %751 : vector<16x10xf32>
    %763 = arith.addf %749, %762 : vector<16x10xf32>
    %764 = vector.extract_strided_slice %710 {offsets = [0, 4], sizes = [16, 10], strides = [1, 1]} : vector<16x16xf32> to vector<16x10xf32>
    %765 = vector.extract_strided_slice %712 {offsets = [0, 4], sizes = [16, 10], strides = [1, 1]} : vector<16x16xf32> to vector<16x10xf32>
    %cst_152 = arith.constant 0.216745317 : f32
    %766 = vector.broadcast %cst_152 : f32 to vector<16x10xf32>
    %767 = arith.mulf %766, %764 : vector<16x10xf32>
    %cst_153 = arith.constant 0.216745317 : f32
    %768 = vector.broadcast %cst_153 : f32 to vector<16x10xf32>
    %769 = arith.mulf %768, %765 : vector<16x10xf32>
    %770 = arith.addf %756, %767 : vector<16x10xf32>
    %771 = arith.addf %757, %769 : vector<16x10xf32>
    %772 = arith.mulf %767, %764 : vector<16x10xf32>
    %773 = arith.addf %759, %772 : vector<16x10xf32>
    %774 = arith.mulf %769, %765 : vector<16x10xf32>
    %775 = arith.addf %761, %774 : vector<16x10xf32>
    %776 = arith.mulf %767, %765 : vector<16x10xf32>
    %777 = arith.addf %763, %776 : vector<16x10xf32>
    %778 = vector.extract_strided_slice %710 {offsets = [0, 5], sizes = [16, 10], strides = [1, 1]} : vector<16x16xf32> to vector<16x10xf32>
    %779 = vector.extract_strided_slice %712 {offsets = [0, 5], sizes = [16, 10], strides = [1, 1]} : vector<16x16xf32> to vector<16x10xf32>
    %cst_154 = arith.constant 0.111280762 : f32
    %780 = vector.broadcast %cst_154 : f32 to vector<16x10xf32>
    %781 = arith.mulf %780, %778 : vector<16x10xf32>
    %cst_155 = arith.constant 0.111280762 : f32
    %782 = vector.broadcast %cst_155 : f32 to vector<16x10xf32>
    %783 = arith.mulf %782, %779 : vector<16x10xf32>
    %784 = arith.addf %770, %781 : vector<16x10xf32>
    %785 = arith.addf %771, %783 : vector<16x10xf32>
    %786 = arith.mulf %781, %778 : vector<16x10xf32>
    %787 = arith.addf %773, %786 : vector<16x10xf32>
    %788 = arith.mulf %783, %779 : vector<16x10xf32>
    %789 = arith.addf %775, %788 : vector<16x10xf32>
    %790 = arith.mulf %781, %779 : vector<16x10xf32>
    %791 = arith.addf %777, %790 : vector<16x10xf32>
    %792 = vector.extract_strided_slice %710 {offsets = [0, 6], sizes = [16, 10], strides = [1, 1]} : vector<16x16xf32> to vector<16x10xf32>
    %793 = vector.extract_strided_slice %712 {offsets = [0, 6], sizes = [16, 10], strides = [1, 1]} : vector<16x16xf32> to vector<16x10xf32>
    %cst_156 = arith.constant 0.036632847 : f32
    %794 = vector.broadcast %cst_156 : f32 to vector<16x10xf32>
    %795 = arith.mulf %794, %792 : vector<16x10xf32>
    %cst_157 = arith.constant 0.036632847 : f32
    %796 = vector.broadcast %cst_157 : f32 to vector<16x10xf32>
    %797 = arith.mulf %796, %793 : vector<16x10xf32>
    %798 = arith.addf %784, %795 : vector<16x10xf32>
    %799 = arith.addf %785, %797 : vector<16x10xf32>
    %800 = arith.mulf %795, %792 : vector<16x10xf32>
    %801 = arith.addf %787, %800 : vector<16x10xf32>
    %802 = arith.mulf %797, %793 : vector<16x10xf32>
    %803 = arith.addf %789, %802 : vector<16x10xf32>
    %804 = arith.mulf %795, %793 : vector<16x10xf32>
    %805 = arith.addf %791, %804 : vector<16x10xf32>
    %806 = vector.extract_strided_slice %798 {offsets = [3, 0], sizes = [10, 10], strides = [1, 1]} : vector<16x10xf32> to vector<10x10xf32>
    %cst_158 = arith.constant 0.270682156 : f32
    %807 = vector.broadcast %cst_158 : f32 to vector<10x10xf32>
    %808 = arith.mulf %807, %806 : vector<10x10xf32>
    %809 = vector.extract_strided_slice %798 {offsets = [0, 0], sizes = [10, 10], strides = [1, 1]} : vector<16x10xf32> to vector<10x10xf32>
    %810 = vector.extract_strided_slice %798 {offsets = [6, 0], sizes = [10, 10], strides = [1, 1]} : vector<16x10xf32> to vector<10x10xf32>
    %811 = arith.addf %809, %810 : vector<10x10xf32>
    %cst_159 = arith.constant 0.036632847 : f32
    %812 = vector.broadcast %cst_159 : f32 to vector<10x10xf32>
    %813 = arith.mulf %812, %811 : vector<10x10xf32>
    %814 = arith.addf %808, %813 : vector<10x10xf32>
    %815 = vector.extract_strided_slice %798 {offsets = [1, 0], sizes = [10, 10], strides = [1, 1]} : vector<16x10xf32> to vector<10x10xf32>
    %816 = vector.extract_strided_slice %798 {offsets = [5, 0], sizes = [10, 10], strides = [1, 1]} : vector<16x10xf32> to vector<10x10xf32>
    %817 = arith.addf %815, %816 : vector<10x10xf32>
    %cst_160 = arith.constant 0.111280762 : f32
    %818 = vector.broadcast %cst_160 : f32 to vector<10x10xf32>
    %819 = arith.mulf %818, %817 : vector<10x10xf32>
    %820 = arith.addf %814, %819 : vector<10x10xf32>
    %821 = vector.extract_strided_slice %798 {offsets = [2, 0], sizes = [10, 10], strides = [1, 1]} : vector<16x10xf32> to vector<10x10xf32>
    %822 = vector.extract_strided_slice %798 {offsets = [4, 0], sizes = [10, 10], strides = [1, 1]} : vector<16x10xf32> to vector<10x10xf32>
    %823 = arith.addf %821, %822 : vector<10x10xf32>
    %cst_161 = arith.constant 0.216745317 : f32
    %824 = vector.broadcast %cst_161 : f32 to vector<10x10xf32>
    %825 = arith.mulf %824, %823 : vector<10x10xf32>
    %826 = arith.addf %820, %825 : vector<10x10xf32>
    %827 = vector.extract_strided_slice %799 {offsets = [3, 0], sizes = [10, 10], strides = [1, 1]} : vector<16x10xf32> to vector<10x10xf32>
    %cst_162 = arith.constant 0.270682156 : f32
    %828 = vector.broadcast %cst_162 : f32 to vector<10x10xf32>
    %829 = arith.mulf %828, %827 : vector<10x10xf32>
    %830 = vector.extract_strided_slice %799 {offsets = [0, 0], sizes = [10, 10], strides = [1, 1]} : vector<16x10xf32> to vector<10x10xf32>
    %831 = vector.extract_strided_slice %799 {offsets = [6, 0], sizes = [10, 10], strides = [1, 1]} : vector<16x10xf32> to vector<10x10xf32>
    %832 = arith.addf %830, %831 : vector<10x10xf32>
    %cst_163 = arith.constant 0.036632847 : f32
    %833 = vector.broadcast %cst_163 : f32 to vector<10x10xf32>
    %834 = arith.mulf %833, %832 : vector<10x10xf32>
    %835 = arith.addf %829, %834 : vector<10x10xf32>
    %836 = vector.extract_strided_slice %799 {offsets = [1, 0], sizes = [10, 10], strides = [1, 1]} : vector<16x10xf32> to vector<10x10xf32>
    %837 = vector.extract_strided_slice %799 {offsets = [5, 0], sizes = [10, 10], strides = [1, 1]} : vector<16x10xf32> to vector<10x10xf32>
    %838 = arith.addf %836, %837 : vector<10x10xf32>
    %cst_164 = arith.constant 0.111280762 : f32
    %839 = vector.broadcast %cst_164 : f32 to vector<10x10xf32>
    %840 = arith.mulf %839, %838 : vector<10x10xf32>
    %841 = arith.addf %835, %840 : vector<10x10xf32>
    %842 = vector.extract_strided_slice %799 {offsets = [2, 0], sizes = [10, 10], strides = [1, 1]} : vector<16x10xf32> to vector<10x10xf32>
    %843 = vector.extract_strided_slice %799 {offsets = [4, 0], sizes = [10, 10], strides = [1, 1]} : vector<16x10xf32> to vector<10x10xf32>
    %844 = arith.addf %842, %843 : vector<10x10xf32>
    %cst_165 = arith.constant 0.216745317 : f32
    %845 = vector.broadcast %cst_165 : f32 to vector<10x10xf32>
    %846 = arith.mulf %845, %844 : vector<10x10xf32>
    %847 = arith.addf %841, %846 : vector<10x10xf32>
    %848 = vector.extract_strided_slice %801 {offsets = [3, 0], sizes = [10, 10], strides = [1, 1]} : vector<16x10xf32> to vector<10x10xf32>
    %cst_166 = arith.constant 0.270682156 : f32
    %849 = vector.broadcast %cst_166 : f32 to vector<10x10xf32>
    %850 = arith.mulf %849, %848 : vector<10x10xf32>
    %851 = vector.extract_strided_slice %801 {offsets = [0, 0], sizes = [10, 10], strides = [1, 1]} : vector<16x10xf32> to vector<10x10xf32>
    %852 = vector.extract_strided_slice %801 {offsets = [6, 0], sizes = [10, 10], strides = [1, 1]} : vector<16x10xf32> to vector<10x10xf32>
    %853 = arith.addf %851, %852 : vector<10x10xf32>
    %cst_167 = arith.constant 0.036632847 : f32
    %854 = vector.broadcast %cst_167 : f32 to vector<10x10xf32>
    %855 = arith.mulf %854, %853 : vector<10x10xf32>
    %856 = arith.addf %850, %855 : vector<10x10xf32>
    %857 = vector.extract_strided_slice %801 {offsets = [1, 0], sizes = [10, 10], strides = [1, 1]} : vector<16x10xf32> to vector<10x10xf32>
    %858 = vector.extract_strided_slice %801 {offsets = [5, 0], sizes = [10, 10], strides = [1, 1]} : vector<16x10xf32> to vector<10x10xf32>
    %859 = arith.addf %857, %858 : vector<10x10xf32>
    %cst_168 = arith.constant 0.111280762 : f32
    %860 = vector.broadcast %cst_168 : f32 to vector<10x10xf32>
    %861 = arith.mulf %860, %859 : vector<10x10xf32>
    %862 = arith.addf %856, %861 : vector<10x10xf32>
    %863 = vector.extract_strided_slice %801 {offsets = [2, 0], sizes = [10, 10], strides = [1, 1]} : vector<16x10xf32> to vector<10x10xf32>
    %864 = vector.extract_strided_slice %801 {offsets = [4, 0], sizes = [10, 10], strides = [1, 1]} : vector<16x10xf32> to vector<10x10xf32>
    %865 = arith.addf %863, %864 : vector<10x10xf32>
    %cst_169 = arith.constant 0.216745317 : f32
    %866 = vector.broadcast %cst_169 : f32 to vector<10x10xf32>
    %867 = arith.mulf %866, %865 : vector<10x10xf32>
    %868 = arith.addf %862, %867 : vector<10x10xf32>
    %869 = vector.extract_strided_slice %803 {offsets = [3, 0], sizes = [10, 10], strides = [1, 1]} : vector<16x10xf32> to vector<10x10xf32>
    %cst_170 = arith.constant 0.270682156 : f32
    %870 = vector.broadcast %cst_170 : f32 to vector<10x10xf32>
    %871 = arith.mulf %870, %869 : vector<10x10xf32>
    %872 = vector.extract_strided_slice %803 {offsets = [0, 0], sizes = [10, 10], strides = [1, 1]} : vector<16x10xf32> to vector<10x10xf32>
    %873 = vector.extract_strided_slice %803 {offsets = [6, 0], sizes = [10, 10], strides = [1, 1]} : vector<16x10xf32> to vector<10x10xf32>
    %874 = arith.addf %872, %873 : vector<10x10xf32>
    %cst_171 = arith.constant 0.036632847 : f32
    %875 = vector.broadcast %cst_171 : f32 to vector<10x10xf32>
    %876 = arith.mulf %875, %874 : vector<10x10xf32>
    %877 = arith.addf %871, %876 : vector<10x10xf32>
    %878 = vector.extract_strided_slice %803 {offsets = [1, 0], sizes = [10, 10], strides = [1, 1]} : vector<16x10xf32> to vector<10x10xf32>
    %879 = vector.extract_strided_slice %803 {offsets = [5, 0], sizes = [10, 10], strides = [1, 1]} : vector<16x10xf32> to vector<10x10xf32>
    %880 = arith.addf %878, %879 : vector<10x10xf32>
    %cst_172 = arith.constant 0.111280762 : f32
    %881 = vector.broadcast %cst_172 : f32 to vector<10x10xf32>
    %882 = arith.mulf %881, %880 : vector<10x10xf32>
    %883 = arith.addf %877, %882 : vector<10x10xf32>
    %884 = vector.extract_strided_slice %803 {offsets = [2, 0], sizes = [10, 10], strides = [1, 1]} : vector<16x10xf32> to vector<10x10xf32>
    %885 = vector.extract_strided_slice %803 {offsets = [4, 0], sizes = [10, 10], strides = [1, 1]} : vector<16x10xf32> to vector<10x10xf32>
    %886 = arith.addf %884, %885 : vector<10x10xf32>
    %cst_173 = arith.constant 0.216745317 : f32
    %887 = vector.broadcast %cst_173 : f32 to vector<10x10xf32>
    %888 = arith.mulf %887, %886 : vector<10x10xf32>
    %889 = arith.addf %883, %888 : vector<10x10xf32>
    %890 = vector.extract_strided_slice %805 {offsets = [3, 0], sizes = [10, 10], strides = [1, 1]} : vector<16x10xf32> to vector<10x10xf32>
    %cst_174 = arith.constant 0.270682156 : f32
    %891 = vector.broadcast %cst_174 : f32 to vector<10x10xf32>
    %892 = arith.mulf %891, %890 : vector<10x10xf32>
    %893 = vector.extract_strided_slice %805 {offsets = [0, 0], sizes = [10, 10], strides = [1, 1]} : vector<16x10xf32> to vector<10x10xf32>
    %894 = vector.extract_strided_slice %805 {offsets = [6, 0], sizes = [10, 10], strides = [1, 1]} : vector<16x10xf32> to vector<10x10xf32>
    %895 = arith.addf %893, %894 : vector<10x10xf32>
    %cst_175 = arith.constant 0.036632847 : f32
    %896 = vector.broadcast %cst_175 : f32 to vector<10x10xf32>
    %897 = arith.mulf %896, %895 : vector<10x10xf32>
    %898 = arith.addf %892, %897 : vector<10x10xf32>
    %899 = vector.extract_strided_slice %805 {offsets = [1, 0], sizes = [10, 10], strides = [1, 1]} : vector<16x10xf32> to vector<10x10xf32>
    %900 = vector.extract_strided_slice %805 {offsets = [5, 0], sizes = [10, 10], strides = [1, 1]} : vector<16x10xf32> to vector<10x10xf32>
    %901 = arith.addf %899, %900 : vector<10x10xf32>
    %cst_176 = arith.constant 0.111280762 : f32
    %902 = vector.broadcast %cst_176 : f32 to vector<10x10xf32>
    %903 = arith.mulf %902, %901 : vector<10x10xf32>
    %904 = arith.addf %898, %903 : vector<10x10xf32>
    %905 = vector.extract_strided_slice %805 {offsets = [2, 0], sizes = [10, 10], strides = [1, 1]} : vector<16x10xf32> to vector<10x10xf32>
    %906 = vector.extract_strided_slice %805 {offsets = [4, 0], sizes = [10, 10], strides = [1, 1]} : vector<16x10xf32> to vector<10x10xf32>
    %907 = arith.addf %905, %906 : vector<10x10xf32>
    %cst_177 = arith.constant 0.216745317 : f32
    %908 = vector.broadcast %cst_177 : f32 to vector<10x10xf32>
    %909 = arith.mulf %908, %907 : vector<10x10xf32>
    %910 = arith.addf %904, %909 : vector<10x10xf32>
    %911 = arith.mulf %826, %826 : vector<10x10xf32>
    %912 = arith.mulf %847, %847 : vector<10x10xf32>
    %913 = arith.mulf %826, %847 : vector<10x10xf32>
    %914 = arith.subf %868, %911 : vector<10x10xf32>
    %915 = arith.subf %889, %912 : vector<10x10xf32>
    %916 = arith.subf %910, %913 : vector<10x10xf32>
    %cst_178 = arith.constant 2.000000e+00 : f32
    %917 = vector.broadcast %cst_178 : f32 to vector<10x10xf32>
    %918 = arith.mulf %917, %916 : vector<10x10xf32>
    %919 = vector.broadcast %3 : f32 to vector<10x10xf32>
    %920 = arith.addf %918, %919 : vector<10x10xf32>
    %921 = arith.addf %914, %915 : vector<10x10xf32>
    %922 = vector.broadcast %3 : f32 to vector<10x10xf32>
    %923 = arith.addf %921, %922 : vector<10x10xf32>
    %cst_179 = arith.constant 2.000000e+00 : f32
    %924 = vector.broadcast %cst_179 : f32 to vector<10x10xf32>
    %925 = arith.mulf %924, %913 : vector<10x10xf32>
    %926 = vector.broadcast %1 : f32 to vector<10x10xf32>
    %927 = arith.addf %925, %926 : vector<10x10xf32>
    %928 = arith.mulf %927, %920 : vector<10x10xf32>
    %929 = arith.addf %911, %912 : vector<10x10xf32>
    %930 = vector.broadcast %1 : f32 to vector<10x10xf32>
    %931 = arith.addf %929, %930 : vector<10x10xf32>
    %932 = arith.mulf %931, %923 : vector<10x10xf32>
    %933 = tpu.reciprocal %932 {approx = true} : vector<10x10xf32> -> vector<10x10xf32>
    %934 = arith.mulf %932, %933 : vector<10x10xf32>
    %cst_180 = arith.constant 2.000000e+00 : f32
    %935 = vector.broadcast %cst_180 : f32 to vector<10x10xf32>
    %936 = arith.subf %935, %934 : vector<10x10xf32>
    %937 = arith.mulf %933, %936 : vector<10x10xf32>
    %938 = arith.mulf %928, %937 : vector<10x10xf32>
    %939 = vector.shape_cast %938 : vector<10x10xf32> to vector<1x10x10xf32>
    %cst_181 = arith.constant dense<0.000000e+00> : vector<1xf32>
    %940 = vector.multi_reduction <add>, %939, %cst_181 [1, 2] : vector<1x10x10xf32> to vector<1xf32>
    %941 = vector.shape_cast %940 : vector<1xf32> to vector<1x1x1xf32>
    %942 = vector.extract %941[0, 0, 0] : f32 from vector<1x1x1xf32>
    %943 = arith.addf %708, %942 : f32
    %c0_i32 = arith.constant 0 : i32
    %944 = arith.cmpi eq, %arg1, %c0_i32 : i32
    %945 = arith.extui %944 : i1 to i32
    %c0_i32_182 = arith.constant 0 : i32
    %946 = arith.cmpi ne, %945, %c0_i32_182 : i32
    scf.if %946 {
      %cst_189 = arith.constant 0.000000e+00 : f32
      %954 = vector.broadcast %cst_189 : f32 to vector<1x1xf32>
      %c0_190 = arith.constant 0 : index
      %c0_191 = arith.constant 0 : index
      %c0_192 = arith.constant 0 : index
      %955 = vector.load %arg5[%c0_190, %c0_191, %c0_192] : memref<1x1x1xf32, #tpu.memory_space<vmem>>, vector<1x1x1xf32>
      %956 = vector.shape_cast %955 : vector<1x1x1xf32> to vector<1x1xf32>
      %957 = vector.shape_cast %954 : vector<1x1xf32> to vector<1x1x1xf32>
      tpu.vector_store %arg5[%c0_190, %c0_191, %c0_192], %957 {strides = array<i32>} : memref<1x1x1xf32, #tpu.memory_space<vmem>>, vector<1x1x1xf32>,
    } else {
    }
    %c0_183 = arith.constant 0 : index
    %c0_184 = arith.constant 0 : index
    %c0_185 = arith.constant 0 : index
    %947 = vector.load %arg5[%c0_183, %c0_184, %c0_185] : memref<1x1x1xf32, #tpu.memory_space<vmem>>, vector<1x1x1xf32>
    %948 = vector.shape_cast %947 : vector<1x1x1xf32> to vector<1x1xf32>
    %949 = vector.broadcast %943 : f32 to vector<1x1xf32>
    %950 = arith.addf %948, %949 : vector<1x1xf32>
    %c0_186 = arith.constant 0 : index
    %c0_187 = arith.constant 0 : index
    %c0_188 = arith.constant 0 : index
    %951 = vector.load %arg5[%c0_186, %c0_187, %c0_188] : memref<1x1x1xf32, #tpu.memory_space<vmem>>, vector<1x1x1xf32>
    %952 = vector.shape_cast %951 : vector<1x1x1xf32> to vector<1x1xf32>
    %953 = vector.shape_cast %950 : vector<1x1xf32> to vector<1x1x1xf32>
    tpu.vector_store %arg5[%c0_186, %c0_187, %c0_188], %953 {strides = array<i32>} : memref<1x1x1xf32, #tpu.memory_space<vmem>>, vector<1x1x1xf32>,
    return
  }
  func.func @transform_0(%arg0: i32, %arg1: i32) -> (i32, i32) {
    %c0_i32 = arith.constant 0 : i32
    %c0_i32_0 = arith.constant 0 : i32
    %c0_i32_1 = arith.constant 0 : i32
    return %c0_i32, %c0_i32_0 : i32, i32
  }
  func.func @transform_1(%arg0: i32, %arg1: i32) -> (i32, i32, i32, i32) {
    %c0_i32 = arith.constant 0 : i32
    %c0_i32_0 = arith.constant 0 : i32
    %c0_i32_1 = arith.constant 0 : i32
    return %arg0, %arg1, %c0_i32, %c0_i32_0 : i32, i32, i32, i32
  }
  func.func @transform_2(%arg0: i32, %arg1: i32) -> (i32, i32, i32, i32) {
    %c0_i32 = arith.constant 0 : i32
    %c0_i32_0 = arith.constant 0 : i32
    %c0_i32_1 = arith.constant 0 : i32
    return %arg0, %arg1, %c0_i32, %c0_i32_0 : i32, i32, i32, i32
  }
  func.func @transform_3(%arg0: i32, %arg1: i32) -> (i32, i32, i32) {
    %c0_i32 = arith.constant 0 : i32
    %c0_i32_0 = arith.constant 0 : i32
    %c0_i32_1 = arith.constant 0 : i32
    return %arg0, %c0_i32, %c0_i32_0 : i32, i32, i32
  }
}

</mosaic_0001>

<llo_original>
// kernel: tpu_custom_call.1
$region0: #{tpu_custom_call.1}
  #allocation0 [shape = 'u32[]', space=smem, size = 0x4, offset = 0x4, fixed_abs, tag = 'smem constant byte address 0x4 - core index']
  #allocation1 [shape = 'u32[72,128]{1,0:T(1,128)}', space=vmem, size = 0x9000, scoped, tag = 'internal scratch']
  %s0 = inlined_call_operand.hbm [shape: f32[2,2], index: 0, kind: input, shape index: {}]
  %s1 = inlined_call_operand.hbm [shape: f32[2,4,16,16], index: 1, kind: input, shape index: {}]
  %s2 = inlined_call_operand.hbm [shape: f32[2,4,16,16], index: 2, kind: input, shape index: {}]
  %s3 = inlined_call_operand.vmem [shape: f32[2,1,1], index: 3, kind: output, shape index: {}]
  %s4 = sld [smem:[#allocation0]]
  $region61: #{tpu_custom_call.1} parent=0
    _
  %s6 = ssub.s32 1, %s4
  %s7 = scalar_select 0, %s6, %s4
  $region1: #{tpu_custom_call.1} parent=0
    #allocation2 [shape = 'u8[1024]{0}', space=smem, size = 0x400, scoped, tag = 'input window, operand 0, single buffered']
    #allocation3 [shape = 's32[2]{0}', space=sflag, size = 0x8, scoped, tag = 'scoped memory for tpu_custom_call.1']
    #allocation4 [shape = 's32[2]{0}', space=sflag, size = 0x8, scoped, tag = 'scoped memory for tpu_custom_call.1']
    #allocation5 [shape = 'u8[65536]{0}', space=vmem, size = 0x10000, scoped, tag = 'input window, operand 1']
    #allocation6 [shape = 'u8[65536]{0}', space=vmem, size = 0x10000, scoped, tag = 'input window, operand 2']
    #allocation7 [shape = 's32[2]{0}', space=sflag, size = 0x8, scoped, tag = 'scoped memory for tpu_custom_call.1']
    %8 = vsyncpa [#allocation4], 0
    %9 = vsyncpa [#allocation3], 0
    %s10 = scalar_lea.sflag [#allocation3], 1
    %11 = vsyncpa %s10, 0
    %12 = vsyncpa [#allocation7], 0
    %s13 = scalar_lea.sflag [#allocation7], 1
    %14 = vsyncpa %s13, 0
    loop: start=0, step=1, limit=4
    $region2: #{tpu_custom_call.1} parent=1 // loop_pre_header
      _
    $region3: #{tpu_custom_call.1} parent=1 // loop_header
      %s16 = sphi 0, %s20
      %p17 = scmp.ge.s32.totalorder %s16, 4
      %s23 = sphi 0, %s35
      %s24 = sphi 0, %s31
      %s25 = sphi 0, %s23
      %s26 = sphi 0, %s24
      %s27 = sphi 0, %s25
      %s28 = sphi 0, %s26
      %s36 = sphi 0, %s36
      %s38 = sphi 0, %s36
      %s39 = sphi 0, %s38
      %s53 = sphi 0, %s39
      %s61 = sphi 0, %s63
      %s64 = sphi 0, %s61
      %s65 = sphi 0, %s64
      %s81 = sphi 0, %s65
      %s89 = sphi 0, %s91
      %s92 = sphi 0, %s89
      %s93 = sphi 0, %s92
      %s109 = sphi 0, %s93
      %s115 = sphi 0, %s117
      %s118 = sphi 0, %s115
      %s119 = sphi 0, %s118
      %s135 = sphi 0, %s119
    $region4: #{tpu_custom_call.1} parent=1 // loop_header_branch
      %19 = sbr.rel (%p17) target = $region8
    $region5: #{tpu_custom_call.1} parent=1 // loop_body
      %s21 = ssub.s32 %s16, 1
      %s22 = ssub.s32 %s16, 2
      %s29 = sadd.s32 1, %s24
      %p30 = scmp.ge.s32.totalorder %s29, 1
      %s31 = scalar_select %p30, 0, %s29
      %s32 = sadd.s32 1, %s23
      %s33 = scalar_select %p30, %s32, %s23
      %p34 = scmp.ge.s32.totalorder %s33, 2
      %s35 = scalar_select %p34, 0, %s33
      %s37 = sadd.s32 %s36, 1
      %p40 = scmp.eq.s32.totalorder %s16, 1
      %p41 = scmp.ne.s32.totalorder %s36, %s38
      %p42 = scmp.eq.s32.totalorder %s16, 0
      %p43 = por %p41, %p42
      %p44 = scmp.ne.s32.totalorder %s36, %s38
      %p45 = scmp.eq.s32.totalorder %s21, 1
      %p46 = por %p44, %p45
      %p47 = scmp.ne.s32.totalorder %s38, %s39
      %p48 = scmp.eq.s32.totalorder %s21, 0
      %p49 = por %p47, %p48
      %p50 = scmp.ne.s32.totalorder %s38, %s39
      %p51 = scmp.eq.s32.totalorder %s22, 1
      %p52 = por %p50, %p51
      %p54 = scmp.ne.s32.totalorder %s39, %s53
      %p55 = scmp.eq.s32.totalorder %s22, 0
      %p56 = por %p54, %p55
      %s57 = ssub.s32 %s23, %s35
      %s58 = ssub.s32 %s24, %s31
      %s59 = sor.u32 %s57, %s58
      %p60 = scmp.eq.s32.totalorder %s59, 0
      %s62 = sadd.s32 %s61, 1
      %s63 = scalar_select %p60, %s61, %s62
      %p66 = pneg %p60
      %p67 = scmp.eq.s32.totalorder %s16, 1
      %p68 = por %p66, %p67
      %p69 = scmp.ne.s32.totalorder %s61, %s64
      %p70 = scmp.eq.s32.totalorder %s16, 0
      %p71 = por %p69, %p70
      %p72 = scmp.ne.s32.totalorder %s61, %s64
      %p73 = scmp.eq.s32.totalorder %s21, 1
      %p74 = por %p72, %p73
      %p75 = scmp.ne.s32.totalorder %s64, %s65
      %p76 = scmp.eq.s32.totalorder %s21, 0
      %p77 = por %p75, %p76
      %p78 = scmp.ne.s32.totalorder %s64, %s65
      %p79 = scmp.eq.s32.totalorder %s22, 1
      %p80 = por %p78, %p79
      %p82 = scmp.ne.s32.totalorder %s65, %s81
      %p83 = scmp.eq.s32.totalorder %s22, 0
      %p84 = por %p82, %p83
      %s85 = ssub.s32 %s23, %s35
      %s86 = ssub.s32 %s24, %s31
      %s87 = sor.u32 %s85, %s86
      %p88 = scmp.eq.s32.totalorder %s87, 0
      %s90 = sadd.s32 %s89, 1
      %s91 = scalar_select %p88, %s89, %s90
      %p94 = pneg %p88
      %p95 = scmp.eq.s32.totalorder %s16, 1
      %p96 = por %p94, %p95
      %p97 = scmp.ne.s32.totalorder %s89, %s92
      %p98 = scmp.eq.s32.totalorder %s16, 0
      %p99 = por %p97, %p98
      %p100 = scmp.ne.s32.totalorder %s89, %s92
      %p101 = scmp.eq.s32.totalorder %s21, 1
      %p102 = por %p100, %p101
      %p103 = scmp.ne.s32.totalorder %s92, %s93
      %p104 = scmp.eq.s32.totalorder %s21, 0
      %p105 = por %p103, %p104
      %p106 = scmp.ne.s32.totalorder %s92, %s93
      %p107 = scmp.eq.s32.totalorder %s22, 1
      %p108 = por %p106, %p107
      %p110 = scmp.ne.s32.totalorder %s93, %s109
      %p111 = scmp.eq.s32.totalorder %s22, 0
      %p112 = por %p110, %p111
      %s113 = ssub.s32 %s23, %s35
      %p114 = scmp.eq.s32.totalorder %s113, 0
      %s116 = sadd.s32 %s115, 1
      %s117 = scalar_select %p114, %s115, %s116
      %p120 = pneg %p114
      %p121 = scmp.eq.s32.totalorder %s16, 1
      %p122 = por %p120, %p121
      %p123 = scmp.ne.s32.totalorder %s115, %s118
      %p124 = scmp.eq.s32.totalorder %s16, 0
      %p125 = por %p123, %p124
      %p126 = scmp.ne.s32.totalorder %s115, %s118
      %p127 = scmp.eq.s32.totalorder %s21, 1
      %p128 = por %p126, %p127
      %p129 = scmp.ne.s32.totalorder %s118, %s119
      %p130 = scmp.eq.s32.totalorder %s21, 0
      %p131 = por %p129, %p130
      %p132 = scmp.ne.s32.totalorder %s118, %s119
      %p133 = scmp.eq.s32.totalorder %s22, 1
      %p134 = por %p132, %p133
      %p136 = scmp.ne.s32.totalorder %s119, %s135
      %p137 = scmp.eq.s32.totalorder %s22, 0
      %p138 = por %p136, %p137
      %p139 = scmp.le.s32.totalorder 1, %s16
      %p140 = scmp.lt.s32.totalorder %s16, 3
      %p141 = pnand %p139, %p140
      %p142 = pneg %p141
      // Predicated region
      $region9: #{tpu_custom_call.1} parent=5 // pred_check
        _
      $region10: #{tpu_custom_call.1} parent=5 // pred_check_branch
        %144 = sbr.rel (%p141) target = $region12
      $region11: #{tpu_custom_call.1} parent=5 // pred_region
        %s145 = ssub.s32 %s16, 1
        // Predicated region
        $region13: #{tpu_custom_call.1} parent=11 // pred_check
          %p146 = pneg %p49
        $region14: #{tpu_custom_call.1} parent=11 // pred_check_branch
          %148 = sbr.rel (%p146) target = $region16
        $region15: #{tpu_custom_call.1} parent=11 // pred_region
          %150 = vsyncadd [#allocation4], 0
          %s152 = sshll.u32 %s0, 4
          %s153 = int_to_ptr.hbm [resolvable:$true] %s152
          %155 = dma.hbm_to_smem %s153, 32, [#allocation2], [#allocation4]
        $region16: #{tpu_custom_call.1} parent=11 // pred_fallthru
          _
      $region12: #{tpu_custom_call.1} parent=5 // pred_fallthru
        _
      %p156 = scmp.lt.s32.totalorder %s16, 2
      // Predicated region
      $region17: #{tpu_custom_call.1} parent=5 // pred_check
        %p157 = pneg %p156
      $region18: #{tpu_custom_call.1} parent=5 // pred_check_branch
        %159 = sbr.rel (%p157) target = $region20
      $region19: #{tpu_custom_call.1} parent=5 // pred_region
        // Predicated region
        $region21: #{tpu_custom_call.1} parent=19 // pred_check
          %p160 = pneg %p71
        $region22: #{tpu_custom_call.1} parent=19 // pred_check_branch
          %162 = sbr.rel (%p160) target = $region24
        $region23: #{tpu_custom_call.1} parent=19 // pred_region
          %s163 = sand.u32 %s61, 1
          %s164 = scalar_lea.sflag [#allocation3], %s163
          %s165 = sand.u32 %s61, 1
          %s166 = smul.addr %s165, 64
          %s167 = scalar_lea.vmem [#allocation5], %s166
          %s168 = smul.u32 4, %s24
          %170 = vsyncadd %s164, 0
          %s171 = smul.addr %s168, 2
          %s172 = smul.addr %s23, 8
          %s173 = sadd.s32 %s171, %s172
          %s174 = smul.addr %s173, 8
          %s175 = scalar_lea.hbm %s1, %s174
          %s176 = sshll.u32 %s175, 4
          %s177 = int_to_ptr.hbm [resolvable:$true] %s176
          %s178 = sshll.u32 %s167, 4
          %s179 = int_to_ptr.vmem [resolvable:$true] %s178
          %184 = dma.hbm_to_vmem [thread:$0]  %s177, 1024, %s179, %s164, 128, 128, 8
        $region24: #{tpu_custom_call.1} parent=19 // pred_fallthru
          _
        // Predicated region
        $region25: #{tpu_custom_call.1} parent=19 // pred_check
          %p185 = pneg %p99
        $region26: #{tpu_custom_call.1} parent=19 // pred_check_branch
          %187 = sbr.rel (%p185) target = $region28
        $region27: #{tpu_custom_call.1} parent=19 // pred_region
          %s188 = sand.u32 %s89, 1
          %s189 = scalar_lea.sflag [#allocation7], %s188
          %s190 = sand.u32 %s89, 1
          %s191 = smul.addr %s190, 64
          %s192 = scalar_lea.vmem [#allocation6], %s191
          %s193 = smul.u32 4, %s24
          %195 = vsyncadd %s189, 0
          %s196 = smul.addr %s193, 2
          %s197 = smul.addr %s23, 8
          %s198 = sadd.s32 %s196, %s197
          %s199 = smul.addr %s198, 8
          %s200 = scalar_lea.hbm %s2, %s199
          %s201 = sshll.u32 %s200, 4
          %s202 = int_to_ptr.hbm [resolvable:$true] %s201
          %s203 = sshll.u32 %s192, 4
          %s204 = int_to_ptr.vmem [resolvable:$true] %s203
          %209 = dma.hbm_to_vmem [thread:$0]  %s202, 1024, %s204, %s189, 128, 128, 8
        $region28: #{tpu_custom_call.1} parent=19 // pred_fallthru
          _
      $region20: #{tpu_custom_call.1} parent=5 // pred_fallthru
        _
      %p210 = scmp.le.s32.totalorder 1, %s16
      %p211 = scmp.lt.s32.totalorder %s16, 3
      %p212 = pnand %p210, %p211
      %p213 = pneg %p212
      // Predicated region
      $region29: #{tpu_custom_call.1} parent=5 // pred_check
        _
      $region30: #{tpu_custom_call.1} parent=5 // pred_check_branch
        %215 = sbr.rel (%p212) target = $region32
      $region31: #{tpu_custom_call.1} parent=5 // pred_region
        %s216 = ssub.s32 %s16, 1
        // Predicated region
        $region33: #{tpu_custom_call.1} parent=31 // pred_check
          %p217 = pneg %p49
        $region34: #{tpu_custom_call.1} parent=31 // pred_check_branch
          %219 = sbr.rel (%p217) target = $region36
        $region35: #{tpu_custom_call.1} parent=31 // pred_region
          %221 = dma.done [#allocation4], 32
        $region36: #{tpu_custom_call.1} parent=31 // pred_fallthru
          _
        %s222 = sand.u32 %s64, 1
        %s223 = scalar_lea.sflag [#allocation3], %s222
        %s224 = sand.u32 %s64, 1
        %s225 = smul.addr %s224, 64
        %s226 = scalar_lea.vmem [#allocation5], %s225
        // Predicated region
        $region37: #{tpu_custom_call.1} parent=31 // pred_check
          %p227 = pneg %p77
        $region38: #{tpu_custom_call.1} parent=31 // pred_check_branch
          %229 = sbr.rel (%p227) target = $region40
        $region39: #{tpu_custom_call.1} parent=31 // pred_region
          %231 = dma.done %s223, 1024
        $region40: #{tpu_custom_call.1} parent=31 // pred_fallthru
          _
        %s232 = sand.u32 %s92, 1
        %s233 = scalar_lea.sflag [#allocation7], %s232
        %s234 = sand.u32 %s92, 1
        %s235 = smul.addr %s234, 64
        %s236 = scalar_lea.vmem [#allocation6], %s235
        // Predicated region
        $region41: #{tpu_custom_call.1} parent=31 // pred_check
          %p237 = pneg %p105
        $region42: #{tpu_custom_call.1} parent=31 // pred_check_branch
          %239 = sbr.rel (%p237) target = $region44
        $region43: #{tpu_custom_call.1} parent=31 // pred_region
          %241 = dma.done %s233, 1024
        $region44: #{tpu_custom_call.1} parent=31 // pred_fallthru
          _
        %242 = sfence
        %p243 = pneg %p49
        %p244 = pneg %p46
        %s245 = sand.u32 %s64, 1
        %s246 = scalar_lea.sflag [#allocation3], %s245
        %s247 = sand.u32 %s64, 1
        %s248 = smul.addr %s247, 64
        %s249 = scalar_lea.vmem [#allocation5], %s248
        %p250 = pneg %p77
        %p251 = pneg %p74
        %s252 = sand.u32 %s92, 1
        %s253 = scalar_lea.sflag [#allocation7], %s252
        %s254 = sand.u32 %s92, 1
        %s255 = smul.addr %s254, 64
        %s256 = scalar_lea.vmem [#allocation6], %s255
        %p257 = pneg %p105
        %p258 = pneg %p102
        %p259 = pneg %p131
        %p260 = pneg %p128
        %p261 = scmp.lt.s32.totalorder %s25, 1
        %s262 = scalar_select %p261, %s25, 1
        %s263 = scalar_lea.vmem %s3, %s262
        %s264 = smul.u32 4, %s26
        %s265 = smul.u32 4, %s26
        %p266 = scmp.lt.s32.totalorder %s25, 1
        %s267 = scalar_select %p266, %s25, 1
        %s268 = scalar_lea.vmem %s3, %s267
        %s269 = smul.u32 %s25, 128
        %s270 = sld [smem:[#allocation2 + %s269]]
        %s271 = sadd.s32 %s269, 1
        %s272 = sld [smem:[#allocation2 + %s271]]
        %v273 = vld [vmem:[%s226] sm:$0xff]
        %v274 = vld [vmem:[%s226 + $0x8] sm:$0xff]
        %v275 = vld [vmem:[%s236] sm:$0xff]
        %v276 = vld [vmem:[%s236 + $0x8] sm:$0xff]
        %v277 = vmul.f32 %v273, 0.036632847
        %v278 = vmul.f32 %v274, 0.036632847
        %v279 = vmul.f32 %v275, 0.036632847
        %v280 = vmul.f32 %v276, 0.036632847
        %v281 = vmul.f32 %v277, %v273
        %v282 = vmul.f32 %v278, %v274
        %v283 = vmul.f32 %v279, %v275
        %v284 = vmul.f32 %v280, %v276
        %v285 = vmul.f32 %v277, %v275
        %v286 = vmul.f32 %v278, %v276
        %v287 = vmul.f32 %v273, 0.11128076
        %v288 = vmul.f32 %v274, 0.11128076
        %v289 = vmul.f32 %v275, 0.11128076
        %v290 = vmul.f32 %v276, 0.11128076
        %293 = vrot.lane.b32.xlu0 %v287, 127
        %v294 = vpop.permute.xlu0 %293
        %295 = vrot.lane.b32.xlu0 %v288, 127
        %v296 = vpop.permute.xlu0 %295
        %v299 = vadd.f32 %v277, %v294
        %v300 = vadd.f32 %v278, %v296
        %303 = vrot.lane.b32.xlu0 %v289, 127
        %v304 = vpop.permute.xlu0 %303
        %305 = vrot.lane.b32.xlu0 %v290, 127
        %v306 = vpop.permute.xlu0 %305
        %v309 = vadd.f32 %v279, %v304
        %v310 = vadd.f32 %v280, %v306
        %v311 = vmul.f32 %v287, %v273
        %v312 = vmul.f32 %v288, %v274
        %315 = vrot.lane.b32.xlu0 %v311, 127
        %v316 = vpop.permute.xlu0 %315
        %317 = vrot.lane.b32.xlu0 %v312, 127
        %v318 = vpop.permute.xlu0 %317
        %v321 = vadd.f32 %v281, %v316
        %v322 = vadd.f32 %v282, %v318
        %v323 = vmul.f32 %v289, %v275
        %v324 = vmul.f32 %v290, %v276
        %327 = vrot.lane.b32.xlu0 %v323, 127
        %v328 = vpop.permute.xlu0 %327
        %329 = vrot.lane.b32.xlu0 %v324, 127
        %v330 = vpop.permute.xlu0 %329
        %v333 = vadd.f32 %v283, %v328
        %v334 = vadd.f32 %v284, %v330
        %v335 = vmul.f32 %v287, %v275
        %v336 = vmul.f32 %v288, %v276
        %339 = vrot.lane.b32.xlu0 %v335, 127
        %v340 = vpop.permute.xlu0 %339
        %341 = vrot.lane.b32.xlu0 %v336, 127
        %v342 = vpop.permute.xlu0 %341
        %v345 = vadd.f32 %v285, %v340
        %v346 = vadd.f32 %v286, %v342
        %v347 = vmul.f32 %v273, 0.21674532
        %v348 = vmul.f32 %v274, 0.21674532
        %v349 = vmul.f32 %v275, 0.21674532
        %v350 = vmul.f32 %v276, 0.21674532
        %353 = vrot.lane.b32.xlu0 %v347, 126
        %v354 = vpop.permute.xlu0 %353
        %355 = vrot.lane.b32.xlu0 %v348, 126
        %v356 = vpop.permute.xlu0 %355
        %v359 = vadd.f32 %v299, %v354
        %v360 = vadd.f32 %v300, %v356
        %363 = vrot.lane.b32.xlu0 %v349, 126
        %v364 = vpop.permute.xlu0 %363
        %365 = vrot.lane.b32.xlu0 %v350, 126
        %v366 = vpop.permute.xlu0 %365
        %v369 = vadd.f32 %v309, %v364
        %v370 = vadd.f32 %v310, %v366
        %v371 = vmul.f32 %v347, %v273
        %v372 = vmul.f32 %v348, %v274
        %375 = vrot.lane.b32.xlu0 %v371, 126
        %v376 = vpop.permute.xlu0 %375
        %377 = vrot.lane.b32.xlu0 %v372, 126
        %v378 = vpop.permute.xlu0 %377
        %v381 = vadd.f32 %v321, %v376
        %v382 = vadd.f32 %v322, %v378
        %v383 = vmul.f32 %v349, %v275
        %v384 = vmul.f32 %v350, %v276
        %387 = vrot.lane.b32.xlu0 %v383, 126
        %v388 = vpop.permute.xlu0 %387
        %389 = vrot.lane.b32.xlu0 %v384, 126
        %v390 = vpop.permute.xlu0 %389
        %v393 = vadd.f32 %v333, %v388
        %v394 = vadd.f32 %v334, %v390
        %v395 = vmul.f32 %v347, %v275
        %v396 = vmul.f32 %v348, %v276
        %399 = vrot.lane.b32.xlu0 %v395, 126
        %v400 = vpop.permute.xlu0 %399
        %401 = vrot.lane.b32.xlu0 %v396, 126
        %v402 = vpop.permute.xlu0 %401
        %v405 = vadd.f32 %v345, %v400
        %v406 = vadd.f32 %v346, %v402
        %v407 = vmul.f32 %v273, 0.27068216
        %v408 = vmul.f32 %v274, 0.27068216
        %v409 = vmul.f32 %v275, 0.27068216
        %v410 = vmul.f32 %v276, 0.27068216
        %413 = vrot.lane.b32.xlu0 %v407, 125
        %v414 = vpop.permute.xlu0 %413
        %415 = vrot.lane.b32.xlu0 %v408, 125
        %v416 = vpop.permute.xlu0 %415
        %v419 = vadd.f32 %v359, %v414
        %v420 = vadd.f32 %v360, %v416
        %423 = vrot.lane.b32.xlu0 %v409, 125
        %v424 = vpop.permute.xlu0 %423
        %425 = vrot.lane.b32.xlu0 %v410, 125
        %v426 = vpop.permute.xlu0 %425
        %v429 = vadd.f32 %v369, %v424
        %v430 = vadd.f32 %v370, %v426
        %v431 = vmul.f32 %v407, %v273
        %v432 = vmul.f32 %v408, %v274
        %435 = vrot.lane.b32.xlu0 %v431, 125
        %v436 = vpop.permute.xlu0 %435
        %437 = vrot.lane.b32.xlu0 %v432, 125
        %v438 = vpop.permute.xlu0 %437
        %v441 = vadd.f32 %v381, %v436
        %v442 = vadd.f32 %v382, %v438
        %v443 = vmul.f32 %v409, %v275
        %v444 = vmul.f32 %v410, %v276
        %447 = vrot.lane.b32.xlu0 %v443, 125
        %v448 = vpop.permute.xlu0 %447
        %449 = vrot.lane.b32.xlu0 %v444, 125
        %v450 = vpop.permute.xlu0 %449
        %v453 = vadd.f32 %v393, %v448
        %v454 = vadd.f32 %v394, %v450
        %v455 = vmul.f32 %v407, %v275
        %v456 = vmul.f32 %v408, %v276
        %459 = vrot.lane.b32.xlu0 %v455, 125
        %v460 = vpop.permute.xlu0 %459
        %461 = vrot.lane.b32.xlu0 %v456, 125
        %v462 = vpop.permute.xlu0 %461
        %v465 = vadd.f32 %v405, %v460
        %v466 = vadd.f32 %v406, %v462
        %467 = vrot.lane.b32.xlu0 %v347, 124
        %v468 = vpop.permute.xlu0 %467
        %469 = vrot.lane.b32.xlu0 %v348, 124
        %v470 = vpop.permute.xlu0 %469
        %v473 = vadd.f32 %v419, %v468
        %v474 = vadd.f32 %v420, %v470
        %475 = vrot.lane.b32.xlu0 %v349, 124
        %v476 = vpop.permute.xlu0 %475
        %477 = vrot.lane.b32.xlu0 %v350, 124
        %v478 = vpop.permute.xlu0 %477
        %v481 = vadd.f32 %v429, %v476
        %v482 = vadd.f32 %v430, %v478
        %483 = vrot.lane.b32.xlu0 %v371, 124
        %v484 = vpop.permute.xlu0 %483
        %485 = vrot.lane.b32.xlu0 %v372, 124
        %v486 = vpop.permute.xlu0 %485
        %v489 = vadd.f32 %v441, %v484
        %v490 = vadd.f32 %v442, %v486
        %491 = vrot.lane.b32.xlu0 %v383, 124
        %v492 = vpop.permute.xlu0 %491
        %493 = vrot.lane.b32.xlu0 %v384, 124
        %v494 = vpop.permute.xlu0 %493
        %v497 = vadd.f32 %v453, %v492
        %v498 = vadd.f32 %v454, %v494
        %499 = vrot.lane.b32.xlu0 %v395, 124
        %v500 = vpop.permute.xlu0 %499
        %501 = vrot.lane.b32.xlu0 %v396, 124
        %v502 = vpop.permute.xlu0 %501
        %v505 = vadd.f32 %v465, %v500
        %v506 = vadd.f32 %v466, %v502
        %507 = vrot.lane.b32.xlu0 %v287, 123
        %v508 = vpop.permute.xlu0 %507
        %509 = vrot.lane.b32.xlu0 %v288, 123
        %v510 = vpop.permute.xlu0 %509
        %v513 = vadd.f32 %v473, %v508
        %v514 = vadd.f32 %v474, %v510
        %515 = vrot.lane.b32.xlu0 %v289, 123
        %v516 = vpop.permute.xlu0 %515
        %517 = vrot.lane.b32.xlu0 %v290, 123
        %v518 = vpop.permute.xlu0 %517
        %v521 = vadd.f32 %v481, %v516
        %v522 = vadd.f32 %v482, %v518
        %523 = vrot.lane.b32.xlu0 %v311, 123
        %v524 = vpop.permute.xlu0 %523
        %525 = vrot.lane.b32.xlu0 %v312, 123
        %v526 = vpop.permute.xlu0 %525
        %v529 = vadd.f32 %v489, %v524
        %v530 = vadd.f32 %v490, %v526
        %531 = vrot.lane.b32.xlu0 %v323, 123
        %v532 = vpop.permute.xlu0 %531
        %533 = vrot.lane.b32.xlu0 %v324, 123
        %v534 = vpop.permute.xlu0 %533
        %v537 = vadd.f32 %v497, %v532
        %v538 = vadd.f32 %v498, %v534
        %539 = vrot.lane.b32.xlu0 %v335, 123
        %v540 = vpop.permute.xlu0 %539
        %541 = vrot.lane.b32.xlu0 %v336, 123
        %v542 = vpop.permute.xlu0 %541
        %v545 = vadd.f32 %v505, %v540
        %v546 = vadd.f32 %v506, %v542
        %549 = vrot.lane.b32.xlu0 %v277, 122
        %v550 = vpop.permute.xlu0 %549
        %551 = vrot.lane.b32.xlu0 %v278, 122
        %v552 = vpop.permute.xlu0 %551
        %v555 = vadd.f32 %v513, %v550
        %v556 = vadd.f32 %v514, %v552
        %559 = vrot.lane.b32.xlu0 %v279, 122
        %v560 = vpop.permute.xlu0 %559
        %561 = vrot.lane.b32.xlu0 %v280, 122
        %v562 = vpop.permute.xlu0 %561
        %v565 = vadd.f32 %v521, %v560
        %v566 = vadd.f32 %v522, %v562
        %569 = vrot.lane.b32.xlu0 %v281, 122
        %v570 = vpop.permute.xlu0 %569
        %571 = vrot.lane.b32.xlu0 %v282, 122
        %v572 = vpop.permute.xlu0 %571
        %v575 = vadd.f32 %v529, %v570
        %v576 = vadd.f32 %v530, %v572
        %579 = vrot.lane.b32.xlu0 %v283, 122
        %v580 = vpop.permute.xlu0 %579
        %581 = vrot.lane.b32.xlu0 %v284, 122
        %v582 = vpop.permute.xlu0 %581
        %v585 = vadd.f32 %v537, %v580
        %v586 = vadd.f32 %v538, %v582
        %589 = vrot.lane.b32.xlu0 %v285, 122
        %v590 = vpop.permute.xlu0 %589
        %591 = vrot.lane.b32.xlu0 %v286, 122
        %v592 = vpop.permute.xlu0 %591
        %v595 = vadd.f32 %v545, %v590
        %v596 = vadd.f32 %v546, %v592
        %v597 = vmul.f32 %v555, 0.27068216
        %v598 = vmul.f32 %v556, 0.27068216
        %vm601 = vcmask 1041408
        %v602 = vrot.slane %v555, 6
        %v603 = vrot.slane %v556, 6
        %v604 = vsel %vm601, %v602, %v603
        %v607 = vadd.f32 %v555, %v604
        %v608 = vadd.f32 %v556, %v603
        %v609 = vmul.f32 %v607, 0.036632847
        %v610 = vmul.f32 %v608, 0.036632847
        %vm613 = vcmask 1042432
        %v614 = vrot.slane %v609, 5
        %v615 = vrot.slane %v610, 5
        %v616 = vsel %vm613, %v614, %v615
        %v619 = vadd.f32 %v597, %v614
        %v620 = vadd.f32 %v598, %v616
        %vm621 = vcmask 1043456
        %v622 = vrot.slane %v555, 4
        %v623 = vrot.slane %v556, 4
        %v624 = vsel %vm621, %v622, %v623
        %v627 = vadd.f32 %v555, %v624
        %v628 = vadd.f32 %v556, %v623
        %v629 = vmul.f32 %v627, 0.11128076
        %v630 = vmul.f32 %v628, 0.11128076
        %v633 = vrot.slane %v629, 6
        %v634 = vrot.slane %v630, 6
        %v635 = vsel %vm601, %v633, %v634
        %v638 = vadd.f32 %v619, %v633
        %v639 = vadd.f32 %v620, %v635
        %vm640 = vcmask 1045504
        %v641 = vrot.slane %v555, 2
        %v642 = vrot.slane %v556, 2
        %v643 = vsel %vm640, %v641, %v642
        %v646 = vadd.f32 %v555, %v643
        %v647 = vadd.f32 %v556, %v642
        %v648 = vmul.f32 %v646, 0.21674532
        %v649 = vmul.f32 %v647, 0.21674532
        %vm652 = vcmask 1040384
        %v653 = vrot.slane %v648, 7
        %v654 = vrot.slane %v649, 7
        %v655 = vsel %vm652, %v653, %v654
        %v658 = vadd.f32 %v638, %v653
        %v659 = vadd.f32 %v639, %v655
        %v660 = vmul.f32 %v565, 0.27068216
        %v661 = vmul.f32 %v566, 0.27068216
        %v664 = vrot.slane %v565, 6
        %v665 = vrot.slane %v566, 6
        %v666 = vsel %vm601, %v664, %v665
        %v669 = vadd.f32 %v565, %v666
        %v670 = vadd.f32 %v566, %v665
        %v671 = vmul.f32 %v669, 0.036632847
        %v672 = vmul.f32 %v670, 0.036632847
        %v675 = vrot.slane %v671, 5
        %v676 = vrot.slane %v672, 5
        %v677 = vsel %vm613, %v675, %v676
        %v680 = vadd.f32 %v660, %v675
        %v681 = vadd.f32 %v661, %v677
        %v682 = vrot.slane %v565, 4
        %v683 = vrot.slane %v566, 4
        %v684 = vsel %vm621, %v682, %v683
        %v687 = vadd.f32 %v565, %v684
        %v688 = vadd.f32 %v566, %v683
        %v689 = vmul.f32 %v687, 0.11128076
        %v690 = vmul.f32 %v688, 0.11128076
        %v693 = vrot.slane %v689, 6
        %v694 = vrot.slane %v690, 6
        %v695 = vsel %vm601, %v693, %v694
        %v698 = vadd.f32 %v680, %v693
        %v699 = vadd.f32 %v681, %v695
        %v700 = vrot.slane %v565, 2
        %v701 = vrot.slane %v566, 2
        %v702 = vsel %vm640, %v700, %v701
        %v705 = vadd.f32 %v565, %v702
        %v706 = vadd.f32 %v566, %v701
        %v707 = vmul.f32 %v705, 0.21674532
        %v708 = vmul.f32 %v706, 0.21674532
        %v711 = vrot.slane %v707, 7
        %v712 = vrot.slane %v708, 7
        %v713 = vsel %vm652, %v711, %v712
        %v716 = vadd.f32 %v698, %v711
        %v717 = vadd.f32 %v699, %v713
        %v718 = vmul.f32 %v575, 0.27068216
        %v719 = vmul.f32 %v576, 0.27068216
        %v722 = vrot.slane %v575, 6
        %v723 = vrot.slane %v576, 6
        %v724 = vsel %vm601, %v722, %v723
        %v727 = vadd.f32 %v575, %v724
        %v728 = vadd.f32 %v576, %v723
        %v729 = vmul.f32 %v727, 0.036632847
        %v730 = vmul.f32 %v728, 0.036632847
        %v733 = vrot.slane %v729, 5
        %v734 = vrot.slane %v730, 5
        %v735 = vsel %vm613, %v733, %v734
        %v738 = vadd.f32 %v718, %v733
        %v739 = vadd.f32 %v719, %v735
        %v740 = vrot.slane %v575, 4
        %v741 = vrot.slane %v576, 4
        %v742 = vsel %vm621, %v740, %v741
        %v745 = vadd.f32 %v575, %v742
        %v746 = vadd.f32 %v576, %v741
        %v747 = vmul.f32 %v745, 0.11128076
        %v748 = vmul.f32 %v746, 0.11128076
        %v751 = vrot.slane %v747, 6
        %v752 = vrot.slane %v748, 6
        %v753 = vsel %vm601, %v751, %v752
        %v756 = vadd.f32 %v738, %v751
        %v757 = vadd.f32 %v739, %v753
        %v758 = vrot.slane %v575, 2
        %v759 = vrot.slane %v576, 2
        %v760 = vsel %vm640, %v758, %v759
        %v763 = vadd.f32 %v575, %v760
        %v764 = vadd.f32 %v576, %v759
        %v765 = vmul.f32 %v763, 0.21674532
        %v766 = vmul.f32 %v764, 0.21674532
        %v769 = vrot.slane %v765, 7
        %v770 = vrot.slane %v766, 7
        %v771 = vsel %vm652, %v769, %v770
        %v774 = vadd.f32 %v756, %v769
        %v775 = vadd.f32 %v757, %v771
        %v776 = vmul.f32 %v585, 0.27068216
        %v777 = vmul.f32 %v586, 0.27068216
        %v780 = vrot.slane %v585, 6
        %v781 = vrot.slane %v586, 6
        %v782 = vsel %vm601, %v780, %v781
        %v785 = vadd.f32 %v585, %v782
        %v786 = vadd.f32 %v586, %v781
        %v787 = vmul.f32 %v785, 0.036632847
        %v788 = vmul.f32 %v786, 0.036632847
        %v791 = vrot.slane %v787, 5
        %v792 = vrot.slane %v788, 5
        %v793 = vsel %vm613, %v791, %v792
        %v796 = vadd.f32 %v776, %v791
        %v797 = vadd.f32 %v777, %v793
        %v798 = vrot.slane %v585, 4
        %v799 = vrot.slane %v586, 4
        %v800 = vsel %vm621, %v798, %v799
        %v803 = vadd.f32 %v585, %v800
        %v804 = vadd.f32 %v586, %v799
        %v805 = vmul.f32 %v803, 0.11128076
        %v806 = vmul.f32 %v804, 0.11128076
        %v809 = vrot.slane %v805, 6
        %v810 = vrot.slane %v806, 6
        %v811 = vsel %vm601, %v809, %v810
        %v814 = vadd.f32 %v796, %v809
        %v815 = vadd.f32 %v797, %v811
        %v816 = vrot.slane %v585, 2
        %v817 = vrot.slane %v586, 2
        %v818 = vsel %vm640, %v816, %v817
        %v821 = vadd.f32 %v585, %v818
        %v822 = vadd.f32 %v586, %v817
        %v823 = vmul.f32 %v821, 0.21674532
        %v824 = vmul.f32 %v822, 0.21674532
        %v827 = vrot.slane %v823, 7
        %v828 = vrot.slane %v824, 7
        %v829 = vsel %vm652, %v827, %v828
        %v832 = vadd.f32 %v814, %v827
        %v833 = vadd.f32 %v815, %v829
        %v834 = vmul.f32 %v595, 0.27068216
        %v835 = vmul.f32 %v596, 0.27068216
        %v838 = vrot.slane %v595, 6
        %v839 = vrot.slane %v596, 6
        %v840 = vsel %vm601, %v838, %v839
        %v843 = vadd.f32 %v595, %v840
        %v844 = vadd.f32 %v596, %v839
        %v845 = vmul.f32 %v843, 0.036632847
        %v846 = vmul.f32 %v844, 0.036632847
        %v849 = vrot.slane %v845, 5
        %v850 = vrot.slane %v846, 5
        %v851 = vsel %vm613, %v849, %v850
        %v854 = vadd.f32 %v834, %v849
        %v855 = vadd.f32 %v835, %v851
        %v856 = vrot.slane %v595, 4
        %v857 = vrot.slane %v596, 4
        %v858 = vsel %vm621, %v856, %v857
        %v861 = vadd.f32 %v595, %v858
        %v862 = vadd.f32 %v596, %v857
        %v863 = vmul.f32 %v861, 0.11128076
        %v864 = vmul.f32 %v862, 0.11128076
        %v867 = vrot.slane %v863, 6
        %v868 = vrot.slane %v864, 6
        %v869 = vsel %vm601, %v867, %v868
        %v872 = vadd.f32 %v854, %v867
        %v873 = vadd.f32 %v855, %v869
        %v874 = vrot.slane %v595, 2
        %v875 = vrot.slane %v596, 2
        %v876 = vsel %vm640, %v874, %v875
        %v879 = vadd.f32 %v595, %v876
        %v880 = vadd.f32 %v596, %v875
        %v881 = vmul.f32 %v879, 0.21674532
        %v882 = vmul.f32 %v880, 0.21674532
        %v885 = vrot.slane %v881, 7
        %v886 = vrot.slane %v882, 7
        %v887 = vsel %vm652, %v885, %v886
        %v890 = vadd.f32 %v872, %v885
        %v891 = vadd.f32 %v873, %v887
        %v892 = vmul.f32 %v658, %v658
        %v893 = vmul.f32 %v659, %v659
        %v894 = vmul.f32 %v716, %v716
        %v895 = vmul.f32 %v717, %v717
        %v896 = vmul.f32 %v658, %v716
        %v897 = vmul.f32 %v659, %v717
        %v898 = vsub.f32 %v774, %v892
        %v899 = vsub.f32 %v775, %v893
        %v900 = vsub.f32 %v832, %v894
        %v901 = vsub.f32 %v833, %v895
        %v902 = vsub.f32 %v890, %v896
        %v903 = vsub.f32 %v891, %v897
        %v904 = vmul.f32 %v902, 2.0
        %v905 = vmul.f32 %v903, 2.0
        %v906 = vstv %s272
        %v907 = vadd.f32 %v904, %v906
        %v908 = vadd.f32 %v905, %v906
        %v909 = vadd.f32 %v898, %v900
        %v910 = vadd.f32 %v899, %v901
        %v911 = vadd.f32 %v909, %v906
        %v912 = vadd.f32 %v910, %v906
        %v913 = vmul.f32 %v896, 2.0
        %v914 = vmul.f32 %v897, 2.0
        %v915 = vstv %s270
        %v916 = vadd.f32 %v913, %v915
        %v917 = vadd.f32 %v914, %v915
        %v918 = vmul.f32 %v916, %v907
        %v919 = vmul.f32 %v917, %v908
        %v920 = vadd.f32 %v892, %v894
        %v921 = vadd.f32 %v893, %v895
        %v922 = vadd.f32 %v920, %v915
        %v923 = vadd.f32 %v921, %v915
        %v924 = vmul.f32 %v922, %v911
        %v925 = vmul.f32 %v923, %v912
        %v926 = vrcp.pop %v924
        %v927 = vrcp.pop %v925
        %v928 = vmul.f32 %v924, %v926
        %v929 = vmul.f32 %v925, %v927
        %v930 = vsub.f32 2.0, %v928
        %v931 = vsub.f32 2.0, %v929
        %v932 = vmul.f32 %v926, %v930
        %v933 = vmul.f32 %v927, %v931
        %v934 = vmul.f32 %v918, %v932
        %v935 = vmul.f32 %v919, %v933
        %vm938 = vcmask 1044480
        %v939 = vrot.slane %v934, 3
        %v940 = vrot.slane %v935, 3
        %v941 = vsel %vm938, %v939, %v940
        %vm944 = vcmask 80896
        %v945 = vsel %vm944, %v941, 0.0
        %vm946 = vcmask 74752
        %v947 = vsel %vm946, %v940, 0.0
        %v948 = vadd.f32 %v945, %v947
        %949 = vadd.xlane.f32.xlu0 %v948
        %v950 = vpop.xlane.xlu0 %949
        %v951 = vrot.slane %v950, 4
        %v952 = vadd.f32 %v950, %v951
        %v953 = vrot.slane %v952, 2
        %v954 = vadd.f32 %v952, %v953
        %v955 = vrot.slane %v954, 1
        %v956 = vadd.f32 %v954, %v955
        %s957 = vtos %v956
        %s958 = sadd.f32 %s957, 0.0
        %s959 = scalar_lea.vmem %s226, 16 [#allocation5]
        %v960 = vld [vmem:[%s959] sm:$0xff]
        %v961 = vld [vmem:[%s959 + $0x8] sm:$0xff]
        %s962 = scalar_lea.vmem %s236, 16 [#allocation6]
        %v963 = vld [vmem:[%s962] sm:$0xff]
        %v964 = vld [vmem:[%s962 + $0x8] sm:$0xff]
        %v965 = vmul.f32 %v960, 0.036632847
        %v966 = vmul.f32 %v961, 0.036632847
        %v967 = vmul.f32 %v963, 0.036632847
        %v968 = vmul.f32 %v964, 0.036632847
        %v969 = vmul.f32 %v965, %v960
        %v970 = vmul.f32 %v966, %v961
        %v971 = vmul.f32 %v967, %v963
        %v972 = vmul.f32 %v968, %v964
        %v973 = vmul.f32 %v965, %v963
        %v974 = vmul.f32 %v966, %v964
        %v975 = vmul.f32 %v960, 0.11128076
        %v976 = vmul.f32 %v961, 0.11128076
        %v977 = vmul.f32 %v963, 0.11128076
        %v978 = vmul.f32 %v964, 0.11128076
        %981 = vrot.lane.b32.xlu0 %v975, 127
        %v982 = vpop.permute.xlu0 %981
        %983 = vrot.lane.b32.xlu0 %v976, 127
        %v984 = vpop.permute.xlu0 %983
        %v987 = vadd.f32 %v965, %v982
        %v988 = vadd.f32 %v966, %v984
        %991 = vrot.lane.b32.xlu0 %v977, 127
        %v992 = vpop.permute.xlu0 %991
        %993 = vrot.lane.b32.xlu0 %v978, 127
        %v994 = vpop.permute.xlu0 %993
        %v997 = vadd.f32 %v967, %v992
        %v998 = vadd.f32 %v968, %v994
        %v999 = vmul.f32 %v975, %v960
        %v1000 = vmul.f32 %v976, %v961
        %1003 = vrot.lane.b32.xlu0 %v999, 127
        %v1004 = vpop.permute.xlu0 %1003
        %1005 = vrot.lane.b32.xlu0 %v1000, 127
        %v1006 = vpop.permute.xlu0 %1005
        %v1009 = vadd.f32 %v969, %v1004
        %v1010 = vadd.f32 %v970, %v1006
        %v1011 = vmul.f32 %v977, %v963
        %v1012 = vmul.f32 %v978, %v964
        %1015 = vrot.lane.b32.xlu0 %v1011, 127
        %v1016 = vpop.permute.xlu0 %1015
        %1017 = vrot.lane.b32.xlu0 %v1012, 127
        %v1018 = vpop.permute.xlu0 %1017
        %v1021 = vadd.f32 %v971, %v1016
        %v1022 = vadd.f32 %v972, %v1018
        %v1023 = vmul.f32 %v975, %v963
        %v1024 = vmul.f32 %v976, %v964
        %1027 = vrot.lane.b32.xlu0 %v1023, 127
        %v1028 = vpop.permute.xlu0 %1027
        %1029 = vrot.lane.b32.xlu0 %v1024, 127
        %v1030 = vpop.permute.xlu0 %1029
        %v1033 = vadd.f32 %v973, %v1028
        %v1034 = vadd.f32 %v974, %v1030
        %v1035 = vmul.f32 %v960, 0.21674532
        %v1036 = vmul.f32 %v961, 0.21674532
        %v1037 = vmul.f32 %v963, 0.21674532
        %v1038 = vmul.f32 %v964, 0.21674532
        %1041 = vrot.lane.b32.xlu0 %v1035, 126
        %v1042 = vpop.permute.xlu0 %1041
        %1043 = vrot.lane.b32.xlu0 %v1036, 126
        %v1044 = vpop.permute.xlu0 %1043
        %v1047 = vadd.f32 %v987, %v1042
        %v1048 = vadd.f32 %v988, %v1044
        %1051 = vrot.lane.b32.xlu0 %v1037, 126
        %v1052 = vpop.permute.xlu0 %1051
        %1053 = vrot.lane.b32.xlu0 %v1038, 126
        %v1054 = vpop.permute.xlu0 %1053
        %v1057 = vadd.f32 %v997, %v1052
        %v1058 = vadd.f32 %v998, %v1054
        %v1059 = vmul.f32 %v1035, %v960
        %v1060 = vmul.f32 %v1036, %v961
        %1063 = vrot.lane.b32.xlu0 %v1059, 126
        %v1064 = vpop.permute.xlu0 %1063
        %1065 = vrot.lane.b32.xlu0 %v1060, 126
        %v1066 = vpop.permute.xlu0 %1065
        %v1069 = vadd.f32 %v1009, %v1064
        %v1070 = vadd.f32 %v1010, %v1066
        %v1071 = vmul.f32 %v1037, %v963
        %v1072 = vmul.f32 %v1038, %v964
        %1075 = vrot.lane.b32.xlu0 %v1071, 126
        %v1076 = vpop.permute.xlu0 %1075
        %1077 = vrot.lane.b32.xlu0 %v1072, 126
        %v1078 = vpop.permute.xlu0 %1077
        %v1081 = vadd.f32 %v1021, %v1076
        %v1082 = vadd.f32 %v1022, %v1078
        %v1083 = vmul.f32 %v1035, %v963
        %v1084 = vmul.f32 %v1036, %v964
        %1087 = vrot.lane.b32.xlu0 %v1083, 126
        %v1088 = vpop.permute.xlu0 %1087
        %1089 = vrot.lane.b32.xlu0 %v1084, 126
        %v1090 = vpop.permute.xlu0 %1089
        %v1093 = vadd.f32 %v1033, %v1088
        %v1094 = vadd.f32 %v1034, %v1090
        %v1095 = vmul.f32 %v960, 0.27068216
        %v1096 = vmul.f32 %v961, 0.27068216
        %v1097 = vmul.f32 %v963, 0.27068216
        %v1098 = vmul.f32 %v964, 0.27068216
        %1101 = vrot.lane.b32.xlu0 %v1095, 125
        %v1102 = vpop.permute.xlu0 %1101
        %1103 = vrot.lane.b32.xlu0 %v1096, 125
        %v1104 = vpop.permute.xlu0 %1103
        %v1107 = vadd.f32 %v1047, %v1102
        %v1108 = vadd.f32 %v1048, %v1104
        %1111 = vrot.lane.b32.xlu0 %v1097, 125
        %v1112 = vpop.permute.xlu0 %1111
        %1113 = vrot.lane.b32.xlu0 %v1098, 125
        %v1114 = vpop.permute.xlu0 %1113
        %v1117 = vadd.f32 %v1057, %v1112
        %v1118 = vadd.f32 %v1058, %v1114
        %v1119 = vmul.f32 %v1095, %v960
        %v1120 = vmul.f32 %v1096, %v961
        %1123 = vrot.lane.b32.xlu0 %v1119, 125
        %v1124 = vpop.permute.xlu0 %1123
        %1125 = vrot.lane.b32.xlu0 %v1120, 125
        %v1126 = vpop.permute.xlu0 %1125
        %v1129 = vadd.f32 %v1069, %v1124
        %v1130 = vadd.f32 %v1070, %v1126
        %v1131 = vmul.f32 %v1097, %v963
        %v1132 = vmul.f32 %v1098, %v964
        %1135 = vrot.lane.b32.xlu0 %v1131, 125
        %v1136 = vpop.permute.xlu0 %1135
        %1137 = vrot.lane.b32.xlu0 %v1132, 125
        %v1138 = vpop.permute.xlu0 %1137
        %v1141 = vadd.f32 %v1081, %v1136
        %v1142 = vadd.f32 %v1082, %v1138
        %v1143 = vmul.f32 %v1095, %v963
        %v1144 = vmul.f32 %v1096, %v964
        %1147 = vrot.lane.b32.xlu0 %v1143, 125
        %v1148 = vpop.permute.xlu0 %1147
        %1149 = vrot.lane.b32.xlu0 %v1144, 125
        %v1150 = vpop.permute.xlu0 %1149
        %v1153 = vadd.f32 %v1093, %v1148
        %v1154 = vadd.f32 %v1094, %v1150
        %1155 = vrot.lane.b32.xlu0 %v1035, 124
        %v1156 = vpop.permute.xlu0 %1155
        %1157 = vrot.lane.b32.xlu0 %v1036, 124
        %v1158 = vpop.permute.xlu0 %1157
        %v1161 = vadd.f32 %v1107, %v1156
        %v1162 = vadd.f32 %v1108, %v1158
        %1163 = vrot.lane.b32.xlu0 %v1037, 124
        %v1164 = vpop.permute.xlu0 %1163
        %1165 = vrot.lane.b32.xlu0 %v1038, 124
        %v1166 = vpop.permute.xlu0 %1165
        %v1169 = vadd.f32 %v1117, %v1164
        %v1170 = vadd.f32 %v1118, %v1166
        %1171 = vrot.lane.b32.xlu0 %v1059, 124
        %v1172 = vpop.permute.xlu0 %1171
        %1173 = vrot.lane.b32.xlu0 %v1060, 124
        %v1174 = vpop.permute.xlu0 %1173
        %v1177 = vadd.f32 %v1129, %v1172
        %v1178 = vadd.f32 %v1130, %v1174
        %1179 = vrot.lane.b32.xlu0 %v1071, 124
        %v1180 = vpop.permute.xlu0 %1179
        %1181 = vrot.lane.b32.xlu0 %v1072, 124
        %v1182 = vpop.permute.xlu0 %1181
        %v1185 = vadd.f32 %v1141, %v1180
        %v1186 = vadd.f32 %v1142, %v1182
        %1187 = vrot.lane.b32.xlu0 %v1083, 124
        %v1188 = vpop.permute.xlu0 %1187
        %1189 = vrot.lane.b32.xlu0 %v1084, 124
        %v1190 = vpop.permute.xlu0 %1189
        %v1193 = vadd.f32 %v1153, %v1188
        %v1194 = vadd.f32 %v1154, %v1190
        %1195 = vrot.lane.b32.xlu0 %v975, 123
        %v1196 = vpop.permute.xlu0 %1195
        %1197 = vrot.lane.b32.xlu0 %v976, 123
        %v1198 = vpop.permute.xlu0 %1197
        %v1201 = vadd.f32 %v1161, %v1196
        %v1202 = vadd.f32 %v1162, %v1198
        %1203 = vrot.lane.b32.xlu0 %v977, 123
        %v1204 = vpop.permute.xlu0 %1203
        %1205 = vrot.lane.b32.xlu0 %v978, 123
        %v1206 = vpop.permute.xlu0 %1205
        %v1209 = vadd.f32 %v1169, %v1204
        %v1210 = vadd.f32 %v1170, %v1206
        %1211 = vrot.lane.b32.xlu0 %v999, 123
        %v1212 = vpop.permute.xlu0 %1211
        %1213 = vrot.lane.b32.xlu0 %v1000, 123
        %v1214 = vpop.permute.xlu0 %1213
        %v1217 = vadd.f32 %v1177, %v1212
        %v1218 = vadd.f32 %v1178, %v1214
        %1219 = vrot.lane.b32.xlu0 %v1011, 123
        %v1220 = vpop.permute.xlu0 %1219
        %1221 = vrot.lane.b32.xlu0 %v1012, 123
        %v1222 = vpop.permute.xlu0 %1221
        %v1225 = vadd.f32 %v1185, %v1220
        %v1226 = vadd.f32 %v1186, %v1222
        %1227 = vrot.lane.b32.xlu0 %v1023, 123
        %v1228 = vpop.permute.xlu0 %1227
        %1229 = vrot.lane.b32.xlu0 %v1024, 123
        %v1230 = vpop.permute.xlu0 %1229
        %v1233 = vadd.f32 %v1193, %v1228
        %v1234 = vadd.f32 %v1194, %v1230
        %1237 = vrot.lane.b32.xlu0 %v965, 122
        %v1238 = vpop.permute.xlu0 %1237
        %1239 = vrot.lane.b32.xlu0 %v966, 122
        %v1240 = vpop.permute.xlu0 %1239
        %v1243 = vadd.f32 %v1201, %v1238
        %v1244 = vadd.f32 %v1202, %v1240
        %1247 = vrot.lane.b32.xlu0 %v967, 122
        %v1248 = vpop.permute.xlu0 %1247
        %1249 = vrot.lane.b32.xlu0 %v968, 122
        %v1250 = vpop.permute.xlu0 %1249
        %v1253 = vadd.f32 %v1209, %v1248
        %v1254 = vadd.f32 %v1210, %v1250
        %1257 = vrot.lane.b32.xlu0 %v969, 122
        %v1258 = vpop.permute.xlu0 %1257
        %1259 = vrot.lane.b32.xlu0 %v970, 122
        %v1260 = vpop.permute.xlu0 %1259
        %v1263 = vadd.f32 %v1217, %v1258
        %v1264 = vadd.f32 %v1218, %v1260
        %1267 = vrot.lane.b32.xlu0 %v971, 122
        %v1268 = vpop.permute.xlu0 %1267
        %1269 = vrot.lane.b32.xlu0 %v972, 122
        %v1270 = vpop.permute.xlu0 %1269
        %v1273 = vadd.f32 %v1225, %v1268
        %v1274 = vadd.f32 %v1226, %v1270
        %1277 = vrot.lane.b32.xlu0 %v973, 122
        %v1278 = vpop.permute.xlu0 %1277
        %1279 = vrot.lane.b32.xlu0 %v974, 122
        %v1280 = vpop.permute.xlu0 %1279
        %v1283 = vadd.f32 %v1233, %v1278
        %v1284 = vadd.f32 %v1234, %v1280
        %v1285 = vmul.f32 %v1243, 0.27068216
        %v1286 = vmul.f32 %v1244, 0.27068216
        %v1289 = vrot.slane %v1243, 6
        %v1290 = vrot.slane %v1244, 6
        %v1291 = vsel %vm601, %v1289, %v1290
        %v1294 = vadd.f32 %v1243, %v1291
        %v1295 = vadd.f32 %v1244, %v1290
        %v1296 = vmul.f32 %v1294, 0.036632847
        %v1297 = vmul.f32 %v1295, 0.036632847
        %v1300 = vrot.slane %v1296, 5
        %v1301 = vrot.slane %v1297, 5
        %v1302 = vsel %vm613, %v1300, %v1301
        %v1305 = vadd.f32 %v1285, %v1300
        %v1306 = vadd.f32 %v1286, %v1302
        %v1307 = vrot.slane %v1243, 4
        %v1308 = vrot.slane %v1244, 4
        %v1309 = vsel %vm621, %v1307, %v1308
        %v1312 = vadd.f32 %v1243, %v1309
        %v1313 = vadd.f32 %v1244, %v1308
        %v1314 = vmul.f32 %v1312, 0.11128076
        %v1315 = vmul.f32 %v1313, 0.11128076
        %v1318 = vrot.slane %v1314, 6
        %v1319 = vrot.slane %v1315, 6
        %v1320 = vsel %vm601, %v1318, %v1319
        %v1323 = vadd.f32 %v1305, %v1318
        %v1324 = vadd.f32 %v1306, %v1320
        %v1325 = vrot.slane %v1243, 2
        %v1326 = vrot.slane %v1244, 2
        %v1327 = vsel %vm640, %v1325, %v1326
        %v1330 = vadd.f32 %v1243, %v1327
        %v1331 = vadd.f32 %v1244, %v1326
        %v1332 = vmul.f32 %v1330, 0.21674532
        %v1333 = vmul.f32 %v1331, 0.21674532
        %v1336 = vrot.slane %v1332, 7
        %v1337 = vrot.slane %v1333, 7
        %v1338 = vsel %vm652, %v1336, %v1337
        %v1341 = vadd.f32 %v1323, %v1336
        %v1342 = vadd.f32 %v1324, %v1338
        %v1343 = vmul.f32 %v1253, 0.27068216
        %v1344 = vmul.f32 %v1254, 0.27068216
        %v1347 = vrot.slane %v1253, 6
        %v1348 = vrot.slane %v1254, 6
        %v1349 = vsel %vm601, %v1347, %v1348
        %v1352 = vadd.f32 %v1253, %v1349
        %v1353 = vadd.f32 %v1254, %v1348
        %v1354 = vmul.f32 %v1352, 0.036632847
        %v1355 = vmul.f32 %v1353, 0.036632847
        %v1358 = vrot.slane %v1354, 5
        %v1359 = vrot.slane %v1355, 5
        %v1360 = vsel %vm613, %v1358, %v1359
        %v1363 = vadd.f32 %v1343, %v1358
        %v1364 = vadd.f32 %v1344, %v1360
        %v1365 = vrot.slane %v1253, 4
        %v1366 = vrot.slane %v1254, 4
        %v1367 = vsel %vm621, %v1365, %v1366
        %v1370 = vadd.f32 %v1253, %v1367
        %v1371 = vadd.f32 %v1254, %v1366
        %v1372 = vmul.f32 %v1370, 0.11128076
        %v1373 = vmul.f32 %v1371, 0.11128076
        %v1376 = vrot.slane %v1372, 6
        %v1377 = vrot.slane %v1373, 6
        %v1378 = vsel %vm601, %v1376, %v1377
        %v1381 = vadd.f32 %v1363, %v1376
        %v1382 = vadd.f32 %v1364, %v1378
        %v1383 = vrot.slane %v1253, 2
        %v1384 = vrot.slane %v1254, 2
        %v1385 = vsel %vm640, %v1383, %v1384
        %v1388 = vadd.f32 %v1253, %v1385
        %v1389 = vadd.f32 %v1254, %v1384
        %v1390 = vmul.f32 %v1388, 0.21674532
        %v1391 = vmul.f32 %v1389, 0.21674532
        %v1394 = vrot.slane %v1390, 7
        %v1395 = vrot.slane %v1391, 7
        %v1396 = vsel %vm652, %v1394, %v1395
        %v1399 = vadd.f32 %v1381, %v1394
        %v1400 = vadd.f32 %v1382, %v1396
        %v1401 = vmul.f32 %v1263, 0.27068216
        %v1402 = vmul.f32 %v1264, 0.27068216
        %v1405 = vrot.slane %v1263, 6
        %v1406 = vrot.slane %v1264, 6
        %v1407 = vsel %vm601, %v1405, %v1406
        %v1410 = vadd.f32 %v1263, %v1407
        %v1411 = vadd.f32 %v1264, %v1406
        %v1412 = vmul.f32 %v1410, 0.036632847
        %v1413 = vmul.f32 %v1411, 0.036632847
        %v1416 = vrot.slane %v1412, 5
        %v1417 = vrot.slane %v1413, 5
        %v1418 = vsel %vm613, %v1416, %v1417
        %v1421 = vadd.f32 %v1401, %v1416
        %v1422 = vadd.f32 %v1402, %v1418
        %v1423 = vrot.slane %v1263, 4
        %v1424 = vrot.slane %v1264, 4
        %v1425 = vsel %vm621, %v1423, %v1424
        %v1428 = vadd.f32 %v1263, %v1425
        %v1429 = vadd.f32 %v1264, %v1424
        %v1430 = vmul.f32 %v1428, 0.11128076
        %v1431 = vmul.f32 %v1429, 0.11128076
        %v1434 = vrot.slane %v1430, 6
        %v1435 = vrot.slane %v1431, 6
        %v1436 = vsel %vm601, %v1434, %v1435
        %v1439 = vadd.f32 %v1421, %v1434
        %v1440 = vadd.f32 %v1422, %v1436
        %v1441 = vrot.slane %v1263, 2
        %v1442 = vrot.slane %v1264, 2
        %v1443 = vsel %vm640, %v1441, %v1442
        %v1446 = vadd.f32 %v1263, %v1443
        %v1447 = vadd.f32 %v1264, %v1442
        %v1448 = vmul.f32 %v1446, 0.21674532
        %v1449 = vmul.f32 %v1447, 0.21674532
        %v1452 = vrot.slane %v1448, 7
        %v1453 = vrot.slane %v1449, 7
        %v1454 = vsel %vm652, %v1452, %v1453
        %v1457 = vadd.f32 %v1439, %v1452
        %v1458 = vadd.f32 %v1440, %v1454
        %v1459 = vmul.f32 %v1273, 0.27068216
        %v1460 = vmul.f32 %v1274, 0.27068216
        %v1463 = vrot.slane %v1273, 6
        %v1464 = vrot.slane %v1274, 6
        %v1465 = vsel %vm601, %v1463, %v1464
        %v1468 = vadd.f32 %v1273, %v1465
        %v1469 = vadd.f32 %v1274, %v1464
        %v1470 = vmul.f32 %v1468, 0.036632847
        %v1471 = vmul.f32 %v1469, 0.036632847
        %v1474 = vrot.slane %v1470, 5
        %v1475 = vrot.slane %v1471, 5
        %v1476 = vsel %vm613, %v1474, %v1475
        %v1479 = vadd.f32 %v1459, %v1474
        %v1480 = vadd.f32 %v1460, %v1476
        %v1481 = vrot.slane %v1273, 4
        %v1482 = vrot.slane %v1274, 4
        %v1483 = vsel %vm621, %v1481, %v1482
        %v1486 = vadd.f32 %v1273, %v1483
        %v1487 = vadd.f32 %v1274, %v1482
        %v1488 = vmul.f32 %v1486, 0.11128076
        %v1489 = vmul.f32 %v1487, 0.11128076
        %v1492 = vrot.slane %v1488, 6
        %v1493 = vrot.slane %v1489, 6
        %v1494 = vsel %vm601, %v1492, %v1493
        %v1497 = vadd.f32 %v1479, %v1492
        %v1498 = vadd.f32 %v1480, %v1494
        %v1499 = vrot.slane %v1273, 2
        %v1500 = vrot.slane %v1274, 2
        %v1501 = vsel %vm640, %v1499, %v1500
        %v1504 = vadd.f32 %v1273, %v1501
        %v1505 = vadd.f32 %v1274, %v1500
        %v1506 = vmul.f32 %v1504, 0.21674532
        %v1507 = vmul.f32 %v1505, 0.21674532
        %v1510 = vrot.slane %v1506, 7
        %v1511 = vrot.slane %v1507, 7
        %v1512 = vsel %vm652, %v1510, %v1511
        %v1515 = vadd.f32 %v1497, %v1510
        %v1516 = vadd.f32 %v1498, %v1512
        %v1517 = vmul.f32 %v1283, 0.27068216
        %v1518 = vmul.f32 %v1284, 0.27068216
        %v1521 = vrot.slane %v1283, 6
        %v1522 = vrot.slane %v1284, 6
        %v1523 = vsel %vm601, %v1521, %v1522
        %v1526 = vadd.f32 %v1283, %v1523
        %v1527 = vadd.f32 %v1284, %v1522
        %v1528 = vmul.f32 %v1526, 0.036632847
        %v1529 = vmul.f32 %v1527, 0.036632847
        %v1532 = vrot.slane %v1528, 5
        %v1533 = vrot.slane %v1529, 5
        %v1534 = vsel %vm613, %v1532, %v1533
        %v1537 = vadd.f32 %v1517, %v1532
        %v1538 = vadd.f32 %v1518, %v1534
        %v1539 = vrot.slane %v1283, 4
        %v1540 = vrot.slane %v1284, 4
        %v1541 = vsel %vm621, %v1539, %v1540
        %v1544 = vadd.f32 %v1283, %v1541
        %v1545 = vadd.f32 %v1284, %v1540
        %v1546 = vmul.f32 %v1544, 0.11128076
        %v1547 = vmul.f32 %v1545, 0.11128076
        %v1550 = vrot.slane %v1546, 6
        %v1551 = vrot.slane %v1547, 6
        %v1552 = vsel %vm601, %v1550, %v1551
        %v1555 = vadd.f32 %v1537, %v1550
        %v1556 = vadd.f32 %v1538, %v1552
        %v1557 = vrot.slane %v1283, 2
        %v1558 = vrot.slane %v1284, 2
        %v1559 = vsel %vm640, %v1557, %v1558
        %v1562 = vadd.f32 %v1283, %v1559
        %v1563 = vadd.f32 %v1284, %v1558
        %v1564 = vmul.f32 %v1562, 0.21674532
        %v1565 = vmul.f32 %v1563, 0.21674532
        %v1568 = vrot.slane %v1564, 7
        %v1569 = vrot.slane %v1565, 7
        %v1570 = vsel %vm652, %v1568, %v1569
        %v1573 = vadd.f32 %v1555, %v1568
        %v1574 = vadd.f32 %v1556, %v1570
        %v1575 = vmul.f32 %v1341, %v1341
        %v1576 = vmul.f32 %v1342, %v1342
        %v1577 = vmul.f32 %v1399, %v1399
        %v1578 = vmul.f32 %v1400, %v1400
        %v1579 = vmul.f32 %v1341, %v1399
        %v1580 = vmul.f32 %v1342, %v1400
        %v1581 = vsub.f32 %v1457, %v1575
        %v1582 = vsub.f32 %v1458, %v1576
        %v1583 = vsub.f32 %v1515, %v1577
        %v1584 = vsub.f32 %v1516, %v1578
        %v1585 = vsub.f32 %v1573, %v1579
        %v1586 = vsub.f32 %v1574, %v1580
        %v1587 = vmul.f32 %v1585, 2.0
        %v1588 = vmul.f32 %v1586, 2.0
        %v1589 = vadd.f32 %v1587, %v906
        %v1590 = vadd.f32 %v1588, %v906
        %v1591 = vadd.f32 %v1581, %v1583
        %v1592 = vadd.f32 %v1582, %v1584
        %v1593 = vadd.f32 %v1591, %v906
        %v1594 = vadd.f32 %v1592, %v906
        %v1595 = vmul.f32 %v1579, 2.0
        %v1596 = vmul.f32 %v1580, 2.0
        %v1597 = vadd.f32 %v1595, %v915
        %v1598 = vadd.f32 %v1596, %v915
        %v1599 = vmul.f32 %v1597, %v1589
        %v1600 = vmul.f32 %v1598, %v1590
        %v1601 = vadd.f32 %v1575, %v1577
        %v1602 = vadd.f32 %v1576, %v1578
        %v1603 = vadd.f32 %v1601, %v915
        %v1604 = vadd.f32 %v1602, %v915
        %v1605 = vmul.f32 %v1603, %v1593
        %v1606 = vmul.f32 %v1604, %v1594
        %v1607 = vrcp.pop %v1605
        %v1608 = vrcp.pop %v1606
        %v1609 = vmul.f32 %v1605, %v1607
        %v1610 = vmul.f32 %v1606, %v1608
        %v1611 = vsub.f32 2.0, %v1609
        %v1612 = vsub.f32 2.0, %v1610
        %v1613 = vmul.f32 %v1607, %v1611
        %v1614 = vmul.f32 %v1608, %v1612
        %v1615 = vmul.f32 %v1599, %v1613
        %v1616 = vmul.f32 %v1600, %v1614
        %v1619 = vrot.slane %v1615, 3
        %v1620 = vrot.slane %v1616, 3
        %v1621 = vsel %vm938, %v1619, %v1620
        %v1624 = vsel %vm944, %v1621, 0.0
        %v1625 = vsel %vm946, %v1620, 0.0
        %v1626 = vadd.f32 %v1624, %v1625
        %1627 = vadd.xlane.f32.xlu0 %v1626
        %v1628 = vpop.xlane.xlu0 %1627
        %v1629 = vrot.slane %v1628, 4
        %v1630 = vadd.f32 %v1628, %v1629
        %v1631 = vrot.slane %v1630, 2
        %v1632 = vadd.f32 %v1630, %v1631
        %v1633 = vrot.slane %v1632, 1
        %v1634 = vadd.f32 %v1632, %v1633
        %s1635 = vtos %v1634
        %s1636 = sadd.f32 %s958, %s1635
        %s1637 = scalar_lea.vmem %s226, 32 [#allocation5]
        %v1638 = vld [vmem:[%s1637] sm:$0xff]
        %v1639 = vld [vmem:[%s1637 + $0x8] sm:$0xff]
        %s1640 = scalar_lea.vmem %s236, 32 [#allocation6]
        %v1641 = vld [vmem:[%s1640] sm:$0xff]
        %v1642 = vld [vmem:[%s1640 + $0x8] sm:$0xff]
        %v1643 = vmul.f32 %v1638, 0.036632847
        %v1644 = vmul.f32 %v1639, 0.036632847
        %v1645 = vmul.f32 %v1641, 0.036632847
        %v1646 = vmul.f32 %v1642, 0.036632847
        %v1647 = vmul.f32 %v1643, %v1638
        %v1648 = vmul.f32 %v1644, %v1639
        %v1649 = vmul.f32 %v1645, %v1641
        %v1650 = vmul.f32 %v1646, %v1642
        %v1651 = vmul.f32 %v1643, %v1641
        %v1652 = vmul.f32 %v1644, %v1642
        %v1653 = vmul.f32 %v1638, 0.11128076
        %v1654 = vmul.f32 %v1639, 0.11128076
        %v1655 = vmul.f32 %v1641, 0.11128076
        %v1656 = vmul.f32 %v1642, 0.11128076
        %1659 = vrot.lane.b32.xlu0 %v1653, 127
        %v1660 = vpop.permute.xlu0 %1659
        %1661 = vrot.lane.b32.xlu0 %v1654, 127
        %v1662 = vpop.permute.xlu0 %1661
        %v1665 = vadd.f32 %v1643, %v1660
        %v1666 = vadd.f32 %v1644, %v1662
        %1669 = vrot.lane.b32.xlu0 %v1655, 127
        %v1670 = vpop.permute.xlu0 %1669
        %1671 = vrot.lane.b32.xlu0 %v1656, 127
        %v1672 = vpop.permute.xlu0 %1671
        %v1675 = vadd.f32 %v1645, %v1670
        %v1676 = vadd.f32 %v1646, %v1672
        %v1677 = vmul.f32 %v1653, %v1638
        %v1678 = vmul.f32 %v1654, %v1639
        %1681 = vrot.lane.b32.xlu0 %v1677, 127
        %v1682 = vpop.permute.xlu0 %1681
        %1683 = vrot.lane.b32.xlu0 %v1678, 127
        %v1684 = vpop.permute.xlu0 %1683
        %v1687 = vadd.f32 %v1647, %v1682
        %v1688 = vadd.f32 %v1648, %v1684
        %v1689 = vmul.f32 %v1655, %v1641
        %v1690 = vmul.f32 %v1656, %v1642
        %1693 = vrot.lane.b32.xlu0 %v1689, 127
        %v1694 = vpop.permute.xlu0 %1693
        %1695 = vrot.lane.b32.xlu0 %v1690, 127
        %v1696 = vpop.permute.xlu0 %1695
        %v1699 = vadd.f32 %v1649, %v1694
        %v1700 = vadd.f32 %v1650, %v1696
        %v1701 = vmul.f32 %v1653, %v1641
        %v1702 = vmul.f32 %v1654, %v1642
        %1705 = vrot.lane.b32.xlu0 %v1701, 127
        %v1706 = vpop.permute.xlu0 %1705
        %1707 = vrot.lane.b32.xlu0 %v1702, 127
        %v1708 = vpop.permute.xlu0 %1707
        %v1711 = vadd.f32 %v1651, %v1706
        %v1712 = vadd.f32 %v1652, %v1708
        %v1713 = vmul.f32 %v1638, 0.21674532
        %v1714 = vmul.f32 %v1639, 0.21674532
        %v1715 = vmul.f32 %v1641, 0.21674532
        %v1716 = vmul.f32 %v1642, 0.21674532
        %1719 = vrot.lane.b32.xlu0 %v1713, 126
        %v1720 = vpop.permute.xlu0 %1719
        %1721 = vrot.lane.b32.xlu0 %v1714, 126
        %v1722 = vpop.permute.xlu0 %1721
        %v1725 = vadd.f32 %v1665, %v1720
        %v1726 = vadd.f32 %v1666, %v1722
        %1729 = vrot.lane.b32.xlu0 %v1715, 126
        %v1730 = vpop.permute.xlu0 %1729
        %1731 = vrot.lane.b32.xlu0 %v1716, 126
        %v1732 = vpop.permute.xlu0 %1731
        %v1735 = vadd.f32 %v1675, %v1730
        %v1736 = vadd.f32 %v1676, %v1732
        %v1737 = vmul.f32 %v1713, %v1638
        %v1738 = vmul.f32 %v1714, %v1639
        %1741 = vrot.lane.b32.xlu0 %v1737, 126
        %v1742 = vpop.permute.xlu0 %1741
        %1743 = vrot.lane.b32.xlu0 %v1738, 126
        %v1744 = vpop.permute.xlu0 %1743
        %v1747 = vadd.f32 %v1687, %v1742
        %v1748 = vadd.f32 %v1688, %v1744
        %v1749 = vmul.f32 %v1715, %v1641
        %v1750 = vmul.f32 %v1716, %v1642
        %1753 = vrot.lane.b32.xlu0 %v1749, 126
        %v1754 = vpop.permute.xlu0 %1753
        %1755 = vrot.lane.b32.xlu0 %v1750, 126
        %v1756 = vpop.permute.xlu0 %1755
        %v1759 = vadd.f32 %v1699, %v1754
        %v1760 = vadd.f32 %v1700, %v1756
        %v1761 = vmul.f32 %v1713, %v1641
        %v1762 = vmul.f32 %v1714, %v1642
        %1765 = vrot.lane.b32.xlu0 %v1761, 126
        %v1766 = vpop.permute.xlu0 %1765
        %1767 = vrot.lane.b32.xlu0 %v1762, 126
        %v1768 = vpop.permute.xlu0 %1767
        %v1771 = vadd.f32 %v1711, %v1766
        %v1772 = vadd.f32 %v1712, %v1768
        %v1773 = vmul.f32 %v1638, 0.27068216
        %v1774 = vmul.f32 %v1639, 0.27068216
        %v1775 = vmul.f32 %v1641, 0.27068216
        %v1776 = vmul.f32 %v1642, 0.27068216
        %1779 = vrot.lane.b32.xlu0 %v1773, 125
        %v1780 = vpop.permute.xlu0 %1779
        %1781 = vrot.lane.b32.xlu0 %v1774, 125
        %v1782 = vpop.permute.xlu0 %1781
        %v1785 = vadd.f32 %v1725, %v1780
        %v1786 = vadd.f32 %v1726, %v1782
        %1789 = vrot.lane.b32.xlu0 %v1775, 125
        %v1790 = vpop.permute.xlu0 %1789
        %1791 = vrot.lane.b32.xlu0 %v1776, 125
        %v1792 = vpop.permute.xlu0 %1791
        %v1795 = vadd.f32 %v1735, %v1790
        %v1796 = vadd.f32 %v1736, %v1792
        %v1797 = vmul.f32 %v1773, %v1638
        %v1798 = vmul.f32 %v1774, %v1639
        %1801 = vrot.lane.b32.xlu0 %v1797, 125
        %v1802 = vpop.permute.xlu0 %1801
        %1803 = vrot.lane.b32.xlu0 %v1798, 125
        %v1804 = vpop.permute.xlu0 %1803
        %v1807 = vadd.f32 %v1747, %v1802
        %v1808 = vadd.f32 %v1748, %v1804
        %v1809 = vmul.f32 %v1775, %v1641
        %v1810 = vmul.f32 %v1776, %v1642
        %1813 = vrot.lane.b32.xlu0 %v1809, 125
        %v1814 = vpop.permute.xlu0 %1813
        %1815 = vrot.lane.b32.xlu0 %v1810, 125
        %v1816 = vpop.permute.xlu0 %1815
        %v1819 = vadd.f32 %v1759, %v1814
        %v1820 = vadd.f32 %v1760, %v1816
        %v1821 = vmul.f32 %v1773, %v1641
        %v1822 = vmul.f32 %v1774, %v1642
        %1825 = vrot.lane.b32.xlu0 %v1821, 125
        %v1826 = vpop.permute.xlu0 %1825
        %1827 = vrot.lane.b32.xlu0 %v1822, 125
        %v1828 = vpop.permute.xlu0 %1827
        %v1831 = vadd.f32 %v1771, %v1826
        %v1832 = vadd.f32 %v1772, %v1828
        %1833 = vrot.lane.b32.xlu0 %v1713, 124
        %v1834 = vpop.permute.xlu0 %1833
        %1835 = vrot.lane.b32.xlu0 %v1714, 124
        %v1836 = vpop.permute.xlu0 %1835
        %v1839 = vadd.f32 %v1785, %v1834
        %v1840 = vadd.f32 %v1786, %v1836
        %1841 = vrot.lane.b32.xlu0 %v1715, 124
        %v1842 = vpop.permute.xlu0 %1841
        %1843 = vrot.lane.b32.xlu0 %v1716, 124
        %v1844 = vpop.permute.xlu0 %1843
        %v1847 = vadd.f32 %v1795, %v1842
        %v1848 = vadd.f32 %v1796, %v1844
        %1849 = vrot.lane.b32.xlu0 %v1737, 124
        %v1850 = vpop.permute.xlu0 %1849
        %1851 = vrot.lane.b32.xlu0 %v1738, 124
        %v1852 = vpop.permute.xlu0 %1851
        %v1855 = vadd.f32 %v1807, %v1850
        %v1856 = vadd.f32 %v1808, %v1852
        %1857 = vrot.lane.b32.xlu0 %v1749, 124
        %v1858 = vpop.permute.xlu0 %1857
        %1859 = vrot.lane.b32.xlu0 %v1750, 124
        %v1860 = vpop.permute.xlu0 %1859
        %v1863 = vadd.f32 %v1819, %v1858
        %v1864 = vadd.f32 %v1820, %v1860
        %1865 = vrot.lane.b32.xlu0 %v1761, 124
        %v1866 = vpop.permute.xlu0 %1865
        %1867 = vrot.lane.b32.xlu0 %v1762, 124
        %v1868 = vpop.permute.xlu0 %1867
        %v1871 = vadd.f32 %v1831, %v1866
        %v1872 = vadd.f32 %v1832, %v1868
        %1873 = vrot.lane.b32.xlu0 %v1653, 123
        %v1874 = vpop.permute.xlu0 %1873
        %1875 = vrot.lane.b32.xlu0 %v1654, 123
        %v1876 = vpop.permute.xlu0 %1875
        %v1879 = vadd.f32 %v1839, %v1874
        %v1880 = vadd.f32 %v1840, %v1876
        %1881 = vrot.lane.b32.xlu0 %v1655, 123
        %v1882 = vpop.permute.xlu0 %1881
        %1883 = vrot.lane.b32.xlu0 %v1656, 123
        %v1884 = vpop.permute.xlu0 %1883
        %v1887 = vadd.f32 %v1847, %v1882
        %v1888 = vadd.f32 %v1848, %v1884
        %1889 = vrot.lane.b32.xlu0 %v1677, 123
        %v1890 = vpop.permute.xlu0 %1889
        %1891 = vrot.lane.b32.xlu0 %v1678, 123
        %v1892 = vpop.permute.xlu0 %1891
        %v1895 = vadd.f32 %v1855, %v1890
        %v1896 = vadd.f32 %v1856, %v1892
        %1897 = vrot.lane.b32.xlu0 %v1689, 123
        %v1898 = vpop.permute.xlu0 %1897
        %1899 = vrot.lane.b32.xlu0 %v1690, 123
        %v1900 = vpop.permute.xlu0 %1899
        %v1903 = vadd.f32 %v1863, %v1898
        %v1904 = vadd.f32 %v1864, %v1900
        %1905 = vrot.lane.b32.xlu0 %v1701, 123
        %v1906 = vpop.permute.xlu0 %1905
        %1907 = vrot.lane.b32.xlu0 %v1702, 123
        %v1908 = vpop.permute.xlu0 %1907
        %v1911 = vadd.f32 %v1871, %v1906
        %v1912 = vadd.f32 %v1872, %v1908
        %1915 = vrot.lane.b32.xlu0 %v1643, 122
        %v1916 = vpop.permute.xlu0 %1915
        %1917 = vrot.lane.b32.xlu0 %v1644, 122
        %v1918 = vpop.permute.xlu0 %1917
        %v1921 = vadd.f32 %v1879, %v1916
        %v1922 = vadd.f32 %v1880, %v1918
        %1925 = vrot.lane.b32.xlu0 %v1645, 122
        %v1926 = vpop.permute.xlu0 %1925
        %1927 = vrot.lane.b32.xlu0 %v1646, 122
        %v1928 = vpop.permute.xlu0 %1927
        %v1931 = vadd.f32 %v1887, %v1926
        %v1932 = vadd.f32 %v1888, %v1928
        %1935 = vrot.lane.b32.xlu0 %v1647, 122
        %v1936 = vpop.permute.xlu0 %1935
        %1937 = vrot.lane.b32.xlu0 %v1648, 122
        %v1938 = vpop.permute.xlu0 %1937
        %v1941 = vadd.f32 %v1895, %v1936
        %v1942 = vadd.f32 %v1896, %v1938
        %1945 = vrot.lane.b32.xlu0 %v1649, 122
        %v1946 = vpop.permute.xlu0 %1945
        %1947 = vrot.lane.b32.xlu0 %v1650, 122
        %v1948 = vpop.permute.xlu0 %1947
        %v1951 = vadd.f32 %v1903, %v1946
        %v1952 = vadd.f32 %v1904, %v1948
        %1955 = vrot.lane.b32.xlu0 %v1651, 122
        %v1956 = vpop.permute.xlu0 %1955
        %1957 = vrot.lane.b32.xlu0 %v1652, 122
        %v1958 = vpop.permute.xlu0 %1957
        %v1961 = vadd.f32 %v1911, %v1956
        %v1962 = vadd.f32 %v1912, %v1958
        %v1963 = vmul.f32 %v1921, 0.27068216
        %v1964 = vmul.f32 %v1922, 0.27068216
        %v1967 = vrot.slane %v1921, 6
        %v1968 = vrot.slane %v1922, 6
        %v1969 = vsel %vm601, %v1967, %v1968
        %v1972 = vadd.f32 %v1921, %v1969
        %v1973 = vadd.f32 %v1922, %v1968
        %v1974 = vmul.f32 %v1972, 0.036632847
        %v1975 = vmul.f32 %v1973, 0.036632847
        %v1978 = vrot.slane %v1974, 5
        %v1979 = vrot.slane %v1975, 5
        %v1980 = vsel %vm613, %v1978, %v1979
        %v1983 = vadd.f32 %v1963, %v1978
        %v1984 = vadd.f32 %v1964, %v1980
        %v1985 = vrot.slane %v1921, 4
        %v1986 = vrot.slane %v1922, 4
        %v1987 = vsel %vm621, %v1985, %v1986
        %v1990 = vadd.f32 %v1921, %v1987
        %v1991 = vadd.f32 %v1922, %v1986
        %v1992 = vmul.f32 %v1990, 0.11128076
        %v1993 = vmul.f32 %v1991, 0.11128076
        %v1996 = vrot.slane %v1992, 6
        %v1997 = vrot.slane %v1993, 6
        %v1998 = vsel %vm601, %v1996, %v1997
        %v2001 = vadd.f32 %v1983, %v1996
        %v2002 = vadd.f32 %v1984, %v1998
        %v2003 = vrot.slane %v1921, 2
        %v2004 = vrot.slane %v1922, 2
        %v2005 = vsel %vm640, %v2003, %v2004
        %v2008 = vadd.f32 %v1921, %v2005
        %v2009 = vadd.f32 %v1922, %v2004
        %v2010 = vmul.f32 %v2008, 0.21674532
        %v2011 = vmul.f32 %v2009, 0.21674532
        %v2014 = vrot.slane %v2010, 7
        %v2015 = vrot.slane %v2011, 7
        %v2016 = vsel %vm652, %v2014, %v2015
        %v2019 = vadd.f32 %v2001, %v2014
        %v2020 = vadd.f32 %v2002, %v2016
        %v2021 = vmul.f32 %v1931, 0.27068216
        %v2022 = vmul.f32 %v1932, 0.27068216
        %v2025 = vrot.slane %v1931, 6
        %v2026 = vrot.slane %v1932, 6
        %v2027 = vsel %vm601, %v2025, %v2026
        %v2030 = vadd.f32 %v1931, %v2027
        %v2031 = vadd.f32 %v1932, %v2026
        %v2032 = vmul.f32 %v2030, 0.036632847
        %v2033 = vmul.f32 %v2031, 0.036632847
        %v2036 = vrot.slane %v2032, 5
        %v2037 = vrot.slane %v2033, 5
        %v2038 = vsel %vm613, %v2036, %v2037
        %v2041 = vadd.f32 %v2021, %v2036
        %v2042 = vadd.f32 %v2022, %v2038
        %v2043 = vrot.slane %v1931, 4
        %v2044 = vrot.slane %v1932, 4
        %v2045 = vsel %vm621, %v2043, %v2044
        %v2048 = vadd.f32 %v1931, %v2045
        %v2049 = vadd.f32 %v1932, %v2044
        %v2050 = vmul.f32 %v2048, 0.11128076
        %v2051 = vmul.f32 %v2049, 0.11128076
        %v2054 = vrot.slane %v2050, 6
        %v2055 = vrot.slane %v2051, 6
        %v2056 = vsel %vm601, %v2054, %v2055
        %v2059 = vadd.f32 %v2041, %v2054
        %v2060 = vadd.f32 %v2042, %v2056
        %v2061 = vrot.slane %v1931, 2
        %v2062 = vrot.slane %v1932, 2
        %v2063 = vsel %vm640, %v2061, %v2062
        %v2066 = vadd.f32 %v1931, %v2063
        %v2067 = vadd.f32 %v1932, %v2062
        %v2068 = vmul.f32 %v2066, 0.21674532
        %v2069 = vmul.f32 %v2067, 0.21674532
        %v2072 = vrot.slane %v2068, 7
        %v2073 = vrot.slane %v2069, 7
        %v2074 = vsel %vm652, %v2072, %v2073
        %v2077 = vadd.f32 %v2059, %v2072
        %v2078 = vadd.f32 %v2060, %v2074
        %v2079 = vmul.f32 %v1941, 0.27068216
        %v2080 = vmul.f32 %v1942, 0.27068216
        %v2083 = vrot.slane %v1941, 6
        %v2084 = vrot.slane %v1942, 6
        %v2085 = vsel %vm601, %v2083, %v2084
        %v2088 = vadd.f32 %v1941, %v2085
        %v2089 = vadd.f32 %v1942, %v2084
        %v2090 = vmul.f32 %v2088, 0.036632847
        %v2091 = vmul.f32 %v2089, 0.036632847
        %v2094 = vrot.slane %v2090, 5
        %v2095 = vrot.slane %v2091, 5
        %v2096 = vsel %vm613, %v2094, %v2095
        %v2099 = vadd.f32 %v2079, %v2094
        %v2100 = vadd.f32 %v2080, %v2096
        %v2101 = vrot.slane %v1941, 4
        %v2102 = vrot.slane %v1942, 4
        %v2103 = vsel %vm621, %v2101, %v2102
        %v2106 = vadd.f32 %v1941, %v2103
        %v2107 = vadd.f32 %v1942, %v2102
        %v2108 = vmul.f32 %v2106, 0.11128076
        %v2109 = vmul.f32 %v2107, 0.11128076
        %v2112 = vrot.slane %v2108, 6
        %v2113 = vrot.slane %v2109, 6
        %v2114 = vsel %vm601, %v2112, %v2113
        %v2117 = vadd.f32 %v2099, %v2112
        %v2118 = vadd.f32 %v2100, %v2114
        %v2119 = vrot.slane %v1941, 2
        %v2120 = vrot.slane %v1942, 2
        %v2121 = vsel %vm640, %v2119, %v2120
        %v2124 = vadd.f32 %v1941, %v2121
        %v2125 = vadd.f32 %v1942, %v2120
        %v2126 = vmul.f32 %v2124, 0.21674532
        %v2127 = vmul.f32 %v2125, 0.21674532
        %v2130 = vrot.slane %v2126, 7
        %v2131 = vrot.slane %v2127, 7
        %v2132 = vsel %vm652, %v2130, %v2131
        %v2135 = vadd.f32 %v2117, %v2130
        %v2136 = vadd.f32 %v2118, %v2132
        %v2137 = vmul.f32 %v1951, 0.27068216
        %v2138 = vmul.f32 %v1952, 0.27068216
        %v2141 = vrot.slane %v1951, 6
        %v2142 = vrot.slane %v1952, 6
        %v2143 = vsel %vm601, %v2141, %v2142
        %v2146 = vadd.f32 %v1951, %v2143
        %v2147 = vadd.f32 %v1952, %v2142
        %v2148 = vmul.f32 %v2146, 0.036632847
        %v2149 = vmul.f32 %v2147, 0.036632847
        %v2152 = vrot.slane %v2148, 5
        %v2153 = vrot.slane %v2149, 5
        %v2154 = vsel %vm613, %v2152, %v2153
        %v2157 = vadd.f32 %v2137, %v2152
        %v2158 = vadd.f32 %v2138, %v2154
        %v2159 = vrot.slane %v1951, 4
        %v2160 = vrot.slane %v1952, 4
        %v2161 = vsel %vm621, %v2159, %v2160
        %v2164 = vadd.f32 %v1951, %v2161
        %v2165 = vadd.f32 %v1952, %v2160
        %v2166 = vmul.f32 %v2164, 0.11128076
        %v2167 = vmul.f32 %v2165, 0.11128076
        %v2170 = vrot.slane %v2166, 6
        %v2171 = vrot.slane %v2167, 6
        %v2172 = vsel %vm601, %v2170, %v2171
        %v2175 = vadd.f32 %v2157, %v2170
        %v2176 = vadd.f32 %v2158, %v2172
        %v2177 = vrot.slane %v1951, 2
        %v2178 = vrot.slane %v1952, 2
        %v2179 = vsel %vm640, %v2177, %v2178
        %v2182 = vadd.f32 %v1951, %v2179
        %v2183 = vadd.f32 %v1952, %v2178
        %v2184 = vmul.f32 %v2182, 0.21674532
        %v2185 = vmul.f32 %v2183, 0.21674532
        %v2188 = vrot.slane %v2184, 7
        %v2189 = vrot.slane %v2185, 7
        %v2190 = vsel %vm652, %v2188, %v2189
        %v2193 = vadd.f32 %v2175, %v2188
        %v2194 = vadd.f32 %v2176, %v2190
        %v2195 = vmul.f32 %v1961, 0.27068216
        %v2196 = vmul.f32 %v1962, 0.27068216
        %v2199 = vrot.slane %v1961, 6
        %v2200 = vrot.slane %v1962, 6
        %v2201 = vsel %vm601, %v2199, %v2200
        %v2204 = vadd.f32 %v1961, %v2201
        %v2205 = vadd.f32 %v1962, %v2200
        %v2206 = vmul.f32 %v2204, 0.036632847
        %v2207 = vmul.f32 %v2205, 0.036632847
        %v2210 = vrot.slane %v2206, 5
        %v2211 = vrot.slane %v2207, 5
        %v2212 = vsel %vm613, %v2210, %v2211
        %v2215 = vadd.f32 %v2195, %v2210
        %v2216 = vadd.f32 %v2196, %v2212
        %v2217 = vrot.slane %v1961, 4
        %v2218 = vrot.slane %v1962, 4
        %v2219 = vsel %vm621, %v2217, %v2218
        %v2222 = vadd.f32 %v1961, %v2219
        %v2223 = vadd.f32 %v1962, %v2218
        %v2224 = vmul.f32 %v2222, 0.11128076
        %v2225 = vmul.f32 %v2223, 0.11128076
        %v2228 = vrot.slane %v2224, 6
        %v2229 = vrot.slane %v2225, 6
        %v2230 = vsel %vm601, %v2228, %v2229
        %v2233 = vadd.f32 %v2215, %v2228
        %v2234 = vadd.f32 %v2216, %v2230
        %v2235 = vrot.slane %v1961, 2
        %v2236 = vrot.slane %v1962, 2
        %v2237 = vsel %vm640, %v2235, %v2236
        %v2240 = vadd.f32 %v1961, %v2237
        %v2241 = vadd.f32 %v1962, %v2236
        %v2242 = vmul.f32 %v2240, 0.21674532
        %v2243 = vmul.f32 %v2241, 0.21674532
        %v2246 = vrot.slane %v2242, 7
        %v2247 = vrot.slane %v2243, 7
        %v2248 = vsel %vm652, %v2246, %v2247
        %v2251 = vadd.f32 %v2233, %v2246
        %v2252 = vadd.f32 %v2234, %v2248
        %v2253 = vmul.f32 %v2019, %v2019
        %v2254 = vmul.f32 %v2020, %v2020
        %v2255 = vmul.f32 %v2077, %v2077
        %v2256 = vmul.f32 %v2078, %v2078
        %v2257 = vmul.f32 %v2019, %v2077
        %v2258 = vmul.f32 %v2020, %v2078
        %v2259 = vsub.f32 %v2135, %v2253
        %v2260 = vsub.f32 %v2136, %v2254
        %v2261 = vsub.f32 %v2193, %v2255
        %v2262 = vsub.f32 %v2194, %v2256
        %v2263 = vsub.f32 %v2251, %v2257
        %v2264 = vsub.f32 %v2252, %v2258
        %v2265 = vmul.f32 %v2263, 2.0
        %v2266 = vmul.f32 %v2264, 2.0
        %v2267 = vadd.f32 %v2265, %v906
        %v2268 = vadd.f32 %v2266, %v906
        %v2269 = vadd.f32 %v2259, %v2261
        %v2270 = vadd.f32 %v2260, %v2262
        %v2271 = vadd.f32 %v2269, %v906
        %v2272 = vadd.f32 %v2270, %v906
        %v2273 = vmul.f32 %v2257, 2.0
        %v2274 = vmul.f32 %v2258, 2.0
        %v2275 = vadd.f32 %v2273, %v915
        %v2276 = vadd.f32 %v2274, %v915
        %v2277 = vmul.f32 %v2275, %v2267
        %v2278 = vmul.f32 %v2276, %v2268
        %v2279 = vadd.f32 %v2253, %v2255
        %v2280 = vadd.f32 %v2254, %v2256
        %v2281 = vadd.f32 %v2279, %v915
        %v2282 = vadd.f32 %v2280, %v915
        %v2283 = vmul.f32 %v2281, %v2271
        %v2284 = vmul.f32 %v2282, %v2272
        %v2285 = vrcp.pop %v2283
        %v2286 = vrcp.pop %v2284
        %v2287 = vmul.f32 %v2283, %v2285
        %v2288 = vmul.f32 %v2284, %v2286
        %v2289 = vsub.f32 2.0, %v2287
        %v2290 = vsub.f32 2.0, %v2288
        %v2291 = vmul.f32 %v2285, %v2289
        %v2292 = vmul.f32 %v2286, %v2290
        %v2293 = vmul.f32 %v2277, %v2291
        %v2294 = vmul.f32 %v2278, %v2292
        %v2297 = vrot.slane %v2293, 3
        %v2298 = vrot.slane %v2294, 3
        %v2299 = vsel %vm938, %v2297, %v2298
        %v2302 = vsel %vm944, %v2299, 0.0
        %v2303 = vsel %vm946, %v2298, 0.0
        %v2304 = vadd.f32 %v2302, %v2303
        %2305 = vadd.xlane.f32.xlu0 %v2304
        %v2306 = vpop.xlane.xlu0 %2305
        %v2307 = vrot.slane %v2306, 4
        %v2308 = vadd.f32 %v2306, %v2307
        %v2309 = vrot.slane %v2308, 2
        %v2310 = vadd.f32 %v2308, %v2309
        %v2311 = vrot.slane %v2310, 1
        %v2312 = vadd.f32 %v2310, %v2311
        %s2313 = vtos %v2312
        %s2314 = sadd.f32 %s1636, %s2313
        %s2315 = scalar_lea.vmem %s226, 48 [#allocation5]
        %v2316 = vld [vmem:[%s2315] sm:$0xff]
        %v2317 = vld [vmem:[%s2315 + $0x8] sm:$0xff]
        %s2318 = scalar_lea.vmem %s236, 48 [#allocation6]
        %v2319 = vld [vmem:[%s2318] sm:$0xff]
        %v2320 = vld [vmem:[%s2318 + $0x8] sm:$0xff]
        %v2321 = vmul.f32 %v2316, 0.036632847
        %v2322 = vmul.f32 %v2317, 0.036632847
        %v2323 = vmul.f32 %v2319, 0.036632847
        %v2324 = vmul.f32 %v2320, 0.036632847
        %v2325 = vmul.f32 %v2321, %v2316
        %v2326 = vmul.f32 %v2322, %v2317
        %v2327 = vmul.f32 %v2323, %v2319
        %v2328 = vmul.f32 %v2324, %v2320
        %v2329 = vmul.f32 %v2321, %v2319
        %v2330 = vmul.f32 %v2322, %v2320
        %v2331 = vmul.f32 %v2316, 0.11128076
        %v2332 = vmul.f32 %v2317, 0.11128076
        %v2333 = vmul.f32 %v2319, 0.11128076
        %v2334 = vmul.f32 %v2320, 0.11128076
        %2337 = vrot.lane.b32.xlu0 %v2331, 127
        %v2338 = vpop.permute.xlu0 %2337
        %2339 = vrot.lane.b32.xlu0 %v2332, 127
        %v2340 = vpop.permute.xlu0 %2339
        %v2343 = vadd.f32 %v2321, %v2338
        %v2344 = vadd.f32 %v2322, %v2340
        %2347 = vrot.lane.b32.xlu0 %v2333, 127
        %v2348 = vpop.permute.xlu0 %2347
        %2349 = vrot.lane.b32.xlu0 %v2334, 127
        %v2350 = vpop.permute.xlu0 %2349
        %v2353 = vadd.f32 %v2323, %v2348
        %v2354 = vadd.f32 %v2324, %v2350
        %v2355 = vmul.f32 %v2331, %v2316
        %v2356 = vmul.f32 %v2332, %v2317
        %2359 = vrot.lane.b32.xlu0 %v2355, 127
        %v2360 = vpop.permute.xlu0 %2359
        %2361 = vrot.lane.b32.xlu0 %v2356, 127
        %v2362 = vpop.permute.xlu0 %2361
        %v2365 = vadd.f32 %v2325, %v2360
        %v2366 = vadd.f32 %v2326, %v2362
        %v2367 = vmul.f32 %v2333, %v2319
        %v2368 = vmul.f32 %v2334, %v2320
        %2371 = vrot.lane.b32.xlu0 %v2367, 127
        %v2372 = vpop.permute.xlu0 %2371
        %2373 = vrot.lane.b32.xlu0 %v2368, 127
        %v2374 = vpop.permute.xlu0 %2373
        %v2377 = vadd.f32 %v2327, %v2372
        %v2378 = vadd.f32 %v2328, %v2374
        %v2379 = vmul.f32 %v2331, %v2319
        %v2380 = vmul.f32 %v2332, %v2320
        %2383 = vrot.lane.b32.xlu0 %v2379, 127
        %v2384 = vpop.permute.xlu0 %2383
        %2385 = vrot.lane.b32.xlu0 %v2380, 127
        %v2386 = vpop.permute.xlu0 %2385
        %v2389 = vadd.f32 %v2329, %v2384
        %v2390 = vadd.f32 %v2330, %v2386
        %v2391 = vmul.f32 %v2316, 0.21674532
        %v2392 = vmul.f32 %v2317, 0.21674532
        %v2393 = vmul.f32 %v2319, 0.21674532
        %v2394 = vmul.f32 %v2320, 0.21674532
        %2397 = vrot.lane.b32.xlu0 %v2391, 126
        %v2398 = vpop.permute.xlu0 %2397
        %2399 = vrot.lane.b32.xlu0 %v2392, 126
        %v2400 = vpop.permute.xlu0 %2399
        %v2403 = vadd.f32 %v2343, %v2398
        %v2404 = vadd.f32 %v2344, %v2400
        %2407 = vrot.lane.b32.xlu0 %v2393, 126
        %v2408 = vpop.permute.xlu0 %2407
        %2409 = vrot.lane.b32.xlu0 %v2394, 126
        %v2410 = vpop.permute.xlu0 %2409
        %v2413 = vadd.f32 %v2353, %v2408
        %v2414 = vadd.f32 %v2354, %v2410
        %v2415 = vmul.f32 %v2391, %v2316
        %v2416 = vmul.f32 %v2392, %v2317
        %2419 = vrot.lane.b32.xlu0 %v2415, 126
        %v2420 = vpop.permute.xlu0 %2419
        %2421 = vrot.lane.b32.xlu0 %v2416, 126
        %v2422 = vpop.permute.xlu0 %2421
        %v2425 = vadd.f32 %v2365, %v2420
        %v2426 = vadd.f32 %v2366, %v2422
        %v2427 = vmul.f32 %v2393, %v2319
        %v2428 = vmul.f32 %v2394, %v2320
        %2431 = vrot.lane.b32.xlu0 %v2427, 126
        %v2432 = vpop.permute.xlu0 %2431
        %2433 = vrot.lane.b32.xlu0 %v2428, 126
        %v2434 = vpop.permute.xlu0 %2433
        %v2437 = vadd.f32 %v2377, %v2432
        %v2438 = vadd.f32 %v2378, %v2434
        %v2439 = vmul.f32 %v2391, %v2319
        %v2440 = vmul.f32 %v2392, %v2320
        %2443 = vrot.lane.b32.xlu0 %v2439, 126
        %v2444 = vpop.permute.xlu0 %2443
        %2445 = vrot.lane.b32.xlu0 %v2440, 126
        %v2446 = vpop.permute.xlu0 %2445
        %v2449 = vadd.f32 %v2389, %v2444
        %v2450 = vadd.f32 %v2390, %v2446
        %v2451 = vmul.f32 %v2316, 0.27068216
        %v2452 = vmul.f32 %v2317, 0.27068216
        %v2453 = vmul.f32 %v2319, 0.27068216
        %v2454 = vmul.f32 %v2320, 0.27068216
        %2457 = vrot.lane.b32.xlu0 %v2451, 125
        %v2458 = vpop.permute.xlu0 %2457
        %2459 = vrot.lane.b32.xlu0 %v2452, 125
        %v2460 = vpop.permute.xlu0 %2459
        %v2463 = vadd.f32 %v2403, %v2458
        %v2464 = vadd.f32 %v2404, %v2460
        %2467 = vrot.lane.b32.xlu0 %v2453, 125
        %v2468 = vpop.permute.xlu0 %2467
        %2469 = vrot.lane.b32.xlu0 %v2454, 125
        %v2470 = vpop.permute.xlu0 %2469
        %v2473 = vadd.f32 %v2413, %v2468
        %v2474 = vadd.f32 %v2414, %v2470
        %v2475 = vmul.f32 %v2451, %v2316
        %v2476 = vmul.f32 %v2452, %v2317
        %2479 = vrot.lane.b32.xlu0 %v2475, 125
        %v2480 = vpop.permute.xlu0 %2479
        %2481 = vrot.lane.b32.xlu0 %v2476, 125
        %v2482 = vpop.permute.xlu0 %2481
        %v2485 = vadd.f32 %v2425, %v2480
        %v2486 = vadd.f32 %v2426, %v2482
        %v2487 = vmul.f32 %v2453, %v2319
        %v2488 = vmul.f32 %v2454, %v2320
        %2491 = vrot.lane.b32.xlu0 %v2487, 125
        %v2492 = vpop.permute.xlu0 %2491
        %2493 = vrot.lane.b32.xlu0 %v2488, 125
        %v2494 = vpop.permute.xlu0 %2493
        %v2497 = vadd.f32 %v2437, %v2492
        %v2498 = vadd.f32 %v2438, %v2494
        %v2499 = vmul.f32 %v2451, %v2319
        %v2500 = vmul.f32 %v2452, %v2320
        %2503 = vrot.lane.b32.xlu0 %v2499, 125
        %v2504 = vpop.permute.xlu0 %2503
        %2505 = vrot.lane.b32.xlu0 %v2500, 125
        %v2506 = vpop.permute.xlu0 %2505
        %v2509 = vadd.f32 %v2449, %v2504
        %v2510 = vadd.f32 %v2450, %v2506
        %2511 = vrot.lane.b32.xlu0 %v2391, 124
        %v2512 = vpop.permute.xlu0 %2511
        %2513 = vrot.lane.b32.xlu0 %v2392, 124
        %v2514 = vpop.permute.xlu0 %2513
        %v2517 = vadd.f32 %v2463, %v2512
        %v2518 = vadd.f32 %v2464, %v2514
        %2519 = vrot.lane.b32.xlu0 %v2393, 124
        %v2520 = vpop.permute.xlu0 %2519
        %2521 = vrot.lane.b32.xlu0 %v2394, 124
        %v2522 = vpop.permute.xlu0 %2521
        %v2525 = vadd.f32 %v2473, %v2520
        %v2526 = vadd.f32 %v2474, %v2522
        %2527 = vrot.lane.b32.xlu0 %v2415, 124
        %v2528 = vpop.permute.xlu0 %2527
        %2529 = vrot.lane.b32.xlu0 %v2416, 124
        %v2530 = vpop.permute.xlu0 %2529
        %v2533 = vadd.f32 %v2485, %v2528
        %v2534 = vadd.f32 %v2486, %v2530
        %2535 = vrot.lane.b32.xlu0 %v2427, 124
        %v2536 = vpop.permute.xlu0 %2535
        %2537 = vrot.lane.b32.xlu0 %v2428, 124
        %v2538 = vpop.permute.xlu0 %2537
        %v2541 = vadd.f32 %v2497, %v2536
        %v2542 = vadd.f32 %v2498, %v2538
        %2543 = vrot.lane.b32.xlu0 %v2439, 124
        %v2544 = vpop.permute.xlu0 %2543
        %2545 = vrot.lane.b32.xlu0 %v2440, 124
        %v2546 = vpop.permute.xlu0 %2545
        %v2549 = vadd.f32 %v2509, %v2544
        %v2550 = vadd.f32 %v2510, %v2546
        %2551 = vrot.lane.b32.xlu0 %v2331, 123
        %v2552 = vpop.permute.xlu0 %2551
        %2553 = vrot.lane.b32.xlu0 %v2332, 123
        %v2554 = vpop.permute.xlu0 %2553
        %v2557 = vadd.f32 %v2517, %v2552
        %v2558 = vadd.f32 %v2518, %v2554
        %2559 = vrot.lane.b32.xlu0 %v2333, 123
        %v2560 = vpop.permute.xlu0 %2559
        %2561 = vrot.lane.b32.xlu0 %v2334, 123
        %v2562 = vpop.permute.xlu0 %2561
        %v2565 = vadd.f32 %v2525, %v2560
        %v2566 = vadd.f32 %v2526, %v2562
        %2567 = vrot.lane.b32.xlu0 %v2355, 123
        %v2568 = vpop.permute.xlu0 %2567
        %2569 = vrot.lane.b32.xlu0 %v2356, 123
        %v2570 = vpop.permute.xlu0 %2569
        %v2573 = vadd.f32 %v2533, %v2568
        %v2574 = vadd.f32 %v2534, %v2570
        %2575 = vrot.lane.b32.xlu0 %v2367, 123
        %v2576 = vpop.permute.xlu0 %2575
        %2577 = vrot.lane.b32.xlu0 %v2368, 123
        %v2578 = vpop.permute.xlu0 %2577
        %v2581 = vadd.f32 %v2541, %v2576
        %v2582 = vadd.f32 %v2542, %v2578
        %2583 = vrot.lane.b32.xlu0 %v2379, 123
        %v2584 = vpop.permute.xlu0 %2583
        %2585 = vrot.lane.b32.xlu0 %v2380, 123
        %v2586 = vpop.permute.xlu0 %2585
        %v2589 = vadd.f32 %v2549, %v2584
        %v2590 = vadd.f32 %v2550, %v2586
        %2593 = vrot.lane.b32.xlu0 %v2321, 122
        %v2594 = vpop.permute.xlu0 %2593
        %2595 = vrot.lane.b32.xlu0 %v2322, 122
        %v2596 = vpop.permute.xlu0 %2595
        %v2599 = vadd.f32 %v2557, %v2594
        %v2600 = vadd.f32 %v2558, %v2596
        %2603 = vrot.lane.b32.xlu0 %v2323, 122
        %v2604 = vpop.permute.xlu0 %2603
        %2605 = vrot.lane.b32.xlu0 %v2324, 122
        %v2606 = vpop.permute.xlu0 %2605
        %v2609 = vadd.f32 %v2565, %v2604
        %v2610 = vadd.f32 %v2566, %v2606
        %2613 = vrot.lane.b32.xlu0 %v2325, 122
        %v2614 = vpop.permute.xlu0 %2613
        %2615 = vrot.lane.b32.xlu0 %v2326, 122
        %v2616 = vpop.permute.xlu0 %2615
        %v2619 = vadd.f32 %v2573, %v2614
        %v2620 = vadd.f32 %v2574, %v2616
        %2623 = vrot.lane.b32.xlu0 %v2327, 122
        %v2624 = vpop.permute.xlu0 %2623
        %2625 = vrot.lane.b32.xlu0 %v2328, 122
        %v2626 = vpop.permute.xlu0 %2625
        %v2629 = vadd.f32 %v2581, %v2624
        %v2630 = vadd.f32 %v2582, %v2626
        %2633 = vrot.lane.b32.xlu0 %v2329, 122
        %v2634 = vpop.permute.xlu0 %2633
        %2635 = vrot.lane.b32.xlu0 %v2330, 122
        %v2636 = vpop.permute.xlu0 %2635
        %v2639 = vadd.f32 %v2589, %v2634
        %v2640 = vadd.f32 %v2590, %v2636
        %v2641 = vmul.f32 %v2599, 0.27068216
        %v2642 = vmul.f32 %v2600, 0.27068216
        %v2645 = vrot.slane %v2599, 6
        %v2646 = vrot.slane %v2600, 6
        %v2647 = vsel %vm601, %v2645, %v2646
        %v2650 = vadd.f32 %v2599, %v2647
        %v2651 = vadd.f32 %v2600, %v2646
        %v2652 = vmul.f32 %v2650, 0.036632847
        %v2653 = vmul.f32 %v2651, 0.036632847
        %v2656 = vrot.slane %v2652, 5
        %v2657 = vrot.slane %v2653, 5
        %v2658 = vsel %vm613, %v2656, %v2657
        %v2661 = vadd.f32 %v2641, %v2656
        %v2662 = vadd.f32 %v2642, %v2658
        %v2663 = vrot.slane %v2599, 4
        %v2664 = vrot.slane %v2600, 4
        %v2665 = vsel %vm621, %v2663, %v2664
        %v2668 = vadd.f32 %v2599, %v2665
        %v2669 = vadd.f32 %v2600, %v2664
        %v2670 = vmul.f32 %v2668, 0.11128076
        %v2671 = vmul.f32 %v2669, 0.11128076
        %v2674 = vrot.slane %v2670, 6
        %v2675 = vrot.slane %v2671, 6
        %v2676 = vsel %vm601, %v2674, %v2675
        %v2679 = vadd.f32 %v2661, %v2674
        %v2680 = vadd.f32 %v2662, %v2676
        %v2681 = vrot.slane %v2599, 2
        %v2682 = vrot.slane %v2600, 2
        %v2683 = vsel %vm640, %v2681, %v2682
        %v2686 = vadd.f32 %v2599, %v2683
        %v2687 = vadd.f32 %v2600, %v2682
        %v2688 = vmul.f32 %v2686, 0.21674532
        %v2689 = vmul.f32 %v2687, 0.21674532
        %v2692 = vrot.slane %v2688, 7
        %v2693 = vrot.slane %v2689, 7
        %v2694 = vsel %vm652, %v2692, %v2693
        %v2697 = vadd.f32 %v2679, %v2692
        %v2698 = vadd.f32 %v2680, %v2694
        %v2699 = vmul.f32 %v2609, 0.27068216
        %v2700 = vmul.f32 %v2610, 0.27068216
        %v2703 = vrot.slane %v2609, 6
        %v2704 = vrot.slane %v2610, 6
        %v2705 = vsel %vm601, %v2703, %v2704
        %v2708 = vadd.f32 %v2609, %v2705
        %v2709 = vadd.f32 %v2610, %v2704
        %v2710 = vmul.f32 %v2708, 0.036632847
        %v2711 = vmul.f32 %v2709, 0.036632847
        %v2714 = vrot.slane %v2710, 5
        %v2715 = vrot.slane %v2711, 5
        %v2716 = vsel %vm613, %v2714, %v2715
        %v2719 = vadd.f32 %v2699, %v2714
        %v2720 = vadd.f32 %v2700, %v2716
        %v2721 = vrot.slane %v2609, 4
        %v2722 = vrot.slane %v2610, 4
        %v2723 = vsel %vm621, %v2721, %v2722
        %v2726 = vadd.f32 %v2609, %v2723
        %v2727 = vadd.f32 %v2610, %v2722
        %v2728 = vmul.f32 %v2726, 0.11128076
        %v2729 = vmul.f32 %v2727, 0.11128076
        %v2732 = vrot.slane %v2728, 6
        %v2733 = vrot.slane %v2729, 6
        %v2734 = vsel %vm601, %v2732, %v2733
        %v2737 = vadd.f32 %v2719, %v2732
        %v2738 = vadd.f32 %v2720, %v2734
        %v2739 = vrot.slane %v2609, 2
        %v2740 = vrot.slane %v2610, 2
        %v2741 = vsel %vm640, %v2739, %v2740
        %v2744 = vadd.f32 %v2609, %v2741
        %v2745 = vadd.f32 %v2610, %v2740
        %v2746 = vmul.f32 %v2744, 0.21674532
        %v2747 = vmul.f32 %v2745, 0.21674532
        %v2750 = vrot.slane %v2746, 7
        %v2751 = vrot.slane %v2747, 7
        %v2752 = vsel %vm652, %v2750, %v2751
        %v2755 = vadd.f32 %v2737, %v2750
        %v2756 = vadd.f32 %v2738, %v2752
        %v2757 = vmul.f32 %v2619, 0.27068216
        %v2758 = vmul.f32 %v2620, 0.27068216
        %v2761 = vrot.slane %v2619, 6
        %v2762 = vrot.slane %v2620, 6
        %v2763 = vsel %vm601, %v2761, %v2762
        %v2766 = vadd.f32 %v2619, %v2763
        %v2767 = vadd.f32 %v2620, %v2762
        %v2768 = vmul.f32 %v2766, 0.036632847
        %v2769 = vmul.f32 %v2767, 0.036632847
        %v2772 = vrot.slane %v2768, 5
        %v2773 = vrot.slane %v2769, 5
        %v2774 = vsel %vm613, %v2772, %v2773
        %v2777 = vadd.f32 %v2757, %v2772
        %v2778 = vadd.f32 %v2758, %v2774
        %v2779 = vrot.slane %v2619, 4
        %v2780 = vrot.slane %v2620, 4
        %v2781 = vsel %vm621, %v2779, %v2780
        %v2784 = vadd.f32 %v2619, %v2781
        %v2785 = vadd.f32 %v2620, %v2780
        %v2786 = vmul.f32 %v2784, 0.11128076
        %v2787 = vmul.f32 %v2785, 0.11128076
        %v2790 = vrot.slane %v2786, 6
        %v2791 = vrot.slane %v2787, 6
        %v2792 = vsel %vm601, %v2790, %v2791
        %v2795 = vadd.f32 %v2777, %v2790
        %v2796 = vadd.f32 %v2778, %v2792
        %v2797 = vrot.slane %v2619, 2
        %v2798 = vrot.slane %v2620, 2
        %v2799 = vsel %vm640, %v2797, %v2798
        %v2802 = vadd.f32 %v2619, %v2799
        %v2803 = vadd.f32 %v2620, %v2798
        %v2804 = vmul.f32 %v2802, 0.21674532
        %v2805 = vmul.f32 %v2803, 0.21674532
        %v2808 = vrot.slane %v2804, 7
        %v2809 = vrot.slane %v2805, 7
        %v2810 = vsel %vm652, %v2808, %v2809
        %v2813 = vadd.f32 %v2795, %v2808
        %v2814 = vadd.f32 %v2796, %v2810
        %v2815 = vmul.f32 %v2629, 0.27068216
        %v2816 = vmul.f32 %v2630, 0.27068216
        %v2819 = vrot.slane %v2629, 6
        %v2820 = vrot.slane %v2630, 6
        %v2821 = vsel %vm601, %v2819, %v2820
        %v2824 = vadd.f32 %v2629, %v2821
        %v2825 = vadd.f32 %v2630, %v2820
        %v2826 = vmul.f32 %v2824, 0.036632847
        %v2827 = vmul.f32 %v2825, 0.036632847
        %v2830 = vrot.slane %v2826, 5
        %v2831 = vrot.slane %v2827, 5
        %v2832 = vsel %vm613, %v2830, %v2831
        %v2835 = vadd.f32 %v2815, %v2830
        %v2836 = vadd.f32 %v2816, %v2832
        %v2837 = vrot.slane %v2629, 4
        %v2838 = vrot.slane %v2630, 4
        %v2839 = vsel %vm621, %v2837, %v2838
        %v2842 = vadd.f32 %v2629, %v2839
        %v2843 = vadd.f32 %v2630, %v2838
        %v2844 = vmul.f32 %v2842, 0.11128076
        %v2845 = vmul.f32 %v2843, 0.11128076
        %v2848 = vrot.slane %v2844, 6
        %v2849 = vrot.slane %v2845, 6
        %v2850 = vsel %vm601, %v2848, %v2849
        %v2853 = vadd.f32 %v2835, %v2848
        %v2854 = vadd.f32 %v2836, %v2850
        %v2855 = vrot.slane %v2629, 2
        %v2856 = vrot.slane %v2630, 2
        %v2857 = vsel %vm640, %v2855, %v2856
        %v2860 = vadd.f32 %v2629, %v2857
        %v2861 = vadd.f32 %v2630, %v2856
        %v2862 = vmul.f32 %v2860, 0.21674532
        %v2863 = vmul.f32 %v2861, 0.21674532
        %v2866 = vrot.slane %v2862, 7
        %v2867 = vrot.slane %v2863, 7
        %v2868 = vsel %vm652, %v2866, %v2867
        %v2871 = vadd.f32 %v2853, %v2866
        %v2872 = vadd.f32 %v2854, %v2868
        %v2873 = vmul.f32 %v2639, 0.27068216
        %v2874 = vmul.f32 %v2640, 0.27068216
        %v2877 = vrot.slane %v2639, 6
        %v2878 = vrot.slane %v2640, 6
        %v2879 = vsel %vm601, %v2877, %v2878
        %v2882 = vadd.f32 %v2639, %v2879
        %v2883 = vadd.f32 %v2640, %v2878
        %v2884 = vmul.f32 %v2882, 0.036632847
        %v2885 = vmul.f32 %v2883, 0.036632847
        %v2888 = vrot.slane %v2884, 5
        %v2889 = vrot.slane %v2885, 5
        %v2890 = vsel %vm613, %v2888, %v2889
        %v2893 = vadd.f32 %v2873, %v2888
        %v2894 = vadd.f32 %v2874, %v2890
        %v2895 = vrot.slane %v2639, 4
        %v2896 = vrot.slane %v2640, 4
        %v2897 = vsel %vm621, %v2895, %v2896
        %v2900 = vadd.f32 %v2639, %v2897
        %v2901 = vadd.f32 %v2640, %v2896
        %v2902 = vmul.f32 %v2900, 0.11128076
        %v2903 = vmul.f32 %v2901, 0.11128076
        %v2906 = vrot.slane %v2902, 6
        %v2907 = vrot.slane %v2903, 6
        %v2908 = vsel %vm601, %v2906, %v2907
        %v2911 = vadd.f32 %v2893, %v2906
        %v2912 = vadd.f32 %v2894, %v2908
        %v2913 = vrot.slane %v2639, 2
        %v2914 = vrot.slane %v2640, 2
        %v2915 = vsel %vm640, %v2913, %v2914
        %v2918 = vadd.f32 %v2639, %v2915
        %v2919 = vadd.f32 %v2640, %v2914
        %v2920 = vmul.f32 %v2918, 0.21674532
        %v2921 = vmul.f32 %v2919, 0.21674532
        %v2924 = vrot.slane %v2920, 7
        %v2925 = vrot.slane %v2921, 7
        %v2926 = vsel %vm652, %v2924, %v2925
        %v2929 = vadd.f32 %v2911, %v2924
        %v2930 = vadd.f32 %v2912, %v2926
        %v2931 = vmul.f32 %v2697, %v2697
        %v2932 = vmul.f32 %v2698, %v2698
        %v2933 = vmul.f32 %v2755, %v2755
        %v2934 = vmul.f32 %v2756, %v2756
        %v2935 = vmul.f32 %v2697, %v2755
        %v2936 = vmul.f32 %v2698, %v2756
        %v2937 = vsub.f32 %v2813, %v2931
        %v2938 = vsub.f32 %v2814, %v2932
        %v2939 = vsub.f32 %v2871, %v2933
        %v2940 = vsub.f32 %v2872, %v2934
        %v2941 = vsub.f32 %v2929, %v2935
        %v2942 = vsub.f32 %v2930, %v2936
        %v2943 = vmul.f32 %v2941, 2.0
        %v2944 = vmul.f32 %v2942, 2.0
        %v2945 = vadd.f32 %v2943, %v906
        %v2946 = vadd.f32 %v2944, %v906
        %v2947 = vadd.f32 %v2937, %v2939
        %v2948 = vadd.f32 %v2938, %v2940
        %v2949 = vadd.f32 %v2947, %v906
        %v2950 = vadd.f32 %v2948, %v906
        %v2951 = vmul.f32 %v2935, 2.0
        %v2952 = vmul.f32 %v2936, 2.0
        %v2953 = vadd.f32 %v2951, %v915
        %v2954 = vadd.f32 %v2952, %v915
        %v2955 = vmul.f32 %v2953, %v2945
        %v2956 = vmul.f32 %v2954, %v2946
        %v2957 = vadd.f32 %v2931, %v2933
        %v2958 = vadd.f32 %v2932, %v2934
        %v2959 = vadd.f32 %v2957, %v915
        %v2960 = vadd.f32 %v2958, %v915
        %v2961 = vmul.f32 %v2959, %v2949
        %v2962 = vmul.f32 %v2960, %v2950
        %v2963 = vrcp.pop %v2961
        %v2964 = vrcp.pop %v2962
        %v2965 = vmul.f32 %v2961, %v2963
        %v2966 = vmul.f32 %v2962, %v2964
        %v2967 = vsub.f32 2.0, %v2965
        %v2968 = vsub.f32 2.0, %v2966
        %v2969 = vmul.f32 %v2963, %v2967
        %v2970 = vmul.f32 %v2964, %v2968
        %v2971 = vmul.f32 %v2955, %v2969
        %v2972 = vmul.f32 %v2956, %v2970
        %v2975 = vrot.slane %v2971, 3
        %v2976 = vrot.slane %v2972, 3
        %v2977 = vsel %vm938, %v2975, %v2976
        %v2980 = vsel %vm944, %v2977, 0.0
        %v2981 = vsel %vm946, %v2976, 0.0
        %v2982 = vadd.f32 %v2980, %v2981
        %2983 = vadd.xlane.f32.xlu0 %v2982
        %v2984 = vpop.xlane.xlu0 %2983
        %v2985 = vrot.slane %v2984, 4
        %v2986 = vadd.f32 %v2984, %v2985
        %v2987 = vrot.slane %v2986, 2
        %v2988 = vadd.f32 %v2986, %v2987
        %v2989 = vrot.slane %v2988, 1
        %v2990 = vadd.f32 %v2988, %v2989
        %s2991 = vtos %v2990
        %s2992 = sadd.f32 %s2314, %s2991
        %p2993 = scmp.eq.s32.totalorder %s26, 0
        // Predicated region
        $region45: #{tpu_custom_call.1} parent=31 // pred_check
          %p2994 = pneg %p2993
        $region46: #{tpu_custom_call.1} parent=31 // pred_check_branch
          %2996 = sbr.rel (%p2994) target = $region48
        $region47: #{tpu_custom_call.1} parent=31 // pred_region
          %vm2997 = vcmask 0
          %2998 = vst.msk [vmem:[%s268] sm:$0x1] %vm2997, 0.0
        $region48: #{tpu_custom_call.1} parent=31 // pred_fallthru
          _
        %v2999 = vld [vmem:[%s268] sm:$0x1]
        %v3000 = vstv %s2992
        %v3001 = vadd.f32 %v2999, %v3000
        %vm3002 = vcmask 0
        %3003 = vst.msk [vmem:[%s268] sm:$0x1] %vm3002, %v3001
        %p3004 = scmp.lt.s32.totalorder %s25, 1
        %s3005 = scalar_select %p3004, %s25, 1
        %s3006 = scalar_lea.vmem %s3, %s3005
        // Predicated region
        $region49: #{tpu_custom_call.1} parent=31 // pred_check
          %p3007 = pneg %p128
        $region50: #{tpu_custom_call.1} parent=31 // pred_check_branch
          %3009 = sbr.rel (%p3007) target = $region52
        $region51: #{tpu_custom_call.1} parent=31 // pred_region
          _
        $region52: #{tpu_custom_call.1} parent=31 // pred_fallthru
          _
      $region32: #{tpu_custom_call.1} parent=5 // pred_fallthru
        _
      %p3010 = scmp.le.s32.totalorder 2, %s16
      // Predicated region
      $region53: #{tpu_custom_call.1} parent=5 // pred_check
        %p3011 = pneg %p3010
      $region54: #{tpu_custom_call.1} parent=5 // pred_check_branch
        %3013 = sbr.rel (%p3011) target = $region56
      $region55: #{tpu_custom_call.1} parent=5 // pred_region
        %s3014 = ssub.s32 %s16, 2
        // Predicated region
        $region57: #{tpu_custom_call.1} parent=55 // pred_check
          %p3015 = pneg %p134
        $region58: #{tpu_custom_call.1} parent=55 // pred_check_branch
          %3017 = sbr.rel (%p3015) target = $region60
        $region59: #{tpu_custom_call.1} parent=55 // pred_region
          %p3018 = scmp.lt.s32.totalorder %s27, 1
          %s3019 = scalar_select %p3018, %s27, 1
          %s3020 = scalar_lea.vmem %s3, %s3019
        $region60: #{tpu_custom_call.1} parent=55 // pred_fallthru
          _
      $region56: #{tpu_custom_call.1} parent=5 // pred_fallthru
        _
    $region6: #{tpu_custom_call.1} parent=1 // loop_footer
      %s20 = sadd.s32 1, %s16
    $region7: #{tpu_custom_call.1} parent=1 // loop_footer_branch
      %15 = sbr.rel target = $region3
    $region8: #{tpu_custom_call.1} parent=1 // loop_exit
      _
    %3021 = vsyncpa [#allocation3], 1
    %s3022 = scalar_lea.sflag [#allocation3], 1
    %3023 = vsyncpa %s3022, 1
    %3024 = vsyncpa [#allocation7], 1
    %s3025 = scalar_lea.sflag [#allocation7], 1
    %3026 = vsyncpa %s3025, 1
    %3027 = vsyncpa [#allocation4], 1
    %s3028 = scalar_lea.sflag [#allocation4], 1
    %3029 = vsyncpa %s3028, 1

</llo_original>
